<compile_context>
chip_gen: v6e
topology: v6e:2x2x1
jax: 0.10.0
libtpu: 0.0.40
codegen_flags: <defaults>
</compile_context>

<pallas_src>
import functools

import jax
import jax.numpy as jnp
from jax.experimental import pallas as pl
from jax.experimental.pallas import tpu as pltpu


# ---------------------------------------------------------------------------
# In-kernel helpers (operate on loaded arrays + weight refs)
# ---------------------------------------------------------------------------
def _layer_norm(z, g, b, eps):
    mu = jnp.mean(z, axis=-1, keepdims=True)
    d = z - mu
    var = jnp.mean(d * d, axis=-1, keepdims=True)
    return d * jax.lax.rsqrt(var + eps) * g + b


def _res_mha(x2, src2, kbias, qmask2, bt, lq, lk, w,
             *, head_num, head_dims, causal, eps):
    """Residual MHA on a flattened (bt*lq, Dq) activation (f32 in / f32 out)."""
    wq, bq, wk, bk, wv, bv, wo, bo, g, beta = w
    hid = head_num * head_dims
    bf16, f32 = jnp.bfloat16, jnp.float32

    # Fused all-head, lane-dense projections; bf16 operands, f32 accumulate.
    # wq/bq are pre-scaled by head_dims**-0.5 in the wrapper.
    q = jnp.dot(x2.astype(bf16), wq[...], preferred_element_type=f32) + bq[...]
    k = jnp.dot(src2.astype(bf16), wk[...], preferred_element_type=f32) + bk[...]
    v = jnp.dot(src2.astype(bf16), wv[...], preferred_element_type=f32) + bv[...]
    q3 = q.reshape(bt, lq, hid).astype(bf16)
    k3 = k.reshape(bt, lk, hid).astype(bf16)
    v3 = v.reshape(bt, lk, hid).astype(bf16)

    if causal:
        row = jax.lax.broadcasted_iota(jnp.int32, (lq, lk), 0)
        col = jax.lax.broadcasted_iota(jnp.int32, (lq, lk), 1)
        causal_bias = jnp.where(col > row, jnp.float32(-jnp.inf),
                                jnp.float32(0.0))[None, :, :]

    # Score / context stay per-head: static lane slices of the fused Q/K/V.
    ctx_parts = []
    for h in range(head_num):
        lo = h * head_dims
        hi = lo + head_dims
        s = jnp.einsum('bqd,bkd->bqk', q3[:, :, lo:hi], k3[:, :, lo:hi],
                       preferred_element_type=f32)               # (bt, lq, lk)
        s = s + kbias                                            # key padding
        if causal:
            s = s + causal_bias
        # Safe softmax with deferred normalization: rows that are fully masked
        # (all -inf) yield zero context instead of NaN.
        m = jnp.maximum(jnp.max(s, axis=-1, keepdims=True), jnp.float32(-1e30))
        p = jnp.exp(s - m)
        denom = jnp.sum(p, axis=-1, keepdims=True)
        ctx = jnp.einsum('bqk,bkd->bqd', p.astype(bf16), v3[:, :, lo:hi],
                         preferred_element_type=f32)             # (bt, lq, Dh)
        inv = jnp.where(denom > jnp.float32(0.0),
                        pl.reciprocal(denom, approx=True), jnp.float32(0.0))
        ctx_parts.append(ctx * inv)

    ctx = jnp.concatenate(ctx_parts, axis=-1).reshape(bt * lq, hid)
    att = jnp.dot(ctx.astype(bf16), wo[...], preferred_element_type=f32) + bo[...]
    att = att * qmask2                                           # query row mask
    return _layer_norm(x2 + att, g[...], beta[...], eps)


def _res_ff(x2, qmask2, w, *, slope, eps):
    """Residual FFN (Linear -> LeakyReLU -> Linear) + mask + LayerNorm."""
    w1, b1, w2, b2, g, beta = w
    bf16, f32 = jnp.bfloat16, jnp.float32
    h = jnp.dot(x2.astype(bf16), w1[...], preferred_element_type=f32) + b1[...]
    h = jnp.where(h >= jnp.float32(0.0), h, slope * h)           # LeakyReLU(0.01)
    y = jnp.dot(h.astype(bf16), w2[...], preferred_element_type=f32) + b2[...]
    y = y * qmask2
    return _layer_norm(x2 + y, g[...], beta[...], eps)


# ---------------------------------------------------------------------------
# One fused decoder-block kernel (self-att + cross1 + cross2 + FFN)
# ---------------------------------------------------------------------------
def _dec_block_kernel(*refs, head_num, head_dims, eps, slope):
    (q_ref, k1_ref, k2_ref, qm_ref, qb_ref, k1b_ref, k2b_ref) = refs[:7]
    o_ref = refs[-1]
    w = refs[7:-1]
    sa_w, c1_w, c2_w, ff_w = w[0:10], w[10:20], w[20:30], w[30:36]

    x = q_ref[...]                                   # (bt, Lq, Dq) f32
    bt, lq, dq = x.shape
    k1 = k1_ref[...]                                 # (bt, Lk1, Dk)
    k2 = k2_ref[...]                                 # (bt, Lk2, Dk)
    lk1, lk2 = k1.shape[1], k2.shape[1]

    x2 = x.reshape(bt * lq, dq)
    k1_2 = k1.reshape(bt * lk1, k1.shape[2])
    k2_2 = k2.reshape(bt * lk2, k2.shape[2])
    qm2 = qm_ref[...].reshape(bt * lq, 1)            # multiplicative row mask
    qb = qb_ref[...]                                 # (bt, 1, Lq)  additive
    k1b = k1b_ref[...]                               # (bt, 1, Lk1) additive
    k2b = k2b_ref[...]                               # (bt, 1, Lk2) additive

    mha = functools.partial(_res_mha, head_num=head_num, head_dims=head_dims,
                            eps=eps)
    x2 = mha(x2, x2, qb, qm2, bt, lq, lq, sa_w, causal=True)       # self-att
    x2 = mha(x2, k1_2, k1b, qm2, bt, lq, lk1, c1_w, causal=False)  # cross-att 1
    x2 = mha(x2, k2_2, k2b, qm2, bt, lq, lk2, c2_w, causal=False)  # cross-att 2
    x2 = _res_ff(x2, qm2, ff_w, slope=slope, eps=eps)              # FFN
    o_ref[...] = x2.reshape(bt, lq, dq)


def _pick_batch_tile(batch, lq, target_rows=256):
    """Largest divisor bt of batch with bt*lq <= target_rows (at least 1)."""
    bt = 1
    for d in range(1, batch + 1):
        if batch % d == 0 and d * lq <= target_rows:
            bt = d
    return bt


def dual_dec_block(p, query, key1, key2, qmask_col, qbias, k1bias, k2bias,
                   *, head_num, head_dims, bt, eps=1e-5, slope=0.01):
    B, Lq, Dq = query.shape
    _, Lk1, Dk1 = key1.shape
    _, Lk2, Dk2 = key2.shape
    hid = head_num * head_dims
    scale = float(head_dims) ** (-0.5)
    bf16, f32 = jnp.bfloat16, jnp.float32

    def mha_w(mp):
        # Lane-dense 2-D weights; 1/sqrt(Dh) folded into wq/bq at trace time;
        # matmul weights bf16, biases / LayerNorm affine f32.
        return [
            (mp["wq"] * scale).astype(bf16),
            (mp["bq"] * scale).reshape(1, hid).astype(f32),
            mp["wk"].astype(bf16), mp["bk"].reshape(1, hid).astype(f32),
            mp["wv"].astype(bf16), mp["bv"].reshape(1, hid).astype(f32),
            mp["wo"].astype(bf16), mp["bo"].reshape(1, Dq).astype(f32),
            mp["ln_g"].reshape(1, Dq).astype(f32),
            mp["ln_b"].reshape(1, Dq).astype(f32),
        ]

    ff = p["ff"]
    Hf = ff["w1"].shape[1]
    ff_w = [ff["w1"].astype(bf16), ff["b1"].reshape(1, Hf).astype(f32),
            ff["w2"].astype(bf16), ff["b2"].reshape(1, Dq).astype(f32),
            ff["ln_g"].reshape(1, Dq).astype(f32),
            ff["ln_b"].reshape(1, Dq).astype(f32)]

    weights = (mha_w(p["self_att"]) + mha_w(p["cross1"])
               + mha_w(p["cross2"]) + ff_w)

    def wspec(arr):
        nd = arr.ndim
        return pl.BlockSpec(arr.shape, lambda b: (0,) * nd)

    in_specs = [
        pl.BlockSpec((bt, Lq, Dq), lambda b: (b, 0, 0)),     # query
        pl.BlockSpec((bt, Lk1, Dk1), lambda b: (b, 0, 0)),   # key1
        pl.BlockSpec((bt, Lk2, Dk2), lambda b: (b, 0, 0)),   # key2
        pl.BlockSpec((bt, Lq, 1), lambda b: (b, 0, 0)),      # query row mask
        pl.BlockSpec((bt, 1, Lq), lambda b: (b, 0, 0)),      # self-att key bias
        pl.BlockSpec((bt, 1, Lk1), lambda b: (b, 0, 0)),     # cross1 key bias
        pl.BlockSpec((bt, 1, Lk2), lambda b: (b, 0, 0)),     # cross2 key bias
    ] + [wspec(w) for w in weights]

    kern = functools.partial(_dec_block_kernel, head_num=head_num,
                             head_dims=head_dims, eps=eps, slope=slope)

    return pl.pallas_call(
        kern,
        out_shape=jax.ShapeDtypeStruct((B, Lq, Dq), jnp.float32),
        grid=(B // bt,),
        in_specs=in_specs,
        out_specs=pl.BlockSpec((bt, Lq, Dq), lambda b: (b, 0, 0)),
        compiler_params=pltpu.CompilerParams(
            dimension_semantics=("parallel",),
            vmem_limit_bytes=64 * 1024 * 1024),
    )(query, key1, key2, qmask_col, qbias, k1bias, k2bias, *weights)


# ---------------------------------------------------------------------------
# Full decoder (glue in plain JAX)
# ---------------------------------------------------------------------------
def _key_padding_bias(mask, length, pad_idx, derived):
    """Additive bias: -inf where torch would masked_fill(mask.eq(pad_idx)).

    When the mask was auto-derived (mask=None in the reference) and
    pad_idx != 0, also -inf positions beyond the batch-max valid length to
    reproduce the reference's data-dependent key trimming without host syncs.
    """
    m = mask.astype(jnp.float32)
    bias = jnp.where(m == jnp.float32(pad_idx), jnp.float32(-jnp.inf),
                     jnp.float32(0.0))
    if derived and pad_idx != 0:
        batch_max = jnp.max(jnp.sum(m, axis=-1))
        pos = jnp.arange(length, dtype=jnp.float32)[None, :]
        bias = jnp.where(pos >= batch_max, jnp.float32(-jnp.inf), bias)
    return bias[:, None, :]                                   # (B, 1, L)


def dual_tran_dec(params, query, key1, key2, query_mask=None, key_mask1=None,
                  key_mask2=None, *, head_num, head_dims, pad_idx=0):
    # TODO(synk): only mode='sequential' (the DualTranDec default) is implemented.
    B, Lq, Dq = query.shape
    Lk1, Lk2 = key1.shape[1], key2.shape[1]

    flag = 0
    q_derived = k1_derived = k2_derived = False
    # Static-shape masking replaces the reference's host-synced batch-max trim:
    # trimmed positions are -inf-masked in attention and zeroed / pad_idx-filled
    # at the output, so valid rows match and all shapes stay static.
    if query_mask is None:
        flag = 1
        q_derived = True
        query_mask = jnp.sign(jnp.sum(jnp.abs(query), -1))       # (B, Lq)
    if key_mask1 is None:
        k1_derived = True
        key_mask1 = jnp.sign(jnp.sum(jnp.abs(key1), -1))         # (B, Lk1)
    if key_mask2 is None:
        k2_derived = True
        key_mask2 = jnp.sign(jnp.sum(jnp.abs(key2), -1))         # (B, Lk2)

    query_mask = query_mask.astype(jnp.float32)
    qmask_col = query_mask[:, :, None]                            # (B, Lq, 1)
    qbias = _key_padding_bias(query_mask, Lq, pad_idx, q_derived)
    k1bias = _key_padding_bias(key_mask1, Lk1, pad_idx, k1_derived)
    k2bias = _key_padding_bias(key_mask2, Lk2, pad_idx, k2_derived)

    bt = _pick_batch_tile(B, Lq)
    for blk in params["blocks"]:
        query = dual_dec_block(blk, query, key1, key2, qmask_col, qbias,
                               k1bias, k2bias, head_num=head_num,
                               head_dims=head_dims, bt=bt)

    if flag == 1:
        query = query * qmask_col
        if pad_idx != 0:
            # Reproduce trim + F.pad(value=pad_idx) without a host sync.
            batch_max = jnp.max(jnp.sum(query_mask, axis=-1))
            pos = jnp.arange(Lq, dtype=jnp.float32)
            beyond = (pos >= batch_max)[None, :, None]
            query = jnp.where(beyond, jnp.float32(pad_idx), query)
    return query


# ---------------------------------------------------------------------------
# Deterministic parameter initialization
# ---------------------------------------------------------------------------
def init_params(key, *, query_dims, key_dims, head_num, head_dims,
                ff_hid_dims, layer_num):
    hid = head_num * head_dims

    def nrm(k, shape, scl=0.05):
        return scl * jax.random.normal(k, shape, jnp.float32)

    blocks = []
    for _ in range(layer_num):
        key, *sub = jax.random.split(key, 29)
        it = iter(sub)

        def mha_params(in_q, in_k):
            return dict(
                wq=nrm(next(it), (in_q, hid)), bq=nrm(next(it), (hid,)),
                wk=nrm(next(it), (in_k, hid)), bk=nrm(next(it), (hid,)),
                wv=nrm(next(it), (in_k, hid)), bv=nrm(next(it), (hid,)),
                wo=nrm(next(it), (hid, query_dims)),
                bo=nrm(next(it), (query_dims,)),
                ln_g=jnp.ones((query_dims,), jnp.float32),
                ln_b=jnp.zeros((query_dims,), jnp.float32),
            )

        blocks.append(dict(
            self_att=mha_params(query_dims, query_dims),
            cross1=mha_params(query_dims, key_dims),
            cross2=mha_params(query_dims, key_dims),
            ff=dict(w1=nrm(next(it), (query_dims, ff_hid_dims)),
                    b1=nrm(next(it), (ff_hid_dims,)),
                    w2=nrm(next(it), (ff_hid_dims, query_dims)),
                    b2=nrm(next(it), (query_dims,)),
                    ln_g=jnp.ones((query_dims,), jnp.float32),
                    ln_b=jnp.zeros((query_dims,), jnp.float32)),
        ))
    return dict(blocks=blocks)


# ---------------------------------------------------------------------------
if __name__ == "__main__":
    B, Lq, Lk1, Lk2 = 2, 8, 8, 8
    query_dims, head_num, head_dims, ff_hid, layer_num = 32, 4, 8, 64, 2

    rng = jax.random.PRNGKey(0)
    kq, k1, k2, kp = jax.random.split(rng, 4)
    query = jax.random.normal(kq, (B, Lq, query_dims), jnp.float32)
    key1 = jax.random.normal(k1, (B, Lk1, query_dims), jnp.float32)
    key2 = jax.random.normal(k2, (B, Lk2, query_dims), jnp.float32)

    params = init_params(kp, query_dims=query_dims, key_dims=query_dims,
                         head_num=head_num, head_dims=head_dims,
                         ff_hid_dims=ff_hid, layer_num=layer_num)

    fwd = jax.jit(functools.partial(dual_tran_dec, head_num=head_num,
                                    head_dims=head_dims, pad_idx=0))
    out = jax.block_until_ready(fwd(params, query, key1, key2))
    assert out.shape == (B, Lq, query_dims), out.shape
    assert bool(jnp.all(jnp.isfinite(out)))
    print("KERNEL_OK")
</pallas_src>

<mosaic_0001>
module attributes {stable_mosaic.version = 11 : i64} {
  func.func @_dec_block_kernel(%arg0: i32, %arg1: memref<2x8x32xf32, #tpu.memory_space<vmem>>, %arg2: memref<2x8x32xf32, #tpu.memory_space<vmem>>, %arg3: memref<2x8x32xf32, #tpu.memory_space<vmem>>, %arg4: memref<2x8x1xf32, #tpu.memory_space<vmem>>, %arg5: memref<2x1x8xf32, #tpu.memory_space<vmem>>, %arg6: memref<2x1x8xf32, #tpu.memory_space<vmem>>, %arg7: memref<2x1x8xf32, #tpu.memory_space<vmem>>, %arg8: memref<32x32xbf16, #tpu.memory_space<vmem>>, %arg9: memref<1x32xf32, #tpu.memory_space<vmem>>, %arg10: memref<32x32xbf16, #tpu.memory_space<vmem>>, %arg11: memref<1x32xf32, #tpu.memory_space<vmem>>, %arg12: memref<32x32xbf16, #tpu.memory_space<vmem>>, %arg13: memref<1x32xf32, #tpu.memory_space<vmem>>, %arg14: memref<32x32xbf16, #tpu.memory_space<vmem>>, %arg15: memref<1x32xf32, #tpu.memory_space<vmem>>, %arg16: memref<1x32xf32, #tpu.memory_space<vmem>>, %arg17: memref<1x32xf32, #tpu.memory_space<vmem>>, %arg18: memref<32x32xbf16, #tpu.memory_space<vmem>>, %arg19: memref<1x32xf32, #tpu.memory_space<vmem>>, %arg20: memref<32x32xbf16, #tpu.memory_space<vmem>>, %arg21: memref<1x32xf32, #tpu.memory_space<vmem>>, %arg22: memref<32x32xbf16, #tpu.memory_space<vmem>>, %arg23: memref<1x32xf32, #tpu.memory_space<vmem>>, %arg24: memref<32x32xbf16, #tpu.memory_space<vmem>>, %arg25: memref<1x32xf32, #tpu.memory_space<vmem>>, %arg26: memref<1x32xf32, #tpu.memory_space<vmem>>, %arg27: memref<1x32xf32, #tpu.memory_space<vmem>>, %arg28: memref<32x32xbf16, #tpu.memory_space<vmem>>, %arg29: memref<1x32xf32, #tpu.memory_space<vmem>>, %arg30: memref<32x32xbf16, #tpu.memory_space<vmem>>, %arg31: memref<1x32xf32, #tpu.memory_space<vmem>>, %arg32: memref<32x32xbf16, #tpu.memory_space<vmem>>, %arg33: memref<1x32xf32, #tpu.memory_space<vmem>>, %arg34: memref<32x32xbf16, #tpu.memory_space<vmem>>, %arg35: memref<1x32xf32, #tpu.memory_space<vmem>>, %arg36: memref<1x32xf32, #tpu.memory_space<vmem>>, %arg37: memref<1x32xf32, #tpu.memory_space<vmem>>, %arg38: memref<32x64xbf16, #tpu.memory_space<vmem>>, %arg39: memref<1x64xf32, #tpu.memory_space<vmem>>, %arg40: memref<64x32xbf16, #tpu.memory_space<vmem>>, %arg41: memref<1x32xf32, #tpu.memory_space<vmem>>, %arg42: memref<1x32xf32, #tpu.memory_space<vmem>>, %arg43: memref<1x32xf32, #tpu.memory_space<vmem>>, %arg44: memref<2x8x32xf32, #tpu.memory_space<vmem>>) attributes {dimension_semantics = [#tpu.dimension_semantics<parallel>], iteration_bounds = array<i64: 1>, scalar_prefetch = 0 : i64, scratch_operands = 0 : i64, tpu.core_type = #tpu.core_type<tc>, window_params = [{transform_indices = @transform_0, window_bounds = array<i64: 2, 8, 32>}, {transform_indices = @transform_1, window_bounds = array<i64: 2, 8, 32>}, {transform_indices = @transform_2, window_bounds = array<i64: 2, 8, 32>}, {transform_indices = @transform_3, window_bounds = array<i64: 2, 8, 1>}, {transform_indices = @transform_4, window_bounds = array<i64: 2, 1, 8>}, {transform_indices = @transform_5, window_bounds = array<i64: 2, 1, 8>}, {transform_indices = @transform_6, window_bounds = array<i64: 2, 1, 8>}, {pipeline_mode = #tpu.pipeline_mode<synchronous>, transform_indices = @transform_7, window_bounds = array<i64: 32, 32>}, {pipeline_mode = #tpu.pipeline_mode<synchronous>, transform_indices = @transform_8, window_bounds = array<i64: 1, 32>}, {pipeline_mode = #tpu.pipeline_mode<synchronous>, transform_indices = @transform_9, window_bounds = array<i64: 32, 32>}, {pipeline_mode = #tpu.pipeline_mode<synchronous>, transform_indices = @transform_10, window_bounds = array<i64: 1, 32>}, {pipeline_mode = #tpu.pipeline_mode<synchronous>, transform_indices = @transform_11, window_bounds = array<i64: 32, 32>}, {pipeline_mode = #tpu.pipeline_mode<synchronous>, transform_indices = @transform_12, window_bounds = array<i64: 1, 32>}, {pipeline_mode = #tpu.pipeline_mode<synchronous>, transform_indices = @transform_13, window_bounds = array<i64: 32, 32>}, {pipeline_mode = #tpu.pipeline_mode<synchronous>, transform_indices = @transform_14, window_bounds = array<i64: 1, 32>}, {pipeline_mode = #tpu.pipeline_mode<synchronous>, transform_indices = @transform_15, window_bounds = array<i64: 1, 32>}, {pipeline_mode = #tpu.pipeline_mode<synchronous>, transform_indices = @transform_16, window_bounds = array<i64: 1, 32>}, {pipeline_mode = #tpu.pipeline_mode<synchronous>, transform_indices = @transform_17, window_bounds = array<i64: 32, 32>}, {pipeline_mode = #tpu.pipeline_mode<synchronous>, transform_indices = @transform_18, window_bounds = array<i64: 1, 32>}, {pipeline_mode = #tpu.pipeline_mode<synchronous>, transform_indices = @transform_19, window_bounds = array<i64: 32, 32>}, {pipeline_mode = #tpu.pipeline_mode<synchronous>, transform_indices = @transform_20, window_bounds = array<i64: 1, 32>}, {pipeline_mode = #tpu.pipeline_mode<synchronous>, transform_indices = @transform_21, window_bounds = array<i64: 32, 32>}, {pipeline_mode = #tpu.pipeline_mode<synchronous>, transform_indices = @transform_22, window_bounds = array<i64: 1, 32>}, {pipeline_mode = #tpu.pipeline_mode<synchronous>, transform_indices = @transform_23, window_bounds = array<i64: 32, 32>}, {pipeline_mode = #tpu.pipeline_mode<synchronous>, transform_indices = @transform_24, window_bounds = array<i64: 1, 32>}, {pipeline_mode = #tpu.pipeline_mode<synchronous>, transform_indices = @transform_25, window_bounds = array<i64: 1, 32>}, {pipeline_mode = #tpu.pipeline_mode<synchronous>, transform_indices = @transform_26, window_bounds = array<i64: 1, 32>}, {pipeline_mode = #tpu.pipeline_mode<synchronous>, transform_indices = @transform_27, window_bounds = array<i64: 32, 32>}, {pipeline_mode = #tpu.pipeline_mode<synchronous>, transform_indices = @transform_28, window_bounds = array<i64: 1, 32>}, {pipeline_mode = #tpu.pipeline_mode<synchronous>, transform_indices = @transform_29, window_bounds = array<i64: 32, 32>}, {pipeline_mode = #tpu.pipeline_mode<synchronous>, transform_indices = @transform_30, window_bounds = array<i64: 1, 32>}, {pipeline_mode = #tpu.pipeline_mode<synchronous>, transform_indices = @transform_31, window_bounds = array<i64: 32, 32>}, {pipeline_mode = #tpu.pipeline_mode<synchronous>, transform_indices = @transform_32, window_bounds = array<i64: 1, 32>}, {pipeline_mode = #tpu.pipeline_mode<synchronous>, transform_indices = @transform_33, window_bounds = array<i64: 32, 32>}, {pipeline_mode = #tpu.pipeline_mode<synchronous>, transform_indices = @transform_34, window_bounds = array<i64: 1, 32>}, {pipeline_mode = #tpu.pipeline_mode<synchronous>, transform_indices = @transform_35, window_bounds = array<i64: 1, 32>}, {pipeline_mode = #tpu.pipeline_mode<synchronous>, transform_indices = @transform_36, window_bounds = array<i64: 1, 32>}, {pipeline_mode = #tpu.pipeline_mode<synchronous>, transform_indices = @transform_37, window_bounds = array<i64: 32, 64>}, {pipeline_mode = #tpu.pipeline_mode<synchronous>, transform_indices = @transform_38, window_bounds = array<i64: 1, 64>}, {pipeline_mode = #tpu.pipeline_mode<synchronous>, transform_indices = @transform_39, window_bounds = array<i64: 64, 32>}, {pipeline_mode = #tpu.pipeline_mode<synchronous>, transform_indices = @transform_40, window_bounds = array<i64: 1, 32>}, {pipeline_mode = #tpu.pipeline_mode<synchronous>, transform_indices = @transform_41, window_bounds = array<i64: 1, 32>}, {pipeline_mode = #tpu.pipeline_mode<synchronous>, transform_indices = @transform_42, window_bounds = array<i64: 1, 32>}, {transform_indices = @transform_43, window_bounds = array<i64: 2, 8, 32>}]} {
    %c0 = arith.constant 0 : index
    %c0_0 = arith.constant 0 : index
    %c0_1 = arith.constant 0 : index
    %0 = vector.load %arg1[%c0, %c0_0, %c0_1] : memref<2x8x32xf32, #tpu.memory_space<vmem>>, vector<2x8x32xf32>
    %c0_2 = arith.constant 0 : index
    %c0_3 = arith.constant 0 : index
    %c0_4 = arith.constant 0 : index
    %1 = vector.load %arg2[%c0_2, %c0_3, %c0_4] : memref<2x8x32xf32, #tpu.memory_space<vmem>>, vector<2x8x32xf32>
    %c0_5 = arith.constant 0 : index
    %c0_6 = arith.constant 0 : index
    %c0_7 = arith.constant 0 : index
    %2 = vector.load %arg3[%c0_5, %c0_6, %c0_7] : memref<2x8x32xf32, #tpu.memory_space<vmem>>, vector<2x8x32xf32>
    %3 = vector.shape_cast %0 : vector<2x8x32xf32> to vector<16x32xf32>
    %4 = vector.shape_cast %1 : vector<2x8x32xf32> to vector<16x32xf32>
    %5 = vector.shape_cast %2 : vector<2x8x32xf32> to vector<16x32xf32>
    %c0_8 = arith.constant 0 : index
    %c0_9 = arith.constant 0 : index
    %c0_10 = arith.constant 0 : index
    %6 = vector.load %arg4[%c0_8, %c0_9, %c0_10] : memref<2x8x1xf32, #tpu.memory_space<vmem>>, vector<2x8x1xf32>
    %7 = vector.shape_cast %6 : vector<2x8x1xf32> to vector<16x1xf32>
    %c0_11 = arith.constant 0 : index
    %c0_12 = arith.constant 0 : index
    %c0_13 = arith.constant 0 : index
    %8 = vector.load %arg5[%c0_11, %c0_12, %c0_13] : memref<2x1x8xf32, #tpu.memory_space<vmem>>, vector<2x1x8xf32>
    %c0_14 = arith.constant 0 : index
    %c0_15 = arith.constant 0 : index
    %c0_16 = arith.constant 0 : index
    %9 = vector.load %arg6[%c0_14, %c0_15, %c0_16] : memref<2x1x8xf32, #tpu.memory_space<vmem>>, vector<2x1x8xf32>
    %c0_17 = arith.constant 0 : index
    %c0_18 = arith.constant 0 : index
    %c0_19 = arith.constant 0 : index
    %10 = vector.load %arg7[%c0_17, %c0_18, %c0_19] : memref<2x1x8xf32, #tpu.memory_space<vmem>>, vector<2x1x8xf32>
    %11 = arith.truncf %3 : vector<16x32xf32> to vector<16x32xbf16>
    %c0_20 = arith.constant 0 : index
    %c0_21 = arith.constant 0 : index
    %12 = vector.load %arg8[%c0_20, %c0_21] : memref<32x32xbf16, #tpu.memory_space<vmem>>, vector<32x32xbf16>
    %cst = arith.constant dense<0.000000e+00> : vector<16x32xf32>
    %13 = tpu.matmul %11, %12, %cst {dimension_numbers = #tpu.dot_dimension_numbers<[1], [0], [0], [1], [0, 0, 1, 1], [], []>} : vector<16x32xbf16>, vector<32x32xbf16>, vector<16x32xf32> -> vector<16x32xf32>
    %c0_22 = arith.constant 0 : index
    %c0_23 = arith.constant 0 : index
    %14 = vector.load %arg9[%c0_22, %c0_23] : memref<1x32xf32, #tpu.memory_space<vmem>>, vector<1x32xf32>
    %15 = vector.broadcast %14 : vector<1x32xf32> to vector<16x32xf32>
    %16 = arith.addf %13, %15 : vector<16x32xf32>
    %17 = arith.truncf %3 : vector<16x32xf32> to vector<16x32xbf16>
    %c0_24 = arith.constant 0 : index
    %c0_25 = arith.constant 0 : index
    %18 = vector.load %arg10[%c0_24, %c0_25] : memref<32x32xbf16, #tpu.memory_space<vmem>>, vector<32x32xbf16>
    %cst_26 = arith.constant dense<0.000000e+00> : vector<16x32xf32>
    %19 = tpu.matmul %17, %18, %cst_26 {dimension_numbers = #tpu.dot_dimension_numbers<[1], [0], [0], [1], [0, 0, 1, 1], [], []>} : vector<16x32xbf16>, vector<32x32xbf16>, vector<16x32xf32> -> vector<16x32xf32>
    %c0_27 = arith.constant 0 : index
    %c0_28 = arith.constant 0 : index
    %20 = vector.load %arg11[%c0_27, %c0_28] : memref<1x32xf32, #tpu.memory_space<vmem>>, vector<1x32xf32>
    %21 = vector.broadcast %20 : vector<1x32xf32> to vector<16x32xf32>
    %22 = arith.addf %19, %21 : vector<16x32xf32>
    %23 = arith.truncf %3 : vector<16x32xf32> to vector<16x32xbf16>
    %c0_29 = arith.constant 0 : index
    %c0_30 = arith.constant 0 : index
    %24 = vector.load %arg12[%c0_29, %c0_30] : memref<32x32xbf16, #tpu.memory_space<vmem>>, vector<32x32xbf16>
    %cst_31 = arith.constant dense<0.000000e+00> : vector<16x32xf32>
    %25 = tpu.matmul %23, %24, %cst_31 {dimension_numbers = #tpu.dot_dimension_numbers<[1], [0], [0], [1], [0, 0, 1, 1], [], []>} : vector<16x32xbf16>, vector<32x32xbf16>, vector<16x32xf32> -> vector<16x32xf32>
    %c0_32 = arith.constant 0 : index
    %c0_33 = arith.constant 0 : index
    %26 = vector.load %arg13[%c0_32, %c0_33] : memref<1x32xf32, #tpu.memory_space<vmem>>, vector<1x32xf32>
    %27 = vector.broadcast %26 : vector<1x32xf32> to vector<16x32xf32>
    %28 = arith.addf %25, %27 : vector<16x32xf32>
    %29 = vector.shape_cast %16 : vector<16x32xf32> to vector<2x8x32xf32>
    %30 = arith.truncf %29 : vector<2x8x32xf32> to vector<2x8x32xbf16>
    %31 = vector.shape_cast %22 : vector<16x32xf32> to vector<2x8x32xf32>
    %32 = arith.truncf %31 : vector<2x8x32xf32> to vector<2x8x32xbf16>
    %33 = vector.shape_cast %28 : vector<16x32xf32> to vector<2x8x32xf32>
    %34 = arith.truncf %33 : vector<2x8x32xf32> to vector<2x8x32xbf16>
    %35 = tpu.iota {dimensions = array<i32: 0>} : vector<8x8xi32>
    %36 = tpu.iota {dimensions = array<i32: 1>} : vector<8x8xi32>
    %37 = arith.cmpi sgt, %36, %35 : vector<8x8xi32>
    %cst_34 = arith.constant 0xFF800000 : f32
    %cst_35 = arith.constant 0.000000e+00 : f32
    %38 = vector.broadcast %cst_34 : f32 to vector<8x8xf32>
    %39 = vector.broadcast %cst_35 : f32 to vector<8x8xf32>
    %40 = arith.select %37, %38, %39 : vector<8x8xi1>, vector<8x8xf32>
    %41 = vector.shape_cast %40 : vector<8x8xf32> to vector<1x8x8xf32>
    %42 = vector.extract_strided_slice %30 {offsets = [0, 0, 0], sizes = [2, 8, 8], strides = [1, 1, 1]} : vector<2x8x32xbf16> to vector<2x8x8xbf16>
    %43 = vector.extract_strided_slice %32 {offsets = [0, 0, 0], sizes = [2, 8, 8], strides = [1, 1, 1]} : vector<2x8x32xbf16> to vector<2x8x8xbf16>
    "tpu.trace_start"() <{level = 10 : i32, message = "bqd,bkd->bqk"}> : () -> ()
    %cst_36 = arith.constant dense<0.000000e+00> : vector<2x8x8xf32>
    %44 = tpu.matmul %42, %43, %cst_36 {dimension_numbers = #tpu.dot_dimension_numbers<[2], [2], [1], [1], [0, 0, 0, 1, 1, 1], [0], [0]>} : vector<2x8x8xbf16>, vector<2x8x8xbf16>, vector<2x8x8xf32> -> vector<2x8x8xf32>
    "tpu.trace_stop"() : () -> ()
    %45 = vector.broadcast %8 : vector<2x1x8xf32> to vector<2x8x8xf32>
    %46 = arith.addf %44, %45 : vector<2x8x8xf32>
    %47 = vector.broadcast %41 : vector<1x8x8xf32> to vector<2x8x8xf32>
    %48 = arith.addf %46, %47 : vector<2x8x8xf32>
    %cst_37 = arith.constant dense<0xFF800000> : vector<2x8xf32>
    %49 = vector.multi_reduction <maximumf>, %48, %cst_37 [2] : vector<2x8x8xf32> to vector<2x8xf32>
    %50 = vector.shape_cast %49 : vector<2x8xf32> to vector<2x8x1xf32>
    %cst_38 = arith.constant -1.000000e+30 : f32
    %51 = vector.broadcast %cst_38 : f32 to vector<2x8x1xf32>
    %52 = arith.maximumf %50, %51 : vector<2x8x1xf32>
    %53 = vector.broadcast %52 : vector<2x8x1xf32> to vector<2x8x8xf32>
    %54 = arith.subf %48, %53 : vector<2x8x8xf32>
    %55 = math.exp %54 : vector<2x8x8xf32>
    %cst_39 = arith.constant dense<0.000000e+00> : vector<2x8xf32>
    %56 = vector.multi_reduction <add>, %55, %cst_39 [2] : vector<2x8x8xf32> to vector<2x8xf32>
    %57 = vector.shape_cast %56 : vector<2x8xf32> to vector<2x8x1xf32>
    %58 = arith.truncf %55 : vector<2x8x8xf32> to vector<2x8x8xbf16>
    %59 = vector.extract_strided_slice %34 {offsets = [0, 0, 0], sizes = [2, 8, 8], strides = [1, 1, 1]} : vector<2x8x32xbf16> to vector<2x8x8xbf16>
    "tpu.trace_start"() <{level = 10 : i32, message = "bqk,bkd->bqd"}> : () -> ()
    %cst_40 = arith.constant dense<0.000000e+00> : vector<2x8x8xf32>
    %60 = tpu.matmul %58, %59, %cst_40 {dimension_numbers = #tpu.dot_dimension_numbers<[2], [1], [1], [2], [0, 0, 0, 1, 1, 2], [0], [0]>} : vector<2x8x8xbf16>, vector<2x8x8xbf16>, vector<2x8x8xf32> -> vector<2x8x8xf32>
    %cst_41 = arith.constant 0.000000e+00 : f32
    "tpu.trace_stop"() : () -> ()
    %61 = vector.broadcast %cst_41 : f32 to vector<2x8x1xf32>
    %62 = arith.cmpf ogt, %57, %61 : vector<2x8x1xf32>
    %63 = tpu.reciprocal %57 {approx = true} : vector<2x8x1xf32> -> vector<2x8x1xf32>
    %cst_42 = arith.constant 0.000000e+00 : f32
    %64 = vector.broadcast %cst_42 : f32 to vector<2x8x1xf32>
    %65 = arith.select %62, %63, %64 : vector<2x8x1xi1>, vector<2x8x1xf32>
    %66 = vector.broadcast %65 : vector<2x8x1xf32> to vector<2x8x8xf32>
    %67 = arith.mulf %60, %66 : vector<2x8x8xf32>
    %68 = vector.extract_strided_slice %30 {offsets = [0, 0, 8], sizes = [2, 8, 8], strides = [1, 1, 1]} : vector<2x8x32xbf16> to vector<2x8x8xbf16>
    %69 = vector.extract_strided_slice %32 {offsets = [0, 0, 8], sizes = [2, 8, 8], strides = [1, 1, 1]} : vector<2x8x32xbf16> to vector<2x8x8xbf16>
    "tpu.trace_start"() <{level = 10 : i32, message = "bqd,bkd->bqk"}> : () -> ()
    %cst_43 = arith.constant dense<0.000000e+00> : vector<2x8x8xf32>
    %70 = tpu.matmul %68, %69, %cst_43 {dimension_numbers = #tpu.dot_dimension_numbers<[2], [2], [1], [1], [0, 0, 0, 1, 1, 1], [0], [0]>} : vector<2x8x8xbf16>, vector<2x8x8xbf16>, vector<2x8x8xf32> -> vector<2x8x8xf32>
    "tpu.trace_stop"() : () -> ()
    %71 = vector.broadcast %8 : vector<2x1x8xf32> to vector<2x8x8xf32>
    %72 = arith.addf %70, %71 : vector<2x8x8xf32>
    %73 = vector.broadcast %41 : vector<1x8x8xf32> to vector<2x8x8xf32>
    %74 = arith.addf %72, %73 : vector<2x8x8xf32>
    %cst_44 = arith.constant dense<0xFF800000> : vector<2x8xf32>
    %75 = vector.multi_reduction <maximumf>, %74, %cst_44 [2] : vector<2x8x8xf32> to vector<2x8xf32>
    %76 = vector.shape_cast %75 : vector<2x8xf32> to vector<2x8x1xf32>
    %cst_45 = arith.constant -1.000000e+30 : f32
    %77 = vector.broadcast %cst_45 : f32 to vector<2x8x1xf32>
    %78 = arith.maximumf %76, %77 : vector<2x8x1xf32>
    %79 = vector.broadcast %78 : vector<2x8x1xf32> to vector<2x8x8xf32>
    %80 = arith.subf %74, %79 : vector<2x8x8xf32>
    %81 = math.exp %80 : vector<2x8x8xf32>
    %cst_46 = arith.constant dense<0.000000e+00> : vector<2x8xf32>
    %82 = vector.multi_reduction <add>, %81, %cst_46 [2] : vector<2x8x8xf32> to vector<2x8xf32>
    %83 = vector.shape_cast %82 : vector<2x8xf32> to vector<2x8x1xf32>
    %84 = arith.truncf %81 : vector<2x8x8xf32> to vector<2x8x8xbf16>
    %85 = vector.extract_strided_slice %34 {offsets = [0, 0, 8], sizes = [2, 8, 8], strides = [1, 1, 1]} : vector<2x8x32xbf16> to vector<2x8x8xbf16>
    "tpu.trace_start"() <{level = 10 : i32, message = "bqk,bkd->bqd"}> : () -> ()
    %cst_47 = arith.constant dense<0.000000e+00> : vector<2x8x8xf32>
    %86 = tpu.matmul %84, %85, %cst_47 {dimension_numbers = #tpu.dot_dimension_numbers<[2], [1], [1], [2], [0, 0, 0, 1, 1, 2], [0], [0]>} : vector<2x8x8xbf16>, vector<2x8x8xbf16>, vector<2x8x8xf32> -> vector<2x8x8xf32>
    %cst_48 = arith.constant 0.000000e+00 : f32
    "tpu.trace_stop"() : () -> ()
    %87 = vector.broadcast %cst_48 : f32 to vector<2x8x1xf32>
    %88 = arith.cmpf ogt, %83, %87 : vector<2x8x1xf32>
    %89 = tpu.reciprocal %83 {approx = true} : vector<2x8x1xf32> -> vector<2x8x1xf32>
    %cst_49 = arith.constant 0.000000e+00 : f32
    %90 = vector.broadcast %cst_49 : f32 to vector<2x8x1xf32>
    %91 = arith.select %88, %89, %90 : vector<2x8x1xi1>, vector<2x8x1xf32>
    %92 = vector.broadcast %91 : vector<2x8x1xf32> to vector<2x8x8xf32>
    %93 = arith.mulf %86, %92 : vector<2x8x8xf32>
    %94 = vector.extract_strided_slice %30 {offsets = [0, 0, 16], sizes = [2, 8, 8], strides = [1, 1, 1]} : vector<2x8x32xbf16> to vector<2x8x8xbf16>
    %95 = vector.extract_strided_slice %32 {offsets = [0, 0, 16], sizes = [2, 8, 8], strides = [1, 1, 1]} : vector<2x8x32xbf16> to vector<2x8x8xbf16>
    "tpu.trace_start"() <{level = 10 : i32, message = "bqd,bkd->bqk"}> : () -> ()
    %cst_50 = arith.constant dense<0.000000e+00> : vector<2x8x8xf32>
    %96 = tpu.matmul %94, %95, %cst_50 {dimension_numbers = #tpu.dot_dimension_numbers<[2], [2], [1], [1], [0, 0, 0, 1, 1, 1], [0], [0]>} : vector<2x8x8xbf16>, vector<2x8x8xbf16>, vector<2x8x8xf32> -> vector<2x8x8xf32>
    "tpu.trace_stop"() : () -> ()
    %97 = vector.broadcast %8 : vector<2x1x8xf32> to vector<2x8x8xf32>
    %98 = arith.addf %96, %97 : vector<2x8x8xf32>
    %99 = vector.broadcast %41 : vector<1x8x8xf32> to vector<2x8x8xf32>
    %100 = arith.addf %98, %99 : vector<2x8x8xf32>
    %cst_51 = arith.constant dense<0xFF800000> : vector<2x8xf32>
    %101 = vector.multi_reduction <maximumf>, %100, %cst_51 [2] : vector<2x8x8xf32> to vector<2x8xf32>
    %102 = vector.shape_cast %101 : vector<2x8xf32> to vector<2x8x1xf32>
    %cst_52 = arith.constant -1.000000e+30 : f32
    %103 = vector.broadcast %cst_52 : f32 to vector<2x8x1xf32>
    %104 = arith.maximumf %102, %103 : vector<2x8x1xf32>
    %105 = vector.broadcast %104 : vector<2x8x1xf32> to vector<2x8x8xf32>
    %106 = arith.subf %100, %105 : vector<2x8x8xf32>
    %107 = math.exp %106 : vector<2x8x8xf32>
    %cst_53 = arith.constant dense<0.000000e+00> : vector<2x8xf32>
    %108 = vector.multi_reduction <add>, %107, %cst_53 [2] : vector<2x8x8xf32> to vector<2x8xf32>
    %109 = vector.shape_cast %108 : vector<2x8xf32> to vector<2x8x1xf32>
    %110 = arith.truncf %107 : vector<2x8x8xf32> to vector<2x8x8xbf16>
    %111 = vector.extract_strided_slice %34 {offsets = [0, 0, 16], sizes = [2, 8, 8], strides = [1, 1, 1]} : vector<2x8x32xbf16> to vector<2x8x8xbf16>
    "tpu.trace_start"() <{level = 10 : i32, message = "bqk,bkd->bqd"}> : () -> ()
    %cst_54 = arith.constant dense<0.000000e+00> : vector<2x8x8xf32>
    %112 = tpu.matmul %110, %111, %cst_54 {dimension_numbers = #tpu.dot_dimension_numbers<[2], [1], [1], [2], [0, 0, 0, 1, 1, 2], [0], [0]>} : vector<2x8x8xbf16>, vector<2x8x8xbf16>, vector<2x8x8xf32> -> vector<2x8x8xf32>
    %cst_55 = arith.constant 0.000000e+00 : f32
    "tpu.trace_stop"() : () -> ()
    %113 = vector.broadcast %cst_55 : f32 to vector<2x8x1xf32>
    %114 = arith.cmpf ogt, %109, %113 : vector<2x8x1xf32>
    %115 = tpu.reciprocal %109 {approx = true} : vector<2x8x1xf32> -> vector<2x8x1xf32>
    %cst_56 = arith.constant 0.000000e+00 : f32
    %116 = vector.broadcast %cst_56 : f32 to vector<2x8x1xf32>
    %117 = arith.select %114, %115, %116 : vector<2x8x1xi1>, vector<2x8x1xf32>
    %118 = vector.broadcast %117 : vector<2x8x1xf32> to vector<2x8x8xf32>
    %119 = arith.mulf %112, %118 : vector<2x8x8xf32>
    %120 = vector.extract_strided_slice %30 {offsets = [0, 0, 24], sizes = [2, 8, 8], strides = [1, 1, 1]} : vector<2x8x32xbf16> to vector<2x8x8xbf16>
    %121 = vector.extract_strided_slice %32 {offsets = [0, 0, 24], sizes = [2, 8, 8], strides = [1, 1, 1]} : vector<2x8x32xbf16> to vector<2x8x8xbf16>
    "tpu.trace_start"() <{level = 10 : i32, message = "bqd,bkd->bqk"}> : () -> ()
    %cst_57 = arith.constant dense<0.000000e+00> : vector<2x8x8xf32>
    %122 = tpu.matmul %120, %121, %cst_57 {dimension_numbers = #tpu.dot_dimension_numbers<[2], [2], [1], [1], [0, 0, 0, 1, 1, 1], [0], [0]>} : vector<2x8x8xbf16>, vector<2x8x8xbf16>, vector<2x8x8xf32> -> vector<2x8x8xf32>
    "tpu.trace_stop"() : () -> ()
    %123 = vector.broadcast %8 : vector<2x1x8xf32> to vector<2x8x8xf32>
    %124 = arith.addf %122, %123 : vector<2x8x8xf32>
    %125 = vector.broadcast %41 : vector<1x8x8xf32> to vector<2x8x8xf32>
    %126 = arith.addf %124, %125 : vector<2x8x8xf32>
    %cst_58 = arith.constant dense<0xFF800000> : vector<2x8xf32>
    %127 = vector.multi_reduction <maximumf>, %126, %cst_58 [2] : vector<2x8x8xf32> to vector<2x8xf32>
    %128 = vector.shape_cast %127 : vector<2x8xf32> to vector<2x8x1xf32>
    %cst_59 = arith.constant -1.000000e+30 : f32
    %129 = vector.broadcast %cst_59 : f32 to vector<2x8x1xf32>
    %130 = arith.maximumf %128, %129 : vector<2x8x1xf32>
    %131 = vector.broadcast %130 : vector<2x8x1xf32> to vector<2x8x8xf32>
    %132 = arith.subf %126, %131 : vector<2x8x8xf32>
    %133 = math.exp %132 : vector<2x8x8xf32>
    %cst_60 = arith.constant dense<0.000000e+00> : vector<2x8xf32>
    %134 = vector.multi_reduction <add>, %133, %cst_60 [2] : vector<2x8x8xf32> to vector<2x8xf32>
    %135 = vector.shape_cast %134 : vector<2x8xf32> to vector<2x8x1xf32>
    %136 = arith.truncf %133 : vector<2x8x8xf32> to vector<2x8x8xbf16>
    %137 = vector.extract_strided_slice %34 {offsets = [0, 0, 24], sizes = [2, 8, 8], strides = [1, 1, 1]} : vector<2x8x32xbf16> to vector<2x8x8xbf16>
    "tpu.trace_start"() <{level = 10 : i32, message = "bqk,bkd->bqd"}> : () -> ()
    %cst_61 = arith.constant dense<0.000000e+00> : vector<2x8x8xf32>
    %138 = tpu.matmul %136, %137, %cst_61 {dimension_numbers = #tpu.dot_dimension_numbers<[2], [1], [1], [2], [0, 0, 0, 1, 1, 2], [0], [0]>} : vector<2x8x8xbf16>, vector<2x8x8xbf16>, vector<2x8x8xf32> -> vector<2x8x8xf32>
    %cst_62 = arith.constant 0.000000e+00 : f32
    "tpu.trace_stop"() : () -> ()
    %139 = vector.broadcast %cst_62 : f32 to vector<2x8x1xf32>
    %140 = arith.cmpf ogt, %135, %139 : vector<2x8x1xf32>
    %141 = tpu.reciprocal %135 {approx = true} : vector<2x8x1xf32> -> vector<2x8x1xf32>
    %cst_63 = arith.constant 0.000000e+00 : f32
    %142 = vector.broadcast %cst_63 : f32 to vector<2x8x1xf32>
    %143 = arith.select %140, %141, %142 : vector<2x8x1xi1>, vector<2x8x1xf32>
    %144 = vector.broadcast %143 : vector<2x8x1xf32> to vector<2x8x8xf32>
    %145 = arith.mulf %138, %144 : vector<2x8x8xf32>
    %146 = tpu.concatenate %67, %93, %119, %145 in 2 : vector<2x8x8xf32>, vector<2x8x8xf32>, vector<2x8x8xf32>, vector<2x8x8xf32> -> vector<2x8x32xf32>
    %147 = vector.shape_cast %146 : vector<2x8x32xf32> to vector<16x32xf32>
    %148 = arith.truncf %147 : vector<16x32xf32> to vector<16x32xbf16>
    %c0_64 = arith.constant 0 : index
    %c0_65 = arith.constant 0 : index
    %149 = vector.load %arg14[%c0_64, %c0_65] : memref<32x32xbf16, #tpu.memory_space<vmem>>, vector<32x32xbf16>
    %cst_66 = arith.constant dense<0.000000e+00> : vector<16x32xf32>
    %150 = tpu.matmul %148, %149, %cst_66 {dimension_numbers = #tpu.dot_dimension_numbers<[1], [0], [0], [1], [0, 0, 1, 1], [], []>} : vector<16x32xbf16>, vector<32x32xbf16>, vector<16x32xf32> -> vector<16x32xf32>
    %c0_67 = arith.constant 0 : index
    %c0_68 = arith.constant 0 : index
    %151 = vector.load %arg15[%c0_67, %c0_68] : memref<1x32xf32, #tpu.memory_space<vmem>>, vector<1x32xf32>
    %152 = vector.broadcast %151 : vector<1x32xf32> to vector<16x32xf32>
    %153 = arith.addf %150, %152 : vector<16x32xf32>
    %154 = vector.broadcast %7 : vector<16x1xf32> to vector<16x32xf32>
    %155 = arith.mulf %153, %154 : vector<16x32xf32>
    %156 = arith.addf %3, %155 : vector<16x32xf32>
    %c0_69 = arith.constant 0 : index
    %c0_70 = arith.constant 0 : index
    %157 = vector.load %arg16[%c0_69, %c0_70] : memref<1x32xf32, #tpu.memory_space<vmem>>, vector<1x32xf32>
    %c0_71 = arith.constant 0 : index
    %c0_72 = arith.constant 0 : index
    %158 = vector.load %arg17[%c0_71, %c0_72] : memref<1x32xf32, #tpu.memory_space<vmem>>, vector<1x32xf32>
    %cst_73 = arith.constant dense<0.000000e+00> : vector<16xf32>
    %159 = vector.multi_reduction <add>, %156, %cst_73 [1] : vector<16x32xf32> to vector<16xf32>
    %160 = vector.shape_cast %159 : vector<16xf32> to vector<16x1xf32>
    %cst_74 = arith.constant 3.200000e+01 : f32
    %161 = vector.broadcast %cst_74 : f32 to vector<16x1xf32>
    %162 = arith.divf %160, %161 : vector<16x1xf32>
    %163 = vector.broadcast %162 : vector<16x1xf32> to vector<16x32xf32>
    %164 = arith.subf %156, %163 : vector<16x32xf32>
    %165 = arith.mulf %164, %164 : vector<16x32xf32>
    %cst_75 = arith.constant dense<0.000000e+00> : vector<16xf32>
    %166 = vector.multi_reduction <add>, %165, %cst_75 [1] : vector<16x32xf32> to vector<16xf32>
    %167 = vector.shape_cast %166 : vector<16xf32> to vector<16x1xf32>
    %cst_76 = arith.constant 3.200000e+01 : f32
    %168 = vector.broadcast %cst_76 : f32 to vector<16x1xf32>
    %169 = arith.divf %167, %168 : vector<16x1xf32>
    %cst_77 = arith.constant 9.99999974E-6 : f32
    %170 = vector.broadcast %cst_77 : f32 to vector<16x1xf32>
    %171 = arith.addf %169, %170 : vector<16x1xf32>
    %172 = math.rsqrt %171 : vector<16x1xf32>
    %173 = vector.broadcast %172 : vector<16x1xf32> to vector<16x32xf32>
    %174 = arith.mulf %164, %173 : vector<16x32xf32>
    %175 = vector.broadcast %157 : vector<1x32xf32> to vector<16x32xf32>
    %176 = arith.mulf %174, %175 : vector<16x32xf32>
    %177 = vector.broadcast %158 : vector<1x32xf32> to vector<16x32xf32>
    %178 = arith.addf %176, %177 : vector<16x32xf32>
    %179 = arith.truncf %178 : vector<16x32xf32> to vector<16x32xbf16>
    %c0_78 = arith.constant 0 : index
    %c0_79 = arith.constant 0 : index
    %180 = vector.load %arg18[%c0_78, %c0_79] : memref<32x32xbf16, #tpu.memory_space<vmem>>, vector<32x32xbf16>
    %cst_80 = arith.constant dense<0.000000e+00> : vector<16x32xf32>
    %181 = tpu.matmul %179, %180, %cst_80 {dimension_numbers = #tpu.dot_dimension_numbers<[1], [0], [0], [1], [0, 0, 1, 1], [], []>} : vector<16x32xbf16>, vector<32x32xbf16>, vector<16x32xf32> -> vector<16x32xf32>
    %c0_81 = arith.constant 0 : index
    %c0_82 = arith.constant 0 : index
    %182 = vector.load %arg19[%c0_81, %c0_82] : memref<1x32xf32, #tpu.memory_space<vmem>>, vector<1x32xf32>
    %183 = vector.broadcast %182 : vector<1x32xf32> to vector<16x32xf32>
    %184 = arith.addf %181, %183 : vector<16x32xf32>
    %185 = arith.truncf %4 : vector<16x32xf32> to vector<16x32xbf16>
    %c0_83 = arith.constant 0 : index
    %c0_84 = arith.constant 0 : index
    %186 = vector.load %arg20[%c0_83, %c0_84] : memref<32x32xbf16, #tpu.memory_space<vmem>>, vector<32x32xbf16>
    %cst_85 = arith.constant dense<0.000000e+00> : vector<16x32xf32>
    %187 = tpu.matmul %185, %186, %cst_85 {dimension_numbers = #tpu.dot_dimension_numbers<[1], [0], [0], [1], [0, 0, 1, 1], [], []>} : vector<16x32xbf16>, vector<32x32xbf16>, vector<16x32xf32> -> vector<16x32xf32>
    %c0_86 = arith.constant 0 : index
    %c0_87 = arith.constant 0 : index
    %188 = vector.load %arg21[%c0_86, %c0_87] : memref<1x32xf32, #tpu.memory_space<vmem>>, vector<1x32xf32>
    %189 = vector.broadcast %188 : vector<1x32xf32> to vector<16x32xf32>
    %190 = arith.addf %187, %189 : vector<16x32xf32>
    %191 = arith.truncf %4 : vector<16x32xf32> to vector<16x32xbf16>
    %c0_88 = arith.constant 0 : index
    %c0_89 = arith.constant 0 : index
    %192 = vector.load %arg22[%c0_88, %c0_89] : memref<32x32xbf16, #tpu.memory_space<vmem>>, vector<32x32xbf16>
    %cst_90 = arith.constant dense<0.000000e+00> : vector<16x32xf32>
    %193 = tpu.matmul %191, %192, %cst_90 {dimension_numbers = #tpu.dot_dimension_numbers<[1], [0], [0], [1], [0, 0, 1, 1], [], []>} : vector<16x32xbf16>, vector<32x32xbf16>, vector<16x32xf32> -> vector<16x32xf32>
    %c0_91 = arith.constant 0 : index
    %c0_92 = arith.constant 0 : index
    %194 = vector.load %arg23[%c0_91, %c0_92] : memref<1x32xf32, #tpu.memory_space<vmem>>, vector<1x32xf32>
    %195 = vector.broadcast %194 : vector<1x32xf32> to vector<16x32xf32>
    %196 = arith.addf %193, %195 : vector<16x32xf32>
    %197 = vector.shape_cast %184 : vector<16x32xf32> to vector<2x8x32xf32>
    %198 = arith.truncf %197 : vector<2x8x32xf32> to vector<2x8x32xbf16>
    %199 = vector.shape_cast %190 : vector<16x32xf32> to vector<2x8x32xf32>
    %200 = arith.truncf %199 : vector<2x8x32xf32> to vector<2x8x32xbf16>
    %201 = vector.shape_cast %196 : vector<16x32xf32> to vector<2x8x32xf32>
    %202 = arith.truncf %201 : vector<2x8x32xf32> to vector<2x8x32xbf16>
    %203 = vector.extract_strided_slice %198 {offsets = [0, 0, 0], sizes = [2, 8, 8], strides = [1, 1, 1]} : vector<2x8x32xbf16> to vector<2x8x8xbf16>
    %204 = vector.extract_strided_slice %200 {offsets = [0, 0, 0], sizes = [2, 8, 8], strides = [1, 1, 1]} : vector<2x8x32xbf16> to vector<2x8x8xbf16>
    "tpu.trace_start"() <{level = 10 : i32, message = "bqd,bkd->bqk"}> : () -> ()
    %cst_93 = arith.constant dense<0.000000e+00> : vector<2x8x8xf32>
    %205 = tpu.matmul %203, %204, %cst_93 {dimension_numbers = #tpu.dot_dimension_numbers<[2], [2], [1], [1], [0, 0, 0, 1, 1, 1], [0], [0]>} : vector<2x8x8xbf16>, vector<2x8x8xbf16>, vector<2x8x8xf32> -> vector<2x8x8xf32>
    "tpu.trace_stop"() : () -> ()
    %206 = vector.broadcast %9 : vector<2x1x8xf32> to vector<2x8x8xf32>
    %207 = arith.addf %205, %206 : vector<2x8x8xf32>
    %cst_94 = arith.constant dense<0xFF800000> : vector<2x8xf32>
    %208 = vector.multi_reduction <maximumf>, %207, %cst_94 [2] : vector<2x8x8xf32> to vector<2x8xf32>
    %209 = vector.shape_cast %208 : vector<2x8xf32> to vector<2x8x1xf32>
    %cst_95 = arith.constant -1.000000e+30 : f32
    %210 = vector.broadcast %cst_95 : f32 to vector<2x8x1xf32>
    %211 = arith.maximumf %209, %210 : vector<2x8x1xf32>
    %212 = vector.broadcast %211 : vector<2x8x1xf32> to vector<2x8x8xf32>
    %213 = arith.subf %207, %212 : vector<2x8x8xf32>
    %214 = math.exp %213 : vector<2x8x8xf32>
    %cst_96 = arith.constant dense<0.000000e+00> : vector<2x8xf32>
    %215 = vector.multi_reduction <add>, %214, %cst_96 [2] : vector<2x8x8xf32> to vector<2x8xf32>
    %216 = vector.shape_cast %215 : vector<2x8xf32> to vector<2x8x1xf32>
    %217 = arith.truncf %214 : vector<2x8x8xf32> to vector<2x8x8xbf16>
    %218 = vector.extract_strided_slice %202 {offsets = [0, 0, 0], sizes = [2, 8, 8], strides = [1, 1, 1]} : vector<2x8x32xbf16> to vector<2x8x8xbf16>
    "tpu.trace_start"() <{level = 10 : i32, message = "bqk,bkd->bqd"}> : () -> ()
    %cst_97 = arith.constant dense<0.000000e+00> : vector<2x8x8xf32>
    %219 = tpu.matmul %217, %218, %cst_97 {dimension_numbers = #tpu.dot_dimension_numbers<[2], [1], [1], [2], [0, 0, 0, 1, 1, 2], [0], [0]>} : vector<2x8x8xbf16>, vector<2x8x8xbf16>, vector<2x8x8xf32> -> vector<2x8x8xf32>
    %cst_98 = arith.constant 0.000000e+00 : f32
    "tpu.trace_stop"() : () -> ()
    %220 = vector.broadcast %cst_98 : f32 to vector<2x8x1xf32>
    %221 = arith.cmpf ogt, %216, %220 : vector<2x8x1xf32>
    %222 = tpu.reciprocal %216 {approx = true} : vector<2x8x1xf32> -> vector<2x8x1xf32>
    %cst_99 = arith.constant 0.000000e+00 : f32
    %223 = vector.broadcast %cst_99 : f32 to vector<2x8x1xf32>
    %224 = arith.select %221, %222, %223 : vector<2x8x1xi1>, vector<2x8x1xf32>
    %225 = vector.broadcast %224 : vector<2x8x1xf32> to vector<2x8x8xf32>
    %226 = arith.mulf %219, %225 : vector<2x8x8xf32>
    %227 = vector.extract_strided_slice %198 {offsets = [0, 0, 8], sizes = [2, 8, 8], strides = [1, 1, 1]} : vector<2x8x32xbf16> to vector<2x8x8xbf16>
    %228 = vector.extract_strided_slice %200 {offsets = [0, 0, 8], sizes = [2, 8, 8], strides = [1, 1, 1]} : vector<2x8x32xbf16> to vector<2x8x8xbf16>
    "tpu.trace_start"() <{level = 10 : i32, message = "bqd,bkd->bqk"}> : () -> ()
    %cst_100 = arith.constant dense<0.000000e+00> : vector<2x8x8xf32>
    %229 = tpu.matmul %227, %228, %cst_100 {dimension_numbers = #tpu.dot_dimension_numbers<[2], [2], [1], [1], [0, 0, 0, 1, 1, 1], [0], [0]>} : vector<2x8x8xbf16>, vector<2x8x8xbf16>, vector<2x8x8xf32> -> vector<2x8x8xf32>
    "tpu.trace_stop"() : () -> ()
    %230 = vector.broadcast %9 : vector<2x1x8xf32> to vector<2x8x8xf32>
    %231 = arith.addf %229, %230 : vector<2x8x8xf32>
    %cst_101 = arith.constant dense<0xFF800000> : vector<2x8xf32>
    %232 = vector.multi_reduction <maximumf>, %231, %cst_101 [2] : vector<2x8x8xf32> to vector<2x8xf32>
    %233 = vector.shape_cast %232 : vector<2x8xf32> to vector<2x8x1xf32>
    %cst_102 = arith.constant -1.000000e+30 : f32
    %234 = vector.broadcast %cst_102 : f32 to vector<2x8x1xf32>
    %235 = arith.maximumf %233, %234 : vector<2x8x1xf32>
    %236 = vector.broadcast %235 : vector<2x8x1xf32> to vector<2x8x8xf32>
    %237 = arith.subf %231, %236 : vector<2x8x8xf32>
    %238 = math.exp %237 : vector<2x8x8xf32>
    %cst_103 = arith.constant dense<0.000000e+00> : vector<2x8xf32>
    %239 = vector.multi_reduction <add>, %238, %cst_103 [2] : vector<2x8x8xf32> to vector<2x8xf32>
    %240 = vector.shape_cast %239 : vector<2x8xf32> to vector<2x8x1xf32>
    %241 = arith.truncf %238 : vector<2x8x8xf32> to vector<2x8x8xbf16>
    %242 = vector.extract_strided_slice %202 {offsets = [0, 0, 8], sizes = [2, 8, 8], strides = [1, 1, 1]} : vector<2x8x32xbf16> to vector<2x8x8xbf16>
    "tpu.trace_start"() <{level = 10 : i32, message = "bqk,bkd->bqd"}> : () -> ()
    %cst_104 = arith.constant dense<0.000000e+00> : vector<2x8x8xf32>
    %243 = tpu.matmul %241, %242, %cst_104 {dimension_numbers = #tpu.dot_dimension_numbers<[2], [1], [1], [2], [0, 0, 0, 1, 1, 2], [0], [0]>} : vector<2x8x8xbf16>, vector<2x8x8xbf16>, vector<2x8x8xf32> -> vector<2x8x8xf32>
    %cst_105 = arith.constant 0.000000e+00 : f32
    "tpu.trace_stop"() : () -> ()
    %244 = vector.broadcast %cst_105 : f32 to vector<2x8x1xf32>
    %245 = arith.cmpf ogt, %240, %244 : vector<2x8x1xf32>
    %246 = tpu.reciprocal %240 {approx = true} : vector<2x8x1xf32> -> vector<2x8x1xf32>
    %cst_106 = arith.constant 0.000000e+00 : f32
    %247 = vector.broadcast %cst_106 : f32 to vector<2x8x1xf32>
    %248 = arith.select %245, %246, %247 : vector<2x8x1xi1>, vector<2x8x1xf32>
    %249 = vector.broadcast %248 : vector<2x8x1xf32> to vector<2x8x8xf32>
    %250 = arith.mulf %243, %249 : vector<2x8x8xf32>
    %251 = vector.extract_strided_slice %198 {offsets = [0, 0, 16], sizes = [2, 8, 8], strides = [1, 1, 1]} : vector<2x8x32xbf16> to vector<2x8x8xbf16>
    %252 = vector.extract_strided_slice %200 {offsets = [0, 0, 16], sizes = [2, 8, 8], strides = [1, 1, 1]} : vector<2x8x32xbf16> to vector<2x8x8xbf16>
    "tpu.trace_start"() <{level = 10 : i32, message = "bqd,bkd->bqk"}> : () -> ()
    %cst_107 = arith.constant dense<0.000000e+00> : vector<2x8x8xf32>
    %253 = tpu.matmul %251, %252, %cst_107 {dimension_numbers = #tpu.dot_dimension_numbers<[2], [2], [1], [1], [0, 0, 0, 1, 1, 1], [0], [0]>} : vector<2x8x8xbf16>, vector<2x8x8xbf16>, vector<2x8x8xf32> -> vector<2x8x8xf32>
    "tpu.trace_stop"() : () -> ()
    %254 = vector.broadcast %9 : vector<2x1x8xf32> to vector<2x8x8xf32>
    %255 = arith.addf %253, %254 : vector<2x8x8xf32>
    %cst_108 = arith.constant dense<0xFF800000> : vector<2x8xf32>
    %256 = vector.multi_reduction <maximumf>, %255, %cst_108 [2] : vector<2x8x8xf32> to vector<2x8xf32>
    %257 = vector.shape_cast %256 : vector<2x8xf32> to vector<2x8x1xf32>
    %cst_109 = arith.constant -1.000000e+30 : f32
    %258 = vector.broadcast %cst_109 : f32 to vector<2x8x1xf32>
    %259 = arith.maximumf %257, %258 : vector<2x8x1xf32>
    %260 = vector.broadcast %259 : vector<2x8x1xf32> to vector<2x8x8xf32>
    %261 = arith.subf %255, %260 : vector<2x8x8xf32>
    %262 = math.exp %261 : vector<2x8x8xf32>
    %cst_110 = arith.constant dense<0.000000e+00> : vector<2x8xf32>
    %263 = vector.multi_reduction <add>, %262, %cst_110 [2] : vector<2x8x8xf32> to vector<2x8xf32>
    %264 = vector.shape_cast %263 : vector<2x8xf32> to vector<2x8x1xf32>
    %265 = arith.truncf %262 : vector<2x8x8xf32> to vector<2x8x8xbf16>
    %266 = vector.extract_strided_slice %202 {offsets = [0, 0, 16], sizes = [2, 8, 8], strides = [1, 1, 1]} : vector<2x8x32xbf16> to vector<2x8x8xbf16>
    "tpu.trace_start"() <{level = 10 : i32, message = "bqk,bkd->bqd"}> : () -> ()
    %cst_111 = arith.constant dense<0.000000e+00> : vector<2x8x8xf32>
    %267 = tpu.matmul %265, %266, %cst_111 {dimension_numbers = #tpu.dot_dimension_numbers<[2], [1], [1], [2], [0, 0, 0, 1, 1, 2], [0], [0]>} : vector<2x8x8xbf16>, vector<2x8x8xbf16>, vector<2x8x8xf32> -> vector<2x8x8xf32>
    %cst_112 = arith.constant 0.000000e+00 : f32
    "tpu.trace_stop"() : () -> ()
    %268 = vector.broadcast %cst_112 : f32 to vector<2x8x1xf32>
    %269 = arith.cmpf ogt, %264, %268 : vector<2x8x1xf32>
    %270 = tpu.reciprocal %264 {approx = true} : vector<2x8x1xf32> -> vector<2x8x1xf32>
    %cst_113 = arith.constant 0.000000e+00 : f32
    %271 = vector.broadcast %cst_113 : f32 to vector<2x8x1xf32>
    %272 = arith.select %269, %270, %271 : vector<2x8x1xi1>, vector<2x8x1xf32>
    %273 = vector.broadcast %272 : vector<2x8x1xf32> to vector<2x8x8xf32>
    %274 = arith.mulf %267, %273 : vector<2x8x8xf32>
    %275 = vector.extract_strided_slice %198 {offsets = [0, 0, 24], sizes = [2, 8, 8], strides = [1, 1, 1]} : vector<2x8x32xbf16> to vector<2x8x8xbf16>
    %276 = vector.extract_strided_slice %200 {offsets = [0, 0, 24], sizes = [2, 8, 8], strides = [1, 1, 1]} : vector<2x8x32xbf16> to vector<2x8x8xbf16>
    "tpu.trace_start"() <{level = 10 : i32, message = "bqd,bkd->bqk"}> : () -> ()
    %cst_114 = arith.constant dense<0.000000e+00> : vector<2x8x8xf32>
    %277 = tpu.matmul %275, %276, %cst_114 {dimension_numbers = #tpu.dot_dimension_numbers<[2], [2], [1], [1], [0, 0, 0, 1, 1, 1], [0], [0]>} : vector<2x8x8xbf16>, vector<2x8x8xbf16>, vector<2x8x8xf32> -> vector<2x8x8xf32>
    "tpu.trace_stop"() : () -> ()
    %278 = vector.broadcast %9 : vector<2x1x8xf32> to vector<2x8x8xf32>
    %279 = arith.addf %277, %278 : vector<2x8x8xf32>
    %cst_115 = arith.constant dense<0xFF800000> : vector<2x8xf32>
    %280 = vector.multi_reduction <maximumf>, %279, %cst_115 [2] : vector<2x8x8xf32> to vector<2x8xf32>
    %281 = vector.shape_cast %280 : vector<2x8xf32> to vector<2x8x1xf32>
    %cst_116 = arith.constant -1.000000e+30 : f32
    %282 = vector.broadcast %cst_116 : f32 to vector<2x8x1xf32>
    %283 = arith.maximumf %281, %282 : vector<2x8x1xf32>
    %284 = vector.broadcast %283 : vector<2x8x1xf32> to vector<2x8x8xf32>
    %285 = arith.subf %279, %284 : vector<2x8x8xf32>
    %286 = math.exp %285 : vector<2x8x8xf32>
    %cst_117 = arith.constant dense<0.000000e+00> : vector<2x8xf32>
    %287 = vector.multi_reduction <add>, %286, %cst_117 [2] : vector<2x8x8xf32> to vector<2x8xf32>
    %288 = vector.shape_cast %287 : vector<2x8xf32> to vector<2x8x1xf32>
    %289 = arith.truncf %286 : vector<2x8x8xf32> to vector<2x8x8xbf16>
    %290 = vector.extract_strided_slice %202 {offsets = [0, 0, 24], sizes = [2, 8, 8], strides = [1, 1, 1]} : vector<2x8x32xbf16> to vector<2x8x8xbf16>
    "tpu.trace_start"() <{level = 10 : i32, message = "bqk,bkd->bqd"}> : () -> ()
    %cst_118 = arith.constant dense<0.000000e+00> : vector<2x8x8xf32>
    %291 = tpu.matmul %289, %290, %cst_118 {dimension_numbers = #tpu.dot_dimension_numbers<[2], [1], [1], [2], [0, 0, 0, 1, 1, 2], [0], [0]>} : vector<2x8x8xbf16>, vector<2x8x8xbf16>, vector<2x8x8xf32> -> vector<2x8x8xf32>
    %cst_119 = arith.constant 0.000000e+00 : f32
    "tpu.trace_stop"() : () -> ()
    %292 = vector.broadcast %cst_119 : f32 to vector<2x8x1xf32>
    %293 = arith.cmpf ogt, %288, %292 : vector<2x8x1xf32>
    %294 = tpu.reciprocal %288 {approx = true} : vector<2x8x1xf32> -> vector<2x8x1xf32>
    %cst_120 = arith.constant 0.000000e+00 : f32
    %295 = vector.broadcast %cst_120 : f32 to vector<2x8x1xf32>
    %296 = arith.select %293, %294, %295 : vector<2x8x1xi1>, vector<2x8x1xf32>
    %297 = vector.broadcast %296 : vector<2x8x1xf32> to vector<2x8x8xf32>
    %298 = arith.mulf %291, %297 : vector<2x8x8xf32>
    %299 = tpu.concatenate %226, %250, %274, %298 in 2 : vector<2x8x8xf32>, vector<2x8x8xf32>, vector<2x8x8xf32>, vector<2x8x8xf32> -> vector<2x8x32xf32>
    %300 = vector.shape_cast %299 : vector<2x8x32xf32> to vector<16x32xf32>
    %301 = arith.truncf %300 : vector<16x32xf32> to vector<16x32xbf16>
    %c0_121 = arith.constant 0 : index
    %c0_122 = arith.constant 0 : index
    %302 = vector.load %arg24[%c0_121, %c0_122] : memref<32x32xbf16, #tpu.memory_space<vmem>>, vector<32x32xbf16>
    %cst_123 = arith.constant dense<0.000000e+00> : vector<16x32xf32>
    %303 = tpu.matmul %301, %302, %cst_123 {dimension_numbers = #tpu.dot_dimension_numbers<[1], [0], [0], [1], [0, 0, 1, 1], [], []>} : vector<16x32xbf16>, vector<32x32xbf16>, vector<16x32xf32> -> vector<16x32xf32>
    %c0_124 = arith.constant 0 : index
    %c0_125 = arith.constant 0 : index
    %304 = vector.load %arg25[%c0_124, %c0_125] : memref<1x32xf32, #tpu.memory_space<vmem>>, vector<1x32xf32>
    %305 = vector.broadcast %304 : vector<1x32xf32> to vector<16x32xf32>
    %306 = arith.addf %303, %305 : vector<16x32xf32>
    %307 = vector.broadcast %7 : vector<16x1xf32> to vector<16x32xf32>
    %308 = arith.mulf %306, %307 : vector<16x32xf32>
    %309 = arith.addf %178, %308 : vector<16x32xf32>
    %c0_126 = arith.constant 0 : index
    %c0_127 = arith.constant 0 : index
    %310 = vector.load %arg26[%c0_126, %c0_127] : memref<1x32xf32, #tpu.memory_space<vmem>>, vector<1x32xf32>
    %c0_128 = arith.constant 0 : index
    %c0_129 = arith.constant 0 : index
    %311 = vector.load %arg27[%c0_128, %c0_129] : memref<1x32xf32, #tpu.memory_space<vmem>>, vector<1x32xf32>
    %cst_130 = arith.constant dense<0.000000e+00> : vector<16xf32>
    %312 = vector.multi_reduction <add>, %309, %cst_130 [1] : vector<16x32xf32> to vector<16xf32>
    %313 = vector.shape_cast %312 : vector<16xf32> to vector<16x1xf32>
    %cst_131 = arith.constant 3.200000e+01 : f32
    %314 = vector.broadcast %cst_131 : f32 to vector<16x1xf32>
    %315 = arith.divf %313, %314 : vector<16x1xf32>
    %316 = vector.broadcast %315 : vector<16x1xf32> to vector<16x32xf32>
    %317 = arith.subf %309, %316 : vector<16x32xf32>
    %318 = arith.mulf %317, %317 : vector<16x32xf32>
    %cst_132 = arith.constant dense<0.000000e+00> : vector<16xf32>
    %319 = vector.multi_reduction <add>, %318, %cst_132 [1] : vector<16x32xf32> to vector<16xf32>
    %320 = vector.shape_cast %319 : vector<16xf32> to vector<16x1xf32>
    %cst_133 = arith.constant 3.200000e+01 : f32
    %321 = vector.broadcast %cst_133 : f32 to vector<16x1xf32>
    %322 = arith.divf %320, %321 : vector<16x1xf32>
    %cst_134 = arith.constant 9.99999974E-6 : f32
    %323 = vector.broadcast %cst_134 : f32 to vector<16x1xf32>
    %324 = arith.addf %322, %323 : vector<16x1xf32>
    %325 = math.rsqrt %324 : vector<16x1xf32>
    %326 = vector.broadcast %325 : vector<16x1xf32> to vector<16x32xf32>
    %327 = arith.mulf %317, %326 : vector<16x32xf32>
    %328 = vector.broadcast %310 : vector<1x32xf32> to vector<16x32xf32>
    %329 = arith.mulf %327, %328 : vector<16x32xf32>
    %330 = vector.broadcast %311 : vector<1x32xf32> to vector<16x32xf32>
    %331 = arith.addf %329, %330 : vector<16x32xf32>
    %332 = arith.truncf %331 : vector<16x32xf32> to vector<16x32xbf16>
    %c0_135 = arith.constant 0 : index
    %c0_136 = arith.constant 0 : index
    %333 = vector.load %arg28[%c0_135, %c0_136] : memref<32x32xbf16, #tpu.memory_space<vmem>>, vector<32x32xbf16>
    %cst_137 = arith.constant dense<0.000000e+00> : vector<16x32xf32>
    %334 = tpu.matmul %332, %333, %cst_137 {dimension_numbers = #tpu.dot_dimension_numbers<[1], [0], [0], [1], [0, 0, 1, 1], [], []>} : vector<16x32xbf16>, vector<32x32xbf16>, vector<16x32xf32> -> vector<16x32xf32>
    %c0_138 = arith.constant 0 : index
    %c0_139 = arith.constant 0 : index
    %335 = vector.load %arg29[%c0_138, %c0_139] : memref<1x32xf32, #tpu.memory_space<vmem>>, vector<1x32xf32>
    %336 = vector.broadcast %335 : vector<1x32xf32> to vector<16x32xf32>
    %337 = arith.addf %334, %336 : vector<16x32xf32>
    %338 = arith.truncf %5 : vector<16x32xf32> to vector<16x32xbf16>
    %c0_140 = arith.constant 0 : index
    %c0_141 = arith.constant 0 : index
    %339 = vector.load %arg30[%c0_140, %c0_141] : memref<32x32xbf16, #tpu.memory_space<vmem>>, vector<32x32xbf16>
    %cst_142 = arith.constant dense<0.000000e+00> : vector<16x32xf32>
    %340 = tpu.matmul %338, %339, %cst_142 {dimension_numbers = #tpu.dot_dimension_numbers<[1], [0], [0], [1], [0, 0, 1, 1], [], []>} : vector<16x32xbf16>, vector<32x32xbf16>, vector<16x32xf32> -> vector<16x32xf32>
    %c0_143 = arith.constant 0 : index
    %c0_144 = arith.constant 0 : index
    %341 = vector.load %arg31[%c0_143, %c0_144] : memref<1x32xf32, #tpu.memory_space<vmem>>, vector<1x32xf32>
    %342 = vector.broadcast %341 : vector<1x32xf32> to vector<16x32xf32>
    %343 = arith.addf %340, %342 : vector<16x32xf32>
    %344 = arith.truncf %5 : vector<16x32xf32> to vector<16x32xbf16>
    %c0_145 = arith.constant 0 : index
    %c0_146 = arith.constant 0 : index
    %345 = vector.load %arg32[%c0_145, %c0_146] : memref<32x32xbf16, #tpu.memory_space<vmem>>, vector<32x32xbf16>
    %cst_147 = arith.constant dense<0.000000e+00> : vector<16x32xf32>
    %346 = tpu.matmul %344, %345, %cst_147 {dimension_numbers = #tpu.dot_dimension_numbers<[1], [0], [0], [1], [0, 0, 1, 1], [], []>} : vector<16x32xbf16>, vector<32x32xbf16>, vector<16x32xf32> -> vector<16x32xf32>
    %c0_148 = arith.constant 0 : index
    %c0_149 = arith.constant 0 : index
    %347 = vector.load %arg33[%c0_148, %c0_149] : memref<1x32xf32, #tpu.memory_space<vmem>>, vector<1x32xf32>
    %348 = vector.broadcast %347 : vector<1x32xf32> to vector<16x32xf32>
    %349 = arith.addf %346, %348 : vector<16x32xf32>
    %350 = vector.shape_cast %337 : vector<16x32xf32> to vector<2x8x32xf32>
    %351 = arith.truncf %350 : vector<2x8x32xf32> to vector<2x8x32xbf16>
    %352 = vector.shape_cast %343 : vector<16x32xf32> to vector<2x8x32xf32>
    %353 = arith.truncf %352 : vector<2x8x32xf32> to vector<2x8x32xbf16>
    %354 = vector.shape_cast %349 : vector<16x32xf32> to vector<2x8x32xf32>
    %355 = arith.truncf %354 : vector<2x8x32xf32> to vector<2x8x32xbf16>
    %356 = vector.extract_strided_slice %351 {offsets = [0, 0, 0], sizes = [2, 8, 8], strides = [1, 1, 1]} : vector<2x8x32xbf16> to vector<2x8x8xbf16>
    %357 = vector.extract_strided_slice %353 {offsets = [0, 0, 0], sizes = [2, 8, 8], strides = [1, 1, 1]} : vector<2x8x32xbf16> to vector<2x8x8xbf16>
    "tpu.trace_start"() <{level = 10 : i32, message = "bqd,bkd->bqk"}> : () -> ()
    %cst_150 = arith.constant dense<0.000000e+00> : vector<2x8x8xf32>
    %358 = tpu.matmul %356, %357, %cst_150 {dimension_numbers = #tpu.dot_dimension_numbers<[2], [2], [1], [1], [0, 0, 0, 1, 1, 1], [0], [0]>} : vector<2x8x8xbf16>, vector<2x8x8xbf16>, vector<2x8x8xf32> -> vector<2x8x8xf32>
    "tpu.trace_stop"() : () -> ()
    %359 = vector.broadcast %10 : vector<2x1x8xf32> to vector<2x8x8xf32>
    %360 = arith.addf %358, %359 : vector<2x8x8xf32>
    %cst_151 = arith.constant dense<0xFF800000> : vector<2x8xf32>
    %361 = vector.multi_reduction <maximumf>, %360, %cst_151 [2] : vector<2x8x8xf32> to vector<2x8xf32>
    %362 = vector.shape_cast %361 : vector<2x8xf32> to vector<2x8x1xf32>
    %cst_152 = arith.constant -1.000000e+30 : f32
    %363 = vector.broadcast %cst_152 : f32 to vector<2x8x1xf32>
    %364 = arith.maximumf %362, %363 : vector<2x8x1xf32>
    %365 = vector.broadcast %364 : vector<2x8x1xf32> to vector<2x8x8xf32>
    %366 = arith.subf %360, %365 : vector<2x8x8xf32>
    %367 = math.exp %366 : vector<2x8x8xf32>
    %cst_153 = arith.constant dense<0.000000e+00> : vector<2x8xf32>
    %368 = vector.multi_reduction <add>, %367, %cst_153 [2] : vector<2x8x8xf32> to vector<2x8xf32>
    %369 = vector.shape_cast %368 : vector<2x8xf32> to vector<2x8x1xf32>
    %370 = arith.truncf %367 : vector<2x8x8xf32> to vector<2x8x8xbf16>
    %371 = vector.extract_strided_slice %355 {offsets = [0, 0, 0], sizes = [2, 8, 8], strides = [1, 1, 1]} : vector<2x8x32xbf16> to vector<2x8x8xbf16>
    "tpu.trace_start"() <{level = 10 : i32, message = "bqk,bkd->bqd"}> : () -> ()
    %cst_154 = arith.constant dense<0.000000e+00> : vector<2x8x8xf32>
    %372 = tpu.matmul %370, %371, %cst_154 {dimension_numbers = #tpu.dot_dimension_numbers<[2], [1], [1], [2], [0, 0, 0, 1, 1, 2], [0], [0]>} : vector<2x8x8xbf16>, vector<2x8x8xbf16>, vector<2x8x8xf32> -> vector<2x8x8xf32>
    %cst_155 = arith.constant 0.000000e+00 : f32
    "tpu.trace_stop"() : () -> ()
    %373 = vector.broadcast %cst_155 : f32 to vector<2x8x1xf32>
    %374 = arith.cmpf ogt, %369, %373 : vector<2x8x1xf32>
    %375 = tpu.reciprocal %369 {approx = true} : vector<2x8x1xf32> -> vector<2x8x1xf32>
    %cst_156 = arith.constant 0.000000e+00 : f32
    %376 = vector.broadcast %cst_156 : f32 to vector<2x8x1xf32>
    %377 = arith.select %374, %375, %376 : vector<2x8x1xi1>, vector<2x8x1xf32>
    %378 = vector.broadcast %377 : vector<2x8x1xf32> to vector<2x8x8xf32>
    %379 = arith.mulf %372, %378 : vector<2x8x8xf32>
    %380 = vector.extract_strided_slice %351 {offsets = [0, 0, 8], sizes = [2, 8, 8], strides = [1, 1, 1]} : vector<2x8x32xbf16> to vector<2x8x8xbf16>
    %381 = vector.extract_strided_slice %353 {offsets = [0, 0, 8], sizes = [2, 8, 8], strides = [1, 1, 1]} : vector<2x8x32xbf16> to vector<2x8x8xbf16>
    "tpu.trace_start"() <{level = 10 : i32, message = "bqd,bkd->bqk"}> : () -> ()
    %cst_157 = arith.constant dense<0.000000e+00> : vector<2x8x8xf32>
    %382 = tpu.matmul %380, %381, %cst_157 {dimension_numbers = #tpu.dot_dimension_numbers<[2], [2], [1], [1], [0, 0, 0, 1, 1, 1], [0], [0]>} : vector<2x8x8xbf16>, vector<2x8x8xbf16>, vector<2x8x8xf32> -> vector<2x8x8xf32>
    "tpu.trace_stop"() : () -> ()
    %383 = vector.broadcast %10 : vector<2x1x8xf32> to vector<2x8x8xf32>
    %384 = arith.addf %382, %383 : vector<2x8x8xf32>
    %cst_158 = arith.constant dense<0xFF800000> : vector<2x8xf32>
    %385 = vector.multi_reduction <maximumf>, %384, %cst_158 [2] : vector<2x8x8xf32> to vector<2x8xf32>
    %386 = vector.shape_cast %385 : vector<2x8xf32> to vector<2x8x1xf32>
    %cst_159 = arith.constant -1.000000e+30 : f32
    %387 = vector.broadcast %cst_159 : f32 to vector<2x8x1xf32>
    %388 = arith.maximumf %386, %387 : vector<2x8x1xf32>
    %389 = vector.broadcast %388 : vector<2x8x1xf32> to vector<2x8x8xf32>
    %390 = arith.subf %384, %389 : vector<2x8x8xf32>
    %391 = math.exp %390 : vector<2x8x8xf32>
    %cst_160 = arith.constant dense<0.000000e+00> : vector<2x8xf32>
    %392 = vector.multi_reduction <add>, %391, %cst_160 [2] : vector<2x8x8xf32> to vector<2x8xf32>
    %393 = vector.shape_cast %392 : vector<2x8xf32> to vector<2x8x1xf32>
    %394 = arith.truncf %391 : vector<2x8x8xf32> to vector<2x8x8xbf16>
    %395 = vector.extract_strided_slice %355 {offsets = [0, 0, 8], sizes = [2, 8, 8], strides = [1, 1, 1]} : vector<2x8x32xbf16> to vector<2x8x8xbf16>
    "tpu.trace_start"() <{level = 10 : i32, message = "bqk,bkd->bqd"}> : () -> ()
    %cst_161 = arith.constant dense<0.000000e+00> : vector<2x8x8xf32>
    %396 = tpu.matmul %394, %395, %cst_161 {dimension_numbers = #tpu.dot_dimension_numbers<[2], [1], [1], [2], [0, 0, 0, 1, 1, 2], [0], [0]>} : vector<2x8x8xbf16>, vector<2x8x8xbf16>, vector<2x8x8xf32> -> vector<2x8x8xf32>
    %cst_162 = arith.constant 0.000000e+00 : f32
    "tpu.trace_stop"() : () -> ()
    %397 = vector.broadcast %cst_162 : f32 to vector<2x8x1xf32>
    %398 = arith.cmpf ogt, %393, %397 : vector<2x8x1xf32>
    %399 = tpu.reciprocal %393 {approx = true} : vector<2x8x1xf32> -> vector<2x8x1xf32>
    %cst_163 = arith.constant 0.000000e+00 : f32
    %400 = vector.broadcast %cst_163 : f32 to vector<2x8x1xf32>
    %401 = arith.select %398, %399, %400 : vector<2x8x1xi1>, vector<2x8x1xf32>
    %402 = vector.broadcast %401 : vector<2x8x1xf32> to vector<2x8x8xf32>
    %403 = arith.mulf %396, %402 : vector<2x8x8xf32>
    %404 = vector.extract_strided_slice %351 {offsets = [0, 0, 16], sizes = [2, 8, 8], strides = [1, 1, 1]} : vector<2x8x32xbf16> to vector<2x8x8xbf16>
    %405 = vector.extract_strided_slice %353 {offsets = [0, 0, 16], sizes = [2, 8, 8], strides = [1, 1, 1]} : vector<2x8x32xbf16> to vector<2x8x8xbf16>
    "tpu.trace_start"() <{level = 10 : i32, message = "bqd,bkd->bqk"}> : () -> ()
    %cst_164 = arith.constant dense<0.000000e+00> : vector<2x8x8xf32>
    %406 = tpu.matmul %404, %405, %cst_164 {dimension_numbers = #tpu.dot_dimension_numbers<[2], [2], [1], [1], [0, 0, 0, 1, 1, 1], [0], [0]>} : vector<2x8x8xbf16>, vector<2x8x8xbf16>, vector<2x8x8xf32> -> vector<2x8x8xf32>
    "tpu.trace_stop"() : () -> ()
    %407 = vector.broadcast %10 : vector<2x1x8xf32> to vector<2x8x8xf32>
    %408 = arith.addf %406, %407 : vector<2x8x8xf32>
    %cst_165 = arith.constant dense<0xFF800000> : vector<2x8xf32>
    %409 = vector.multi_reduction <maximumf>, %408, %cst_165 [2] : vector<2x8x8xf32> to vector<2x8xf32>
    %410 = vector.shape_cast %409 : vector<2x8xf32> to vector<2x8x1xf32>
    %cst_166 = arith.constant -1.000000e+30 : f32
    %411 = vector.broadcast %cst_166 : f32 to vector<2x8x1xf32>
    %412 = arith.maximumf %410, %411 : vector<2x8x1xf32>
    %413 = vector.broadcast %412 : vector<2x8x1xf32> to vector<2x8x8xf32>
    %414 = arith.subf %408, %413 : vector<2x8x8xf32>
    %415 = math.exp %414 : vector<2x8x8xf32>
    %cst_167 = arith.constant dense<0.000000e+00> : vector<2x8xf32>
    %416 = vector.multi_reduction <add>, %415, %cst_167 [2] : vector<2x8x8xf32> to vector<2x8xf32>
    %417 = vector.shape_cast %416 : vector<2x8xf32> to vector<2x8x1xf32>
    %418 = arith.truncf %415 : vector<2x8x8xf32> to vector<2x8x8xbf16>
    %419 = vector.extract_strided_slice %355 {offsets = [0, 0, 16], sizes = [2, 8, 8], strides = [1, 1, 1]} : vector<2x8x32xbf16> to vector<2x8x8xbf16>
    "tpu.trace_start"() <{level = 10 : i32, message = "bqk,bkd->bqd"}> : () -> ()
    %cst_168 = arith.constant dense<0.000000e+00> : vector<2x8x8xf32>
    %420 = tpu.matmul %418, %419, %cst_168 {dimension_numbers = #tpu.dot_dimension_numbers<[2], [1], [1], [2], [0, 0, 0, 1, 1, 2], [0], [0]>} : vector<2x8x8xbf16>, vector<2x8x8xbf16>, vector<2x8x8xf32> -> vector<2x8x8xf32>
    %cst_169 = arith.constant 0.000000e+00 : f32
    "tpu.trace_stop"() : () -> ()
    %421 = vector.broadcast %cst_169 : f32 to vector<2x8x1xf32>
    %422 = arith.cmpf ogt, %417, %421 : vector<2x8x1xf32>
    %423 = tpu.reciprocal %417 {approx = true} : vector<2x8x1xf32> -> vector<2x8x1xf32>
    %cst_170 = arith.constant 0.000000e+00 : f32
    %424 = vector.broadcast %cst_170 : f32 to vector<2x8x1xf32>
    %425 = arith.select %422, %423, %424 : vector<2x8x1xi1>, vector<2x8x1xf32>
    %426 = vector.broadcast %425 : vector<2x8x1xf32> to vector<2x8x8xf32>
    %427 = arith.mulf %420, %426 : vector<2x8x8xf32>
    %428 = vector.extract_strided_slice %351 {offsets = [0, 0, 24], sizes = [2, 8, 8], strides = [1, 1, 1]} : vector<2x8x32xbf16> to vector<2x8x8xbf16>
    %429 = vector.extract_strided_slice %353 {offsets = [0, 0, 24], sizes = [2, 8, 8], strides = [1, 1, 1]} : vector<2x8x32xbf16> to vector<2x8x8xbf16>
    "tpu.trace_start"() <{level = 10 : i32, message = "bqd,bkd->bqk"}> : () -> ()
    %cst_171 = arith.constant dense<0.000000e+00> : vector<2x8x8xf32>
    %430 = tpu.matmul %428, %429, %cst_171 {dimension_numbers = #tpu.dot_dimension_numbers<[2], [2], [1], [1], [0, 0, 0, 1, 1, 1], [0], [0]>} : vector<2x8x8xbf16>, vector<2x8x8xbf16>, vector<2x8x8xf32> -> vector<2x8x8xf32>
    "tpu.trace_stop"() : () -> ()
    %431 = vector.broadcast %10 : vector<2x1x8xf32> to vector<2x8x8xf32>
    %432 = arith.addf %430, %431 : vector<2x8x8xf32>
    %cst_172 = arith.constant dense<0xFF800000> : vector<2x8xf32>
    %433 = vector.multi_reduction <maximumf>, %432, %cst_172 [2] : vector<2x8x8xf32> to vector<2x8xf32>
    %434 = vector.shape_cast %433 : vector<2x8xf32> to vector<2x8x1xf32>
    %cst_173 = arith.constant -1.000000e+30 : f32
    %435 = vector.broadcast %cst_173 : f32 to vector<2x8x1xf32>
    %436 = arith.maximumf %434, %435 : vector<2x8x1xf32>
    %437 = vector.broadcast %436 : vector<2x8x1xf32> to vector<2x8x8xf32>
    %438 = arith.subf %432, %437 : vector<2x8x8xf32>
    %439 = math.exp %438 : vector<2x8x8xf32>
    %cst_174 = arith.constant dense<0.000000e+00> : vector<2x8xf32>
    %440 = vector.multi_reduction <add>, %439, %cst_174 [2] : vector<2x8x8xf32> to vector<2x8xf32>
    %441 = vector.shape_cast %440 : vector<2x8xf32> to vector<2x8x1xf32>
    %442 = arith.truncf %439 : vector<2x8x8xf32> to vector<2x8x8xbf16>
    %443 = vector.extract_strided_slice %355 {offsets = [0, 0, 24], sizes = [2, 8, 8], strides = [1, 1, 1]} : vector<2x8x32xbf16> to vector<2x8x8xbf16>
    "tpu.trace_start"() <{level = 10 : i32, message = "bqk,bkd->bqd"}> : () -> ()
    %cst_175 = arith.constant dense<0.000000e+00> : vector<2x8x8xf32>
    %444 = tpu.matmul %442, %443, %cst_175 {dimension_numbers = #tpu.dot_dimension_numbers<[2], [1], [1], [2], [0, 0, 0, 1, 1, 2], [0], [0]>} : vector<2x8x8xbf16>, vector<2x8x8xbf16>, vector<2x8x8xf32> -> vector<2x8x8xf32>
    %cst_176 = arith.constant 0.000000e+00 : f32
    "tpu.trace_stop"() : () -> ()
    %445 = vector.broadcast %cst_176 : f32 to vector<2x8x1xf32>
    %446 = arith.cmpf ogt, %441, %445 : vector<2x8x1xf32>
    %447 = tpu.reciprocal %441 {approx = true} : vector<2x8x1xf32> -> vector<2x8x1xf32>
    %cst_177 = arith.constant 0.000000e+00 : f32
    %448 = vector.broadcast %cst_177 : f32 to vector<2x8x1xf32>
    %449 = arith.select %446, %447, %448 : vector<2x8x1xi1>, vector<2x8x1xf32>
    %450 = vector.broadcast %449 : vector<2x8x1xf32> to vector<2x8x8xf32>
    %451 = arith.mulf %444, %450 : vector<2x8x8xf32>
    %452 = tpu.concatenate %379, %403, %427, %451 in 2 : vector<2x8x8xf32>, vector<2x8x8xf32>, vector<2x8x8xf32>, vector<2x8x8xf32> -> vector<2x8x32xf32>
    %453 = vector.shape_cast %452 : vector<2x8x32xf32> to vector<16x32xf32>
    %454 = arith.truncf %453 : vector<16x32xf32> to vector<16x32xbf16>
    %c0_178 = arith.constant 0 : index
    %c0_179 = arith.constant 0 : index
    %455 = vector.load %arg34[%c0_178, %c0_179] : memref<32x32xbf16, #tpu.memory_space<vmem>>, vector<32x32xbf16>
    %cst_180 = arith.constant dense<0.000000e+00> : vector<16x32xf32>
    %456 = tpu.matmul %454, %455, %cst_180 {dimension_numbers = #tpu.dot_dimension_numbers<[1], [0], [0], [1], [0, 0, 1, 1], [], []>} : vector<16x32xbf16>, vector<32x32xbf16>, vector<16x32xf32> -> vector<16x32xf32>
    %c0_181 = arith.constant 0 : index
    %c0_182 = arith.constant 0 : index
    %457 = vector.load %arg35[%c0_181, %c0_182] : memref<1x32xf32, #tpu.memory_space<vmem>>, vector<1x32xf32>
    %458 = vector.broadcast %457 : vector<1x32xf32> to vector<16x32xf32>
    %459 = arith.addf %456, %458 : vector<16x32xf32>
    %460 = vector.broadcast %7 : vector<16x1xf32> to vector<16x32xf32>
    %461 = arith.mulf %459, %460 : vector<16x32xf32>
    %462 = arith.addf %331, %461 : vector<16x32xf32>
    %c0_183 = arith.constant 0 : index
    %c0_184 = arith.constant 0 : index
    %463 = vector.load %arg36[%c0_183, %c0_184] : memref<1x32xf32, #tpu.memory_space<vmem>>, vector<1x32xf32>
    %c0_185 = arith.constant 0 : index
    %c0_186 = arith.constant 0 : index
    %464 = vector.load %arg37[%c0_185, %c0_186] : memref<1x32xf32, #tpu.memory_space<vmem>>, vector<1x32xf32>
    %cst_187 = arith.constant dense<0.000000e+00> : vector<16xf32>
    %465 = vector.multi_reduction <add>, %462, %cst_187 [1] : vector<16x32xf32> to vector<16xf32>
    %466 = vector.shape_cast %465 : vector<16xf32> to vector<16x1xf32>
    %cst_188 = arith.constant 3.200000e+01 : f32
    %467 = vector.broadcast %cst_188 : f32 to vector<16x1xf32>
    %468 = arith.divf %466, %467 : vector<16x1xf32>
    %469 = vector.broadcast %468 : vector<16x1xf32> to vector<16x32xf32>
    %470 = arith.subf %462, %469 : vector<16x32xf32>
    %471 = arith.mulf %470, %470 : vector<16x32xf32>
    %cst_189 = arith.constant dense<0.000000e+00> : vector<16xf32>
    %472 = vector.multi_reduction <add>, %471, %cst_189 [1] : vector<16x32xf32> to vector<16xf32>
    %473 = vector.shape_cast %472 : vector<16xf32> to vector<16x1xf32>
    %cst_190 = arith.constant 3.200000e+01 : f32
    %474 = vector.broadcast %cst_190 : f32 to vector<16x1xf32>
    %475 = arith.divf %473, %474 : vector<16x1xf32>
    %cst_191 = arith.constant 9.99999974E-6 : f32
    %476 = vector.broadcast %cst_191 : f32 to vector<16x1xf32>
    %477 = arith.addf %475, %476 : vector<16x1xf32>
    %478 = math.rsqrt %477 : vector<16x1xf32>
    %479 = vector.broadcast %478 : vector<16x1xf32> to vector<16x32xf32>
    %480 = arith.mulf %470, %479 : vector<16x32xf32>
    %481 = vector.broadcast %463 : vector<1x32xf32> to vector<16x32xf32>
    %482 = arith.mulf %480, %481 : vector<16x32xf32>
    %483 = vector.broadcast %464 : vector<1x32xf32> to vector<16x32xf32>
    %484 = arith.addf %482, %483 : vector<16x32xf32>
    %485 = arith.truncf %484 : vector<16x32xf32> to vector<16x32xbf16>
    %c0_192 = arith.constant 0 : index
    %c0_193 = arith.constant 0 : index
    %486 = vector.load %arg38[%c0_192, %c0_193] : memref<32x64xbf16, #tpu.memory_space<vmem>>, vector<32x64xbf16>
    %cst_194 = arith.constant dense<0.000000e+00> : vector<16x64xf32>
    %487 = tpu.matmul %485, %486, %cst_194 {dimension_numbers = #tpu.dot_dimension_numbers<[1], [0], [0], [1], [0, 0, 1, 1], [], []>} : vector<16x32xbf16>, vector<32x64xbf16>, vector<16x64xf32> -> vector<16x64xf32>
    %c0_195 = arith.constant 0 : index
    %c0_196 = arith.constant 0 : index
    %488 = vector.load %arg39[%c0_195, %c0_196] : memref<1x64xf32, #tpu.memory_space<vmem>>, vector<1x64xf32>
    %489 = vector.broadcast %488 : vector<1x64xf32> to vector<16x64xf32>
    %490 = arith.addf %487, %489 : vector<16x64xf32>
    %cst_197 = arith.constant 0.000000e+00 : f32
    %491 = vector.broadcast %cst_197 : f32 to vector<16x64xf32>
    %492 = arith.cmpf oge, %490, %491 : vector<16x64xf32>
    %cst_198 = arith.constant 0.00999999977 : f32
    %493 = vector.broadcast %cst_198 : f32 to vector<16x64xf32>
    %494 = arith.mulf %493, %490 : vector<16x64xf32>
    %495 = arith.select %492, %490, %494 : vector<16x64xi1>, vector<16x64xf32>
    %496 = arith.truncf %495 : vector<16x64xf32> to vector<16x64xbf16>
    %c0_199 = arith.constant 0 : index
    %c0_200 = arith.constant 0 : index
    %497 = vector.load %arg40[%c0_199, %c0_200] : memref<64x32xbf16, #tpu.memory_space<vmem>>, vector<64x32xbf16>
    %cst_201 = arith.constant dense<0.000000e+00> : vector<16x32xf32>
    %498 = tpu.matmul %496, %497, %cst_201 {dimension_numbers = #tpu.dot_dimension_numbers<[1], [0], [0], [1], [0, 0, 1, 1], [], []>} : vector<16x64xbf16>, vector<64x32xbf16>, vector<16x32xf32> -> vector<16x32xf32>
    %c0_202 = arith.constant 0 : index
    %c0_203 = arith.constant 0 : index
    %499 = vector.load %arg41[%c0_202, %c0_203] : memref<1x32xf32, #tpu.memory_space<vmem>>, vector<1x32xf32>
    %500 = vector.broadcast %499 : vector<1x32xf32> to vector<16x32xf32>
    %501 = arith.addf %498, %500 : vector<16x32xf32>
    %502 = vector.broadcast %7 : vector<16x1xf32> to vector<16x32xf32>
    %503 = arith.mulf %501, %502 : vector<16x32xf32>
    %504 = arith.addf %484, %503 : vector<16x32xf32>
    %c0_204 = arith.constant 0 : index
    %c0_205 = arith.constant 0 : index
    %505 = vector.load %arg42[%c0_204, %c0_205] : memref<1x32xf32, #tpu.memory_space<vmem>>, vector<1x32xf32>
    %c0_206 = arith.constant 0 : index
    %c0_207 = arith.constant 0 : index
    %506 = vector.load %arg43[%c0_206, %c0_207] : memref<1x32xf32, #tpu.memory_space<vmem>>, vector<1x32xf32>
    %cst_208 = arith.constant dense<0.000000e+00> : vector<16xf32>
    %507 = vector.multi_reduction <add>, %504, %cst_208 [1] : vector<16x32xf32> to vector<16xf32>
    %508 = vector.shape_cast %507 : vector<16xf32> to vector<16x1xf32>
    %cst_209 = arith.constant 3.200000e+01 : f32
    %509 = vector.broadcast %cst_209 : f32 to vector<16x1xf32>
    %510 = arith.divf %508, %509 : vector<16x1xf32>
    %511 = vector.broadcast %510 : vector<16x1xf32> to vector<16x32xf32>
    %512 = arith.subf %504, %511 : vector<16x32xf32>
    %513 = arith.mulf %512, %512 : vector<16x32xf32>
    %cst_210 = arith.constant dense<0.000000e+00> : vector<16xf32>
    %514 = vector.multi_reduction <add>, %513, %cst_210 [1] : vector<16x32xf32> to vector<16xf32>
    %515 = vector.shape_cast %514 : vector<16xf32> to vector<16x1xf32>
    %cst_211 = arith.constant 3.200000e+01 : f32
    %516 = vector.broadcast %cst_211 : f32 to vector<16x1xf32>
    %517 = arith.divf %515, %516 : vector<16x1xf32>
    %cst_212 = arith.constant 9.99999974E-6 : f32
    %518 = vector.broadcast %cst_212 : f32 to vector<16x1xf32>
    %519 = arith.addf %517, %518 : vector<16x1xf32>
    %520 = math.rsqrt %519 : vector<16x1xf32>
    %521 = vector.broadcast %520 : vector<16x1xf32> to vector<16x32xf32>
    %522 = arith.mulf %512, %521 : vector<16x32xf32>
    %523 = vector.broadcast %505 : vector<1x32xf32> to vector<16x32xf32>
    %524 = arith.mulf %522, %523 : vector<16x32xf32>
    %525 = vector.broadcast %506 : vector<1x32xf32> to vector<16x32xf32>
    %526 = arith.addf %524, %525 : vector<16x32xf32>
    %527 = vector.shape_cast %526 : vector<16x32xf32> to vector<2x8x32xf32>
    %c0_213 = arith.constant 0 : index
    %c0_214 = arith.constant 0 : index
    %c0_215 = arith.constant 0 : index
    %528 = vector.load %arg44[%c0_213, %c0_214, %c0_215] : memref<2x8x32xf32, #tpu.memory_space<vmem>>, vector<2x8x32xf32>
    tpu.vector_store %arg44[%c0_213, %c0_214, %c0_215], %527 {strides = array<i32>} : memref<2x8x32xf32, #tpu.memory_space<vmem>>, vector<2x8x32xf32>,
    return
  }
  func.func @transform_0(%arg0: i32) -> (i32, i32, i32) {
    %c0_i32 = arith.constant 0 : i32
    %c0_i32_0 = arith.constant 0 : i32
    %c0_i32_1 = arith.constant 0 : i32
    return %arg0, %c0_i32, %c0_i32_0 : i32, i32, i32
  }
  func.func @transform_1(%arg0: i32) -> (i32, i32, i32) {
    %c0_i32 = arith.constant 0 : i32
    %c0_i32_0 = arith.constant 0 : i32
    %c0_i32_1 = arith.constant 0 : i32
    return %arg0, %c0_i32, %c0_i32_0 : i32, i32, i32
  }
  func.func @transform_2(%arg0: i32) -> (i32, i32, i32) {
    %c0_i32 = arith.constant 0 : i32
    %c0_i32_0 = arith.constant 0 : i32
    %c0_i32_1 = arith.constant 0 : i32
    return %arg0, %c0_i32, %c0_i32_0 : i32, i32, i32
  }
  func.func @transform_3(%arg0: i32) -> (i32, i32, i32) {
    %c0_i32 = arith.constant 0 : i32
    %c0_i32_0 = arith.constant 0 : i32
    %c0_i32_1 = arith.constant 0 : i32
    return %arg0, %c0_i32, %c0_i32_0 : i32, i32, i32
  }
  func.func @transform_4(%arg0: i32) -> (i32, i32, i32) {
    %c0_i32 = arith.constant 0 : i32
    %c0_i32_0 = arith.constant 0 : i32
    %c0_i32_1 = arith.constant 0 : i32
    return %arg0, %c0_i32, %c0_i32_0 : i32, i32, i32
  }
  func.func @transform_5(%arg0: i32) -> (i32, i32, i32) {
    %c0_i32 = arith.constant 0 : i32
    %c0_i32_0 = arith.constant 0 : i32
    %c0_i32_1 = arith.constant 0 : i32
    return %arg0, %c0_i32, %c0_i32_0 : i32, i32, i32
  }
  func.func @transform_6(%arg0: i32) -> (i32, i32, i32) {
    %c0_i32 = arith.constant 0 : i32
    %c0_i32_0 = arith.constant 0 : i32
    %c0_i32_1 = arith.constant 0 : i32
    return %arg0, %c0_i32, %c0_i32_0 : i32, i32, i32
  }
  func.func @transform_7(%arg0: i32) -> (i32, i32) {
    %c0_i32 = arith.constant 0 : i32
    %c0_i32_0 = arith.constant 0 : i32
    %c0_i32_1 = arith.constant 0 : i32
    return %c0_i32, %c0_i32_0 : i32, i32
  }
  func.func @transform_8(%arg0: i32) -> (i32, i32) {
    %c0_i32 = arith.constant 0 : i32
    %c0_i32_0 = arith.constant 0 : i32
    %c0_i32_1 = arith.constant 0 : i32
    return %c0_i32, %c0_i32_0 : i32, i32
  }
  func.func @transform_9(%arg0: i32) -> (i32, i32) {
    %c0_i32 = arith.constant 0 : i32
    %c0_i32_0 = arith.constant 0 : i32
    %c0_i32_1 = arith.constant 0 : i32
    return %c0_i32, %c0_i32_0 : i32, i32
  }
  func.func @transform_10(%arg0: i32) -> (i32, i32) {
    %c0_i32 = arith.constant 0 : i32
    %c0_i32_0 = arith.constant 0 : i32
    %c0_i32_1 = arith.constant 0 : i32
    return %c0_i32, %c0_i32_0 : i32, i32
  }
  func.func @transform_11(%arg0: i32) -> (i32, i32) {
    %c0_i32 = arith.constant 0 : i32
    %c0_i32_0 = arith.constant 0 : i32
    %c0_i32_1 = arith.constant 0 : i32
    return %c0_i32, %c0_i32_0 : i32, i32
  }
  func.func @transform_12(%arg0: i32) -> (i32, i32) {
    %c0_i32 = arith.constant 0 : i32
    %c0_i32_0 = arith.constant 0 : i32
    %c0_i32_1 = arith.constant 0 : i32
    return %c0_i32, %c0_i32_0 : i32, i32
  }
  func.func @transform_13(%arg0: i32) -> (i32, i32) {
    %c0_i32 = arith.constant 0 : i32
    %c0_i32_0 = arith.constant 0 : i32
    %c0_i32_1 = arith.constant 0 : i32
    return %c0_i32, %c0_i32_0 : i32, i32
  }
  func.func @transform_14(%arg0: i32) -> (i32, i32) {
    %c0_i32 = arith.constant 0 : i32
    %c0_i32_0 = arith.constant 0 : i32
    %c0_i32_1 = arith.constant 0 : i32
    return %c0_i32, %c0_i32_0 : i32, i32
  }
  func.func @transform_15(%arg0: i32) -> (i32, i32) {
    %c0_i32 = arith.constant 0 : i32
    %c0_i32_0 = arith.constant 0 : i32
    %c0_i32_1 = arith.constant 0 : i32
    return %c0_i32, %c0_i32_0 : i32, i32
  }
  func.func @transform_16(%arg0: i32) -> (i32, i32) {
    %c0_i32 = arith.constant 0 : i32
    %c0_i32_0 = arith.constant 0 : i32
    %c0_i32_1 = arith.constant 0 : i32
    return %c0_i32, %c0_i32_0 : i32, i32
  }
  func.func @transform_17(%arg0: i32) -> (i32, i32) {
    %c0_i32 = arith.constant 0 : i32
    %c0_i32_0 = arith.constant 0 : i32
    %c0_i32_1 = arith.constant 0 : i32
    return %c0_i32, %c0_i32_0 : i32, i32
  }
  func.func @transform_18(%arg0: i32) -> (i32, i32) {
    %c0_i32 = arith.constant 0 : i32
    %c0_i32_0 = arith.constant 0 : i32
    %c0_i32_1 = arith.constant 0 : i32
    return %c0_i32, %c0_i32_0 : i32, i32
  }
  func.func @transform_19(%arg0: i32) -> (i32, i32) {
    %c0_i32 = arith.constant 0 : i32
    %c0_i32_0 = arith.constant 0 : i32
    %c0_i32_1 = arith.constant 0 : i32
    return %c0_i32, %c0_i32_0 : i32, i32
  }
  func.func @transform_20(%arg0: i32) -> (i32, i32) {
    %c0_i32 = arith.constant 0 : i32
    %c0_i32_0 = arith.constant 0 : i32
    %c0_i32_1 = arith.constant 0 : i32
    return %c0_i32, %c0_i32_0 : i32, i32
  }
  func.func @transform_21(%arg0: i32) -> (i32, i32) {
    %c0_i32 = arith.constant 0 : i32
    %c0_i32_0 = arith.constant 0 : i32
    %c0_i32_1 = arith.constant 0 : i32
    return %c0_i32, %c0_i32_0 : i32, i32
  }
  func.func @transform_22(%arg0: i32) -> (i32, i32) {
    %c0_i32 = arith.constant 0 : i32
    %c0_i32_0 = arith.constant 0 : i32
    %c0_i32_1 = arith.constant 0 : i32
    return %c0_i32, %c0_i32_0 : i32, i32
  }
  func.func @transform_23(%arg0: i32) -> (i32, i32) {
    %c0_i32 = arith.constant 0 : i32
    %c0_i32_0 = arith.constant 0 : i32
    %c0_i32_1 = arith.constant 0 : i32
    return %c0_i32, %c0_i32_0 : i32, i32
  }
  func.func @transform_24(%arg0: i32) -> (i32, i32) {
    %c0_i32 = arith.constant 0 : i32
    %c0_i32_0 = arith.constant 0 : i32
    %c0_i32_1 = arith.constant 0 : i32
    return %c0_i32, %c0_i32_0 : i32, i32
  }
  func.func @transform_25(%arg0: i32) -> (i32, i32) {
    %c0_i32 = arith.constant 0 : i32
    %c0_i32_0 = arith.constant 0 : i32
    %c0_i32_1 = arith.constant 0 : i32
    return %c0_i32, %c0_i32_0 : i32, i32
  }
  func.func @transform_26(%arg0: i32) -> (i32, i32) {
    %c0_i32 = arith.constant 0 : i32
    %c0_i32_0 = arith.constant 0 : i32
    %c0_i32_1 = arith.constant 0 : i32
    return %c0_i32, %c0_i32_0 : i32, i32
  }
  func.func @transform_27(%arg0: i32) -> (i32, i32) {
    %c0_i32 = arith.constant 0 : i32
    %c0_i32_0 = arith.constant 0 : i32
    %c0_i32_1 = arith.constant 0 : i32
    return %c0_i32, %c0_i32_0 : i32, i32
  }
  func.func @transform_28(%arg0: i32) -> (i32, i32) {
    %c0_i32 = arith.constant 0 : i32
    %c0_i32_0 = arith.constant 0 : i32
    %c0_i32_1 = arith.constant 0 : i32
    return %c0_i32, %c0_i32_0 : i32, i32
  }
  func.func @transform_29(%arg0: i32) -> (i32, i32) {
    %c0_i32 = arith.constant 0 : i32
    %c0_i32_0 = arith.constant 0 : i32
    %c0_i32_1 = arith.constant 0 : i32
    return %c0_i32, %c0_i32_0 : i32, i32
  }
  func.func @transform_30(%arg0: i32) -> (i32, i32) {
    %c0_i32 = arith.constant 0 : i32
    %c0_i32_0 = arith.constant 0 : i32
    %c0_i32_1 = arith.constant 0 : i32
    return %c0_i32, %c0_i32_0 : i32, i32
  }
  func.func @transform_31(%arg0: i32) -> (i32, i32) {
    %c0_i32 = arith.constant 0 : i32
    %c0_i32_0 = arith.constant 0 : i32
    %c0_i32_1 = arith.constant 0 : i32
    return %c0_i32, %c0_i32_0 : i32, i32
  }
  func.func @transform_32(%arg0: i32) -> (i32, i32) {
    %c0_i32 = arith.constant 0 : i32
    %c0_i32_0 = arith.constant 0 : i32
    %c0_i32_1 = arith.constant 0 : i32
    return %c0_i32, %c0_i32_0 : i32, i32
  }
  func.func @transform_33(%arg0: i32) -> (i32, i32) {
    %c0_i32 = arith.constant 0 : i32
    %c0_i32_0 = arith.constant 0 : i32
    %c0_i32_1 = arith.constant 0 : i32
    return %c0_i32, %c0_i32_0 : i32, i32
  }
  func.func @transform_34(%arg0: i32) -> (i32, i32) {
    %c0_i32 = arith.constant 0 : i32
    %c0_i32_0 = arith.constant 0 : i32
    %c0_i32_1 = arith.constant 0 : i32
    return %c0_i32, %c0_i32_0 : i32, i32
  }
  func.func @transform_35(%arg0: i32) -> (i32, i32) {
    %c0_i32 = arith.constant 0 : i32
    %c0_i32_0 = arith.constant 0 : i32
    %c0_i32_1 = arith.constant 0 : i32
    return %c0_i32, %c0_i32_0 : i32, i32
  }
  func.func @transform_36(%arg0: i32) -> (i32, i32) {
    %c0_i32 = arith.constant 0 : i32
    %c0_i32_0 = arith.constant 0 : i32
    %c0_i32_1 = arith.constant 0 : i32
    return %c0_i32, %c0_i32_0 : i32, i32
  }
  func.func @transform_37(%arg0: i32) -> (i32, i32) {
    %c0_i32 = arith.constant 0 : i32
    %c0_i32_0 = arith.constant 0 : i32
    %c0_i32_1 = arith.constant 0 : i32
    return %c0_i32, %c0_i32_0 : i32, i32
  }
  func.func @transform_38(%arg0: i32) -> (i32, i32) {
    %c0_i32 = arith.constant 0 : i32
    %c0_i32_0 = arith.constant 0 : i32
    %c0_i32_1 = arith.constant 0 : i32
    return %c0_i32, %c0_i32_0 : i32, i32
  }
  func.func @transform_39(%arg0: i32) -> (i32, i32) {
    %c0_i32 = arith.constant 0 : i32
    %c0_i32_0 = arith.constant 0 : i32
    %c0_i32_1 = arith.constant 0 : i32
    return %c0_i32, %c0_i32_0 : i32, i32
  }
  func.func @transform_40(%arg0: i32) -> (i32, i32) {
    %c0_i32 = arith.constant 0 : i32
    %c0_i32_0 = arith.constant 0 : i32
    %c0_i32_1 = arith.constant 0 : i32
    return %c0_i32, %c0_i32_0 : i32, i32
  }
  func.func @transform_41(%arg0: i32) -> (i32, i32) {
    %c0_i32 = arith.constant 0 : i32
    %c0_i32_0 = arith.constant 0 : i32
    %c0_i32_1 = arith.constant 0 : i32
    return %c0_i32, %c0_i32_0 : i32, i32
  }
  func.func @transform_42(%arg0: i32) -> (i32, i32) {
    %c0_i32 = arith.constant 0 : i32
    %c0_i32_0 = arith.constant 0 : i32
    %c0_i32_1 = arith.constant 0 : i32
    return %c0_i32, %c0_i32_0 : i32, i32
  }
  func.func @transform_43(%arg0: i32) -> (i32, i32, i32) {
    %c0_i32 = arith.constant 0 : i32
    %c0_i32_0 = arith.constant 0 : i32
    %c0_i32_1 = arith.constant 0 : i32
    return %arg0, %c0_i32, %c0_i32_0 : i32, i32, i32
  }
}

</mosaic_0001>

<llo_original>
// kernel: dual_tran_dec.2
$region0: #{dual_tran_dec.2}
  #allocation0 [shape = 'u32[]', space=smem, size = 0x4, offset = 0x4, fixed_abs, tag = 'smem constant byte address 0x4 - core index']
  #allocation1 [shape = 'u32[144,128]{1,0:T(1,128)}', space=vmem, size = 0x12000, scoped, tag = 'internal scratch']
  %s0 = inlined_call_operand.smem [shape: u32[44], index: -1, kind: input, shape index: {}]
  %s1 = sld [smem:[%s0]]
  %s2 = scalar_lea.smem %s0, 1
  %s3 = sld [smem:[%s2]]
  %s4 = scalar_lea.smem %s0, 2
  %s5 = sld [smem:[%s4]]
  %s6 = scalar_lea.smem %s0, 3
  %s7 = sld [smem:[%s6]]
  %s8 = scalar_lea.smem %s0, 4
  %s9 = sld [smem:[%s8]]
  %s10 = scalar_lea.smem %s0, 5
  %s11 = sld [smem:[%s10]]
  %s12 = scalar_lea.smem %s0, 6
  %s13 = sld [smem:[%s12]]
  %s14 = scalar_lea.smem %s0, 7
  %s15 = sld [smem:[%s14]]
  %s16 = scalar_lea.smem %s0, 8
  %s17 = sld [smem:[%s16]]
  %s18 = scalar_lea.smem %s0, 9
  %s19 = sld [smem:[%s18]]
  %s20 = scalar_lea.smem %s0, 10
  %s21 = sld [smem:[%s20]]
  %s22 = scalar_lea.smem %s0, 11
  %s23 = sld [smem:[%s22]]
  %s24 = scalar_lea.smem %s0, 12
  %s25 = sld [smem:[%s24]]
  %s26 = scalar_lea.smem %s0, 13
  %s27 = sld [smem:[%s26]]
  %s28 = scalar_lea.smem %s0, 14
  %s29 = sld [smem:[%s28]]
  %s30 = scalar_lea.smem %s0, 15
  %s31 = sld [smem:[%s30]]
  %s32 = scalar_lea.smem %s0, 16
  %s33 = sld [smem:[%s32]]
  %s34 = scalar_lea.smem %s0, 17
  %s35 = sld [smem:[%s34]]
  %s36 = scalar_lea.smem %s0, 18
  %s37 = sld [smem:[%s36]]
  %s38 = scalar_lea.smem %s0, 19
  %s39 = sld [smem:[%s38]]
  %s40 = scalar_lea.smem %s0, 20
  %s41 = sld [smem:[%s40]]
  %s42 = scalar_lea.smem %s0, 21
  %s43 = sld [smem:[%s42]]
  %s44 = scalar_lea.smem %s0, 22
  %s45 = sld [smem:[%s44]]
  %s46 = scalar_lea.smem %s0, 23
  %s47 = sld [smem:[%s46]]
  %s48 = scalar_lea.smem %s0, 24
  %s49 = sld [smem:[%s48]]
  %s50 = scalar_lea.smem %s0, 25
  %s51 = sld [smem:[%s50]]
  %s52 = scalar_lea.smem %s0, 26
  %s53 = sld [smem:[%s52]]
  %s54 = scalar_lea.smem %s0, 27
  %s55 = sld [smem:[%s54]]
  %s56 = scalar_lea.smem %s0, 28
  %s57 = sld [smem:[%s56]]
  %s58 = scalar_lea.smem %s0, 29
  %s59 = sld [smem:[%s58]]
  %s60 = scalar_lea.smem %s0, 30
  %s61 = sld [smem:[%s60]]
  %s62 = scalar_lea.smem %s0, 31
  %s63 = sld [smem:[%s62]]
  %s64 = scalar_lea.smem %s0, 32
  %s65 = sld [smem:[%s64]]
  %s66 = scalar_lea.smem %s0, 33
  %s67 = sld [smem:[%s66]]
  %s68 = scalar_lea.smem %s0, 34
  %s69 = sld [smem:[%s68]]
  %s70 = scalar_lea.smem %s0, 35
  %s71 = sld [smem:[%s70]]
  %s72 = scalar_lea.smem %s0, 36
  %s73 = sld [smem:[%s72]]
  %s74 = scalar_lea.smem %s0, 37
  %s75 = sld [smem:[%s74]]
  %s76 = scalar_lea.smem %s0, 38
  %s77 = sld [smem:[%s76]]
  %s78 = scalar_lea.smem %s0, 39
  %s79 = sld [smem:[%s78]]
  %s80 = scalar_lea.smem %s0, 40
  %s81 = sld [smem:[%s80]]
  %s82 = scalar_lea.smem %s0, 41
  %s83 = sld [smem:[%s82]]
  %s84 = scalar_lea.smem %s0, 42
  %s85 = sld [smem:[%s84]]
  %s86 = scalar_lea.smem %s0, 43
  %s87 = sld [smem:[%s86]]
  %s88 = sld [smem:[#allocation0]]
  $region182: #{dual_tran_dec.2} parent=0
    _
  %s90 = ssub.s32 1, %s88
  %s91 = scalar_select 0, %s90, %s88
  // Predicated region
  $region2: #{dual_tran_dec.2} parent=0 // pred_check
    _
  $region3: #{dual_tran_dec.2} parent=0 // pred_check_branch
    %93 = sbr.rel (0) target = $region5
  $region4: #{dual_tran_dec.2} parent=0 // pred_region
    _
  $region5: #{dual_tran_dec.2} parent=0 // pred_fallthru
    _
  // Predicated region
  $region6: #{dual_tran_dec.2} parent=0 // pred_check
    _
  $region7: #{dual_tran_dec.2} parent=0 // pred_check_branch
    %95 = sbr.rel (0) target = $region9
  $region8: #{dual_tran_dec.2} parent=0 // pred_region
    _
  $region9: #{dual_tran_dec.2} parent=0 // pred_fallthru
    _
  // Predicated region
  $region10: #{dual_tran_dec.2} parent=0 // pred_check
    _
  $region11: #{dual_tran_dec.2} parent=0 // pred_check_branch
    %97 = sbr.rel (0) target = $region13
  $region12: #{dual_tran_dec.2} parent=0 // pred_region
    _
  $region13: #{dual_tran_dec.2} parent=0 // pred_fallthru
    _
  // Predicated region
  $region14: #{dual_tran_dec.2} parent=0 // pred_check
    _
  $region15: #{dual_tran_dec.2} parent=0 // pred_check_branch
    %99 = sbr.rel (0) target = $region17
  $region16: #{dual_tran_dec.2} parent=0 // pred_region
    _
  $region17: #{dual_tran_dec.2} parent=0 // pred_fallthru
    _
  // Predicated region
  $region18: #{dual_tran_dec.2} parent=0 // pred_check
    _
  $region19: #{dual_tran_dec.2} parent=0 // pred_check_branch
    %101 = sbr.rel (0) target = $region21
  $region20: #{dual_tran_dec.2} parent=0 // pred_region
    _
  $region21: #{dual_tran_dec.2} parent=0 // pred_fallthru
    _
  // Predicated region
  $region22: #{dual_tran_dec.2} parent=0 // pred_check
    _
  $region23: #{dual_tran_dec.2} parent=0 // pred_check_branch
    %103 = sbr.rel (0) target = $region25
  $region24: #{dual_tran_dec.2} parent=0 // pred_region
    _
  $region25: #{dual_tran_dec.2} parent=0 // pred_fallthru
    _
  // Predicated region
  $region26: #{dual_tran_dec.2} parent=0 // pred_check
    _
  $region27: #{dual_tran_dec.2} parent=0 // pred_check_branch
    %105 = sbr.rel (0) target = $region29
  $region28: #{dual_tran_dec.2} parent=0 // pred_region
    _
  $region29: #{dual_tran_dec.2} parent=0 // pred_fallthru
    _
  // Predicated region
  $region30: #{dual_tran_dec.2} parent=0 // pred_check
    _
  $region31: #{dual_tran_dec.2} parent=0 // pred_check_branch
    %107 = sbr.rel (0) target = $region33
  $region32: #{dual_tran_dec.2} parent=0 // pred_region
    _
  $region33: #{dual_tran_dec.2} parent=0 // pred_fallthru
    _
  // Predicated region
  $region34: #{dual_tran_dec.2} parent=0 // pred_check
    _
  $region35: #{dual_tran_dec.2} parent=0 // pred_check_branch
    %109 = sbr.rel (0) target = $region37
  $region36: #{dual_tran_dec.2} parent=0 // pred_region
    _
  $region37: #{dual_tran_dec.2} parent=0 // pred_fallthru
    _
  // Predicated region
  $region38: #{dual_tran_dec.2} parent=0 // pred_check
    _
  $region39: #{dual_tran_dec.2} parent=0 // pred_check_branch
    %111 = sbr.rel (0) target = $region41
  $region40: #{dual_tran_dec.2} parent=0 // pred_region
    _
  $region41: #{dual_tran_dec.2} parent=0 // pred_fallthru
    _
  // Predicated region
  $region42: #{dual_tran_dec.2} parent=0 // pred_check
    _
  $region43: #{dual_tran_dec.2} parent=0 // pred_check_branch
    %113 = sbr.rel (0) target = $region45
  $region44: #{dual_tran_dec.2} parent=0 // pred_region
    _
  $region45: #{dual_tran_dec.2} parent=0 // pred_fallthru
    _
  // Predicated region
  $region46: #{dual_tran_dec.2} parent=0 // pred_check
    _
  $region47: #{dual_tran_dec.2} parent=0 // pred_check_branch
    %115 = sbr.rel (0) target = $region49
  $region48: #{dual_tran_dec.2} parent=0 // pred_region
    _
  $region49: #{dual_tran_dec.2} parent=0 // pred_fallthru
    _
  // Predicated region
  $region50: #{dual_tran_dec.2} parent=0 // pred_check
    _
  $region51: #{dual_tran_dec.2} parent=0 // pred_check_branch
    %117 = sbr.rel (0) target = $region53
  $region52: #{dual_tran_dec.2} parent=0 // pred_region
    _
  $region53: #{dual_tran_dec.2} parent=0 // pred_fallthru
    _
  // Predicated region
  $region54: #{dual_tran_dec.2} parent=0 // pred_check
    _
  $region55: #{dual_tran_dec.2} parent=0 // pred_check_branch
    %119 = sbr.rel (0) target = $region57
  $region56: #{dual_tran_dec.2} parent=0 // pred_region
    _
  $region57: #{dual_tran_dec.2} parent=0 // pred_fallthru
    _
  // Predicated region
  $region58: #{dual_tran_dec.2} parent=0 // pred_check
    _
  $region59: #{dual_tran_dec.2} parent=0 // pred_check_branch
    %121 = sbr.rel (0) target = $region61
  $region60: #{dual_tran_dec.2} parent=0 // pred_region
    _
  $region61: #{dual_tran_dec.2} parent=0 // pred_fallthru
    _
  // Predicated region
  $region62: #{dual_tran_dec.2} parent=0 // pred_check
    _
  $region63: #{dual_tran_dec.2} parent=0 // pred_check_branch
    %123 = sbr.rel (0) target = $region65
  $region64: #{dual_tran_dec.2} parent=0 // pred_region
    _
  $region65: #{dual_tran_dec.2} parent=0 // pred_fallthru
    _
  // Predicated region
  $region66: #{dual_tran_dec.2} parent=0 // pred_check
    _
  $region67: #{dual_tran_dec.2} parent=0 // pred_check_branch
    %125 = sbr.rel (0) target = $region69
  $region68: #{dual_tran_dec.2} parent=0 // pred_region
    _
  $region69: #{dual_tran_dec.2} parent=0 // pred_fallthru
    _
  // Predicated region
  $region70: #{dual_tran_dec.2} parent=0 // pred_check
    _
  $region71: #{dual_tran_dec.2} parent=0 // pred_check_branch
    %127 = sbr.rel (0) target = $region73
  $region72: #{dual_tran_dec.2} parent=0 // pred_region
    _
  $region73: #{dual_tran_dec.2} parent=0 // pred_fallthru
    _
  // Predicated region
  $region74: #{dual_tran_dec.2} parent=0 // pred_check
    _
  $region75: #{dual_tran_dec.2} parent=0 // pred_check_branch
    %129 = sbr.rel (0) target = $region77
  $region76: #{dual_tran_dec.2} parent=0 // pred_region
    _
  $region77: #{dual_tran_dec.2} parent=0 // pred_fallthru
    _
  // Predicated region
  $region78: #{dual_tran_dec.2} parent=0 // pred_check
    _
  $region79: #{dual_tran_dec.2} parent=0 // pred_check_branch
    %131 = sbr.rel (0) target = $region81
  $region80: #{dual_tran_dec.2} parent=0 // pred_region
    _
  $region81: #{dual_tran_dec.2} parent=0 // pred_fallthru
    _
  // Predicated region
  $region82: #{dual_tran_dec.2} parent=0 // pred_check
    _
  $region83: #{dual_tran_dec.2} parent=0 // pred_check_branch
    %133 = sbr.rel (0) target = $region85
  $region84: #{dual_tran_dec.2} parent=0 // pred_region
    _
  $region85: #{dual_tran_dec.2} parent=0 // pred_fallthru
    _
  // Predicated region
  $region86: #{dual_tran_dec.2} parent=0 // pred_check
    _
  $region87: #{dual_tran_dec.2} parent=0 // pred_check_branch
    %135 = sbr.rel (0) target = $region89
  $region88: #{dual_tran_dec.2} parent=0 // pred_region
    _
  $region89: #{dual_tran_dec.2} parent=0 // pred_fallthru
    _
  // Predicated region
  $region90: #{dual_tran_dec.2} parent=0 // pred_check
    _
  $region91: #{dual_tran_dec.2} parent=0 // pred_check_branch
    %137 = sbr.rel (0) target = $region93
  $region92: #{dual_tran_dec.2} parent=0 // pred_region
    _
  $region93: #{dual_tran_dec.2} parent=0 // pred_fallthru
    _
  // Predicated region
  $region94: #{dual_tran_dec.2} parent=0 // pred_check
    _
  $region95: #{dual_tran_dec.2} parent=0 // pred_check_branch
    %139 = sbr.rel (0) target = $region97
  $region96: #{dual_tran_dec.2} parent=0 // pred_region
    _
  $region97: #{dual_tran_dec.2} parent=0 // pred_fallthru
    _
  // Predicated region
  $region98: #{dual_tran_dec.2} parent=0 // pred_check
    _
  $region99: #{dual_tran_dec.2} parent=0 // pred_check_branch
    %141 = sbr.rel (0) target = $region101
  $region100: #{dual_tran_dec.2} parent=0 // pred_region
    _
  $region101: #{dual_tran_dec.2} parent=0 // pred_fallthru
    _
  // Predicated region
  $region102: #{dual_tran_dec.2} parent=0 // pred_check
    _
  $region103: #{dual_tran_dec.2} parent=0 // pred_check_branch
    %143 = sbr.rel (0) target = $region105
  $region104: #{dual_tran_dec.2} parent=0 // pred_region
    _
  $region105: #{dual_tran_dec.2} parent=0 // pred_fallthru
    _
  // Predicated region
  $region106: #{dual_tran_dec.2} parent=0 // pred_check
    _
  $region107: #{dual_tran_dec.2} parent=0 // pred_check_branch
    %145 = sbr.rel (0) target = $region109
  $region108: #{dual_tran_dec.2} parent=0 // pred_region
    _
  $region109: #{dual_tran_dec.2} parent=0 // pred_fallthru
    _
  // Predicated region
  $region110: #{dual_tran_dec.2} parent=0 // pred_check
    _
  $region111: #{dual_tran_dec.2} parent=0 // pred_check_branch
    %147 = sbr.rel (0) target = $region113
  $region112: #{dual_tran_dec.2} parent=0 // pred_region
    _
  $region113: #{dual_tran_dec.2} parent=0 // pred_fallthru
    _
  // Predicated region
  $region114: #{dual_tran_dec.2} parent=0 // pred_check
    _
  $region115: #{dual_tran_dec.2} parent=0 // pred_check_branch
    %149 = sbr.rel (0) target = $region117
  $region116: #{dual_tran_dec.2} parent=0 // pred_region
    _
  $region117: #{dual_tran_dec.2} parent=0 // pred_fallthru
    _
  // Predicated region
  $region118: #{dual_tran_dec.2} parent=0 // pred_check
    _
  $region119: #{dual_tran_dec.2} parent=0 // pred_check_branch
    %151 = sbr.rel (0) target = $region121
  $region120: #{dual_tran_dec.2} parent=0 // pred_region
    _
  $region121: #{dual_tran_dec.2} parent=0 // pred_fallthru
    _
  // Predicated region
  $region122: #{dual_tran_dec.2} parent=0 // pred_check
    _
  $region123: #{dual_tran_dec.2} parent=0 // pred_check_branch
    %153 = sbr.rel (0) target = $region125
  $region124: #{dual_tran_dec.2} parent=0 // pred_region
    _
  $region125: #{dual_tran_dec.2} parent=0 // pred_fallthru
    _
  // Predicated region
  $region126: #{dual_tran_dec.2} parent=0 // pred_check
    _
  $region127: #{dual_tran_dec.2} parent=0 // pred_check_branch
    %155 = sbr.rel (0) target = $region129
  $region128: #{dual_tran_dec.2} parent=0 // pred_region
    _
  $region129: #{dual_tran_dec.2} parent=0 // pred_fallthru
    _
  // Predicated region
  $region130: #{dual_tran_dec.2} parent=0 // pred_check
    _
  $region131: #{dual_tran_dec.2} parent=0 // pred_check_branch
    %157 = sbr.rel (0) target = $region133
  $region132: #{dual_tran_dec.2} parent=0 // pred_region
    _
  $region133: #{dual_tran_dec.2} parent=0 // pred_fallthru
    _
  // Predicated region
  $region134: #{dual_tran_dec.2} parent=0 // pred_check
    _
  $region135: #{dual_tran_dec.2} parent=0 // pred_check_branch
    %159 = sbr.rel (0) target = $region137
  $region136: #{dual_tran_dec.2} parent=0 // pred_region
    _
  $region137: #{dual_tran_dec.2} parent=0 // pred_fallthru
    _
  // Predicated region
  $region138: #{dual_tran_dec.2} parent=0 // pred_check
    _
  $region139: #{dual_tran_dec.2} parent=0 // pred_check_branch
    %161 = sbr.rel (0) target = $region141
  $region140: #{dual_tran_dec.2} parent=0 // pred_region
    _
  $region141: #{dual_tran_dec.2} parent=0 // pred_fallthru
    _
  // Predicated region
  $region142: #{dual_tran_dec.2} parent=0 // pred_check
    _
  $region143: #{dual_tran_dec.2} parent=0 // pred_check_branch
    %163 = sbr.rel (0) target = $region145
  $region144: #{dual_tran_dec.2} parent=0 // pred_region
    _
  $region145: #{dual_tran_dec.2} parent=0 // pred_fallthru
    _
  // Predicated region
  $region146: #{dual_tran_dec.2} parent=0 // pred_check
    _
  $region147: #{dual_tran_dec.2} parent=0 // pred_check_branch
    %165 = sbr.rel (0) target = $region149
  $region148: #{dual_tran_dec.2} parent=0 // pred_region
    _
  $region149: #{dual_tran_dec.2} parent=0 // pred_fallthru
    _
  // Predicated region
  $region150: #{dual_tran_dec.2} parent=0 // pred_check
    _
  $region151: #{dual_tran_dec.2} parent=0 // pred_check_branch
    %167 = sbr.rel (0) target = $region153
  $region152: #{dual_tran_dec.2} parent=0 // pred_region
    _
  $region153: #{dual_tran_dec.2} parent=0 // pred_fallthru
    _
  // Predicated region
  $region154: #{dual_tran_dec.2} parent=0 // pred_check
    _
  $region155: #{dual_tran_dec.2} parent=0 // pred_check_branch
    %169 = sbr.rel (0) target = $region157
  $region156: #{dual_tran_dec.2} parent=0 // pred_region
    _
  $region157: #{dual_tran_dec.2} parent=0 // pred_fallthru
    _
  // Predicated region
  $region158: #{dual_tran_dec.2} parent=0 // pred_check
    _
  $region159: #{dual_tran_dec.2} parent=0 // pred_check_branch
    %171 = sbr.rel (0) target = $region161
  $region160: #{dual_tran_dec.2} parent=0 // pred_region
    _
  $region161: #{dual_tran_dec.2} parent=0 // pred_fallthru
    _
  // Predicated region
  $region162: #{dual_tran_dec.2} parent=0 // pred_check
    _
  $region163: #{dual_tran_dec.2} parent=0 // pred_check_branch
    %173 = sbr.rel (0) target = $region165
  $region164: #{dual_tran_dec.2} parent=0 // pred_region
    _
  $region165: #{dual_tran_dec.2} parent=0 // pred_fallthru
    _
  // Predicated region
  $region166: #{dual_tran_dec.2} parent=0 // pred_check
    _
  $region167: #{dual_tran_dec.2} parent=0 // pred_check_branch
    %175 = sbr.rel (0) target = $region169
  $region168: #{dual_tran_dec.2} parent=0 // pred_region
    _
  $region169: #{dual_tran_dec.2} parent=0 // pred_fallthru
    _
  // Predicated region
  $region170: #{dual_tran_dec.2} parent=0 // pred_check
    _
  $region171: #{dual_tran_dec.2} parent=0 // pred_check_branch
    %177 = sbr.rel (0) target = $region173
  $region172: #{dual_tran_dec.2} parent=0 // pred_region
    _
  $region173: #{dual_tran_dec.2} parent=0 // pred_fallthru
    _
  %v179 = vld [vmem:[%s1] sm:$0xff]
  %v180 = vld [vmem:[%s1 + $0x8] sm:$0xff]
  %v181 = vld [vmem:[%s3] sm:$0xff]
  %v182 = vld [vmem:[%s3 + $0x8] sm:$0xff]
  %v183 = vld [vmem:[%s5] sm:$0xff]
  %v184 = vld [vmem:[%s5 + $0x8] sm:$0xff]
  %v185 = vld [vmem:[%s7] sm:$0xff]
  %v186 = vld [vmem:[%s7 + $0x8] sm:$0xff]
  %v187 = vld [vmem:[%s9] sm:$0x1]
  %v188 = vld [vmem:[%s9 + $0x1] sm:$0x1]
  %v189 = vld [vmem:[%s11] sm:$0x1]
  %v190 = vld [vmem:[%s11 + $0x1] sm:$0x1]
  %v191 = vld [vmem:[%s13] sm:$0x1]
  %v192 = vld [vmem:[%s13 + $0x1] sm:$0x1]
  %v193 = vpack.c.bf16 %v180, %v179
  %v194 = vld [vmem:[%s15] sm:$0xf]
  %v195 = vld [vmem:[%s15 + $0x4] sm:$0xf]
  %v196 = vld [vmem:[%s15 + $0x8] sm:$0xf]
  %v197 = vld [vmem:[%s15 + $0xc] sm:$0xf]
  %v198 = vld [vmem:[%s17] sm:$0x1]
  %v200 = vlaneseq
  %v201 = vshrl.u32 %v200, 7
  %v202 = vsub.s32 0, %v201
  %v203 = vrot.slane %v198, %v202
  %v209 = vunpack.c.l.b16 %v194
  %v210 = vunpack.c.l.b16 %v195
  %v211 = vunpack.c.l.b16 %v196
  %v212 = vunpack.c.l.b16 %v197
  %v213 = vpack.c.b16 %v210, %v209
  %v214 = vpack.c.b16 %v212, %v211
  %vm217 = vcmask 261120
  %v219 = vsel %vm217, %v193, 0
  %221 = vmatprep.subr.bf16.mxu0 0
  %222 = vmatpush1.bf16.msra.mxu0 0
  %223 = vmatprep.subr.bf16.mxu0 0
  %224 = vmatpush1.bf16.msra.mxu0 0
  %225 = vmatprep.subr.bf16.mxu0 0
  %226 = vmatpush1.bf16.msra.mxu0 0
  %227 = vmatprep.subr.bf16.mxu0 0
  %228 = vmatpush1.bf16.msra.mxu0 0
  %229 = vmatprep.subr.bf16.mxu0 0
  %230 = vmatpush1.bf16.msra.mxu0 0
  %231 = vmatprep.subr.bf16.mxu0 0
  %232 = vmatpush1.bf16.msra.mxu0 0
  %233 = vmatprep.subr.bf16.mxu0 0
  %234 = vmatpush1.bf16.msra.mxu0 %v214
  %235 = vmatprep.subr.bf16.mxu0 0
  %236 = vmatpush1.bf16.msra.mxu0 %v213
  %237 = vmatprep.subr.bf16.mxu0 0
  %238 = vmatpush2.bf16.msra.mxu0 0
  %239 = vmatprep.subr.bf16.mxu0 0
  %240 = vmatpush2.bf16.msra.mxu0 0
  %241 = vmatprep.subr.bf16.mxu0 0
  %242 = vmatpush2.bf16.msra.mxu0 0
  %243 = vmatprep.subr.bf16.mxu0 0
  %244 = vmatpush2.bf16.msra.mxu0 0
  %245 = vmatprep.subr.bf16.mxu0 0
  %246 = vmatpush2.bf16.msra.mxu0 0
  %247 = vmatprep.subr.bf16.mxu0 0
  %248 = vmatpush2.bf16.msra.mxu0 0
  %249 = vmatprep.subr.bf16.mxu0 0
  %250 = vmatpush2.bf16.msra.mxu0 0
  %251 = vmatprep.subr.bf16.mxu0 0
  %252 = vmatpush2.bf16.msra.mxu0 0
  %253 = vmatprep.mubr.bf16.mxu0 0
  %254 = vmatmul.mubr.bf16.gmra.mxu0 %v219
  %v255 = vpop.f32.mrf.mxu0
  %v256 = vadd.f32 %v203, %v255
  %v257 = vpop.f32.mrf.mxu0
  %v258 = vpop.f32.mrf.mxu0
  %v259 = vadd.f32 %v203, %v258
  %v260 = vpop.f32.mrf.mxu0
  %261 = vdwg.mxu0
  %v262 = vld [vmem:[%s19] sm:$0xf]
  %v263 = vld [vmem:[%s19 + $0x4] sm:$0xf]
  %v264 = vld [vmem:[%s19 + $0x8] sm:$0xf]
  %v265 = vld [vmem:[%s19 + $0xc] sm:$0xf]
  %v266 = vld [vmem:[%s21] sm:$0x1]
  %v268 = vlaneseq
  %v269 = vshrl.u32 %v268, 7
  %v270 = vsub.s32 0, %v269
  %v271 = vrot.slane %v266, %v270
  %v277 = vunpack.c.l.b16 %v262
  %v278 = vunpack.c.l.b16 %v263
  %v279 = vunpack.c.l.b16 %v264
  %v280 = vunpack.c.l.b16 %v265
  %v281 = vpack.c.b16 %v278, %v277
  %v282 = vpack.c.b16 %v280, %v279
  %285 = vmatprep.subr.bf16.mxu0 0
  %286 = vmatpush1.bf16.msra.mxu0 0
  %287 = vmatprep.subr.bf16.mxu0 0
  %288 = vmatpush1.bf16.msra.mxu0 0
  %289 = vmatprep.subr.bf16.mxu0 0
  %290 = vmatpush1.bf16.msra.mxu0 0
  %291 = vmatprep.subr.bf16.mxu0 0
  %292 = vmatpush1.bf16.msra.mxu0 0
  %293 = vmatprep.subr.bf16.mxu0 0
  %294 = vmatpush1.bf16.msra.mxu0 0
  %295 = vmatprep.subr.bf16.mxu0 0
  %296 = vmatpush1.bf16.msra.mxu0 0
  %297 = vmatprep.subr.bf16.mxu0 0
  %298 = vmatpush1.bf16.msra.mxu0 %v282
  %299 = vmatprep.subr.bf16.mxu0 0
  %300 = vmatpush1.bf16.msra.mxu0 %v281
  %301 = vmatprep.subr.bf16.mxu0 0
  %302 = vmatpush2.bf16.msra.mxu0 0
  %303 = vmatprep.subr.bf16.mxu0 0
  %304 = vmatpush2.bf16.msra.mxu0 0
  %305 = vmatprep.subr.bf16.mxu0 0
  %306 = vmatpush2.bf16.msra.mxu0 0
  %307 = vmatprep.subr.bf16.mxu0 0
  %308 = vmatpush2.bf16.msra.mxu0 0
  %309 = vmatprep.subr.bf16.mxu0 0
  %310 = vmatpush2.bf16.msra.mxu0 0
  %311 = vmatprep.subr.bf16.mxu0 0
  %312 = vmatpush2.bf16.msra.mxu0 0
  %313 = vmatprep.subr.bf16.mxu0 0
  %314 = vmatpush2.bf16.msra.mxu0 0
  %315 = vmatprep.subr.bf16.mxu0 0
  %316 = vmatpush2.bf16.msra.mxu0 0
  %317 = vmatprep.mubr.bf16.mxu0 0
  %318 = vmatmul.mubr.bf16.gmra.mxu0 %v219
  %v319 = vpop.f32.mrf.mxu0
  %v320 = vadd.f32 %v271, %v319
  %v321 = vpop.f32.mrf.mxu0
  %v322 = vpop.f32.mrf.mxu0
  %v323 = vadd.f32 %v271, %v322
  %v324 = vpop.f32.mrf.mxu0
  %325 = vdwg.mxu0
  %v326 = vld [vmem:[%s23] sm:$0xf]
  %v327 = vld [vmem:[%s23 + $0x4] sm:$0xf]
  %v328 = vld [vmem:[%s23 + $0x8] sm:$0xf]
  %v329 = vld [vmem:[%s23 + $0xc] sm:$0xf]
  %v330 = vld [vmem:[%s25] sm:$0x1]
  %v332 = vlaneseq
  %v333 = vshrl.u32 %v332, 7
  %v334 = vsub.s32 0, %v333
  %v335 = vrot.slane %v330, %v334
  %v341 = vunpack.c.l.b16 %v326
  %v342 = vunpack.c.l.b16 %v327
  %v343 = vunpack.c.l.b16 %v328
  %v344 = vunpack.c.l.b16 %v329
  %v345 = vpack.c.b16 %v342, %v341
  %v346 = vpack.c.b16 %v344, %v343
  %349 = vmatprep.subr.bf16.mxu0 0
  %350 = vmatpush1.bf16.msra.mxu0 0
  %351 = vmatprep.subr.bf16.mxu0 0
  %352 = vmatpush1.bf16.msra.mxu0 0
  %353 = vmatprep.subr.bf16.mxu0 0
  %354 = vmatpush1.bf16.msra.mxu0 0
  %355 = vmatprep.subr.bf16.mxu0 0
  %356 = vmatpush1.bf16.msra.mxu0 0
  %357 = vmatprep.subr.bf16.mxu0 0
  %358 = vmatpush1.bf16.msra.mxu0 0
  %359 = vmatprep.subr.bf16.mxu0 0
  %360 = vmatpush1.bf16.msra.mxu0 0
  %361 = vmatprep.subr.bf16.mxu0 0
  %362 = vmatpush1.bf16.msra.mxu0 %v346
  %363 = vmatprep.subr.bf16.mxu0 0
  %364 = vmatpush1.bf16.msra.mxu0 %v345
  %365 = vmatprep.subr.bf16.mxu0 0
  %366 = vmatpush2.bf16.msra.mxu0 0
  %367 = vmatprep.subr.bf16.mxu0 0
  %368 = vmatpush2.bf16.msra.mxu0 0
  %369 = vmatprep.subr.bf16.mxu0 0
  %370 = vmatpush2.bf16.msra.mxu0 0
  %371 = vmatprep.subr.bf16.mxu0 0
  %372 = vmatpush2.bf16.msra.mxu0 0
  %373 = vmatprep.subr.bf16.mxu0 0
  %374 = vmatpush2.bf16.msra.mxu0 0
  %375 = vmatprep.subr.bf16.mxu0 0
  %376 = vmatpush2.bf16.msra.mxu0 0
  %377 = vmatprep.subr.bf16.mxu0 0
  %378 = vmatpush2.bf16.msra.mxu0 0
  %379 = vmatprep.subr.bf16.mxu0 0
  %380 = vmatpush2.bf16.msra.mxu0 0
  %381 = vmatprep.mubr.bf16.mxu0 0
  %382 = vmatmul.mubr.bf16.gmra.mxu0 %v219
  %v383 = vpop.f32.mrf.mxu0
  %v384 = vadd.f32 %v335, %v383
  %v385 = vpop.f32.mrf.mxu0
  %v386 = vpop.f32.mrf.mxu0
  %v387 = vadd.f32 %v335, %v386
  %v388 = vpop.f32.mrf.mxu0
  %389 = vdwg.mxu0
  %v390 = vpack.c.bf16 %v256, %v256
  %v391 = vpack.c.bf16 %v259, %v259
  %v392 = vpack.c.bf16 %v320, %v320
  %v393 = vpack.c.bf16 %v323, %v323
  %v394 = vpack.c.bf16 %v384, %v384
  %v395 = vpack.c.bf16 %v387, %v387
  %v396 = vlaneseq
  %v397 = vshrl.u32 %v396, 7
  %v398 = vlaneseq
  %v399 = vand.u32 %v398, 127
  %vm400 = vcmp.gt.s32.totalorder %v399, %v397
  %v401 = vsel %vm400, -inf, 0.0
  %v404 = vlaneseq
  %v405 = vshrl.u32 %v404, 7
  %v406 = vsub.s32 0, %v405
  %v407 = vrot.slane %v187, %v406
  %v408 = vlaneseq
  %v409 = vshrl.u32 %v408, 7
  %v410 = vsub.s32 0, %v409
  %v411 = vrot.slane %v188, %v410
  %vm414 = vcmask 64512
  %v416 = vsel %vm414, %v390, 0
  %v419 = vsel %vm414, %v392, 0
  %421 = vmatprep.subr.bf16.mxu0 0
  %422 = vmatpush1.bf16.xpose.msra.mxu0 0
  %423 = vmatprep.subr.bf16.mxu0 0
  %424 = vmatpush1.bf16.xpose.msra.mxu0 0
  %425 = vmatprep.subr.bf16.mxu0 0
  %426 = vmatpush1.bf16.xpose.msra.mxu0 0
  %427 = vmatprep.subr.bf16.mxu0 0
  %428 = vmatpush1.bf16.xpose.msra.mxu0 0
  %429 = vmatprep.subr.bf16.mxu0 0
  %430 = vmatpush1.bf16.xpose.msra.mxu0 0
  %431 = vmatprep.subr.bf16.mxu0 0
  %432 = vmatpush1.bf16.xpose.msra.mxu0 0
  %433 = vmatprep.subr.bf16.mxu0 0
  %434 = vmatpush1.bf16.xpose.msra.mxu0 0
  %435 = vmatprep.subr.bf16.mxu0 0
  %436 = vmatpush1.bf16.xpose.msra.mxu0 %v419
  %437 = vmatprep.subr.bf16.mxu0 0
  %438 = vmatpush2.bf16.xpose.msra.mxu0 0
  %439 = vmatprep.subr.bf16.mxu0 0
  %440 = vmatpush2.bf16.xpose.msra.mxu0 0
  %441 = vmatprep.subr.bf16.mxu0 0
  %442 = vmatpush2.bf16.xpose.msra.mxu0 0
  %443 = vmatprep.subr.bf16.mxu0 0
  %444 = vmatpush2.bf16.xpose.msra.mxu0 0
  %445 = vmatprep.subr.bf16.mxu0 0
  %446 = vmatpush2.bf16.xpose.msra.mxu0 0
  %447 = vmatprep.subr.bf16.mxu0 0
  %448 = vmatpush2.bf16.xpose.msra.mxu0 0
  %449 = vmatprep.subr.bf16.mxu0 0
  %450 = vmatpush2.bf16.xpose.msra.mxu0 0
  %451 = vmatprep.subr.bf16.mxu0 0
  %452 = vmatpush2.bf16.xpose.msra.mxu0 0
  %453 = vmatprep.mubr.bf16.mxu0 0
  %454 = vmatmul.mubr.bf16.gmra.mxu0 %v416
  %v455 = vpop.f32.mrf.mxu0
  %v456 = vadd.f32 %v407, %v455
  %v457 = vpop.f32.mrf.mxu0
  %v458 = vpop.f32.mrf.mxu0
  %v459 = vpop.f32.mrf.mxu0
  %460 = vdwg.mxu0
  %v462 = vsel %vm414, %v391, 0
  %v465 = vsel %vm414, %v393, 0
  %467 = vmatprep.subr.bf16.mxu0 0
  %468 = vmatpush1.bf16.xpose.msra.mxu0 0
  %469 = vmatprep.subr.bf16.mxu0 0
  %470 = vmatpush1.bf16.xpose.msra.mxu0 0
  %471 = vmatprep.subr.bf16.mxu0 0
  %472 = vmatpush1.bf16.xpose.msra.mxu0 0
  %473 = vmatprep.subr.bf16.mxu0 0
  %474 = vmatpush1.bf16.xpose.msra.mxu0 0
  %475 = vmatprep.subr.bf16.mxu0 0
  %476 = vmatpush1.bf16.xpose.msra.mxu0 0
  %477 = vmatprep.subr.bf16.mxu0 0
  %478 = vmatpush1.bf16.xpose.msra.mxu0 0
  %479 = vmatprep.subr.bf16.mxu0 0
  %480 = vmatpush1.bf16.xpose.msra.mxu0 0
  %481 = vmatprep.subr.bf16.mxu0 0
  %482 = vmatpush1.bf16.xpose.msra.mxu0 %v465
  %483 = vmatprep.subr.bf16.mxu0 0
  %484 = vmatpush2.bf16.xpose.msra.mxu0 0
  %485 = vmatprep.subr.bf16.mxu0 0
  %486 = vmatpush2.bf16.xpose.msra.mxu0 0
  %487 = vmatprep.subr.bf16.mxu0 0
  %488 = vmatpush2.bf16.xpose.msra.mxu0 0
  %489 = vmatprep.subr.bf16.mxu0 0
  %490 = vmatpush2.bf16.xpose.msra.mxu0 0
  %491 = vmatprep.subr.bf16.mxu0 0
  %492 = vmatpush2.bf16.xpose.msra.mxu0 0
  %493 = vmatprep.subr.bf16.mxu0 0
  %494 = vmatpush2.bf16.xpose.msra.mxu0 0
  %495 = vmatprep.subr.bf16.mxu0 0
  %496 = vmatpush2.bf16.xpose.msra.mxu0 0
  %497 = vmatprep.subr.bf16.mxu0 0
  %498 = vmatpush2.bf16.xpose.msra.mxu0 0
  %499 = vmatprep.mubr.bf16.mxu0 0
  %500 = vmatmul.mubr.bf16.gmra.mxu0 %v462
  %v501 = vpop.f32.mrf.mxu0
  %v502 = vadd.f32 %v411, %v501
  %v503 = vpop.f32.mrf.mxu0
  %v504 = vpop.f32.mrf.mxu0
  %v505 = vpop.f32.mrf.mxu0
  %506 = vdwg.mxu0
  %v507 = vadd.f32 %v456, %v401
  %v508 = vadd.f32 %v502, %v401
  %v509 = vsel %vm414, %v507, -inf
  %510 = vmax.xlane.f32.xlu0 %v509
  %v511 = vpop.xlane.xlu0 %510
  %v512 = vsel %vm414, %v508, -inf
  %513 = vmax.xlane.f32.xlu0 %v512
  %v514 = vpop.xlane.xlu0 %513
  %v515 = vmax.f32 %v511, -1e+30
  %v516 = vmax.f32 %v514, -1e+30
  %v517 = vsub.f32 %v507, %v515
  %v518 = vsub.f32 %v508, %v516
  %v519 = vmul.f32 %v517, 1.442695
  %v520 = vpow.pop %v519
  %v521 = vmul.f32 %v518, 1.442695
  %v522 = vpow.pop %v521
  %v523 = vsel %vm414, %v520, 0.0
  %524 = vadd.xlane.f32.xlu0 %v523
  %v525 = vpop.xlane.xlu0 %524
  %v526 = vsel %vm414, %v522, 0.0
  %527 = vadd.xlane.f32.xlu0 %v526
  %v528 = vpop.xlane.xlu0 %527
  %v529 = vpack.c.bf16 %v520, %v520
  %v530 = vpack.c.bf16 %v522, %v522
  %v532 = vsel %vm414, %v529, 0
  %vm534 = vcmask 1043456
  %v536 = vsel %vm534, %v394, 0
  %538 = vmatprep.subr.bf16.mxu0 0
  %539 = vmatpush1.bf16.msra.mxu0 0
  %540 = vmatprep.subr.bf16.mxu0 0
  %541 = vmatpush1.bf16.msra.mxu0 0
  %542 = vmatprep.subr.bf16.mxu0 0
  %543 = vmatpush1.bf16.msra.mxu0 0
  %544 = vmatprep.subr.bf16.mxu0 0
  %545 = vmatpush1.bf16.msra.mxu0 0
  %546 = vmatprep.subr.bf16.mxu0 0
  %547 = vmatpush1.bf16.msra.mxu0 0
  %548 = vmatprep.subr.bf16.mxu0 0
  %549 = vmatpush1.bf16.msra.mxu0 0
  %550 = vmatprep.subr.bf16.mxu0 0
  %551 = vmatpush1.bf16.msra.mxu0 0
  %552 = vmatprep.subr.bf16.mxu0 0
  %553 = vmatpush1.bf16.msra.mxu0 %v536
  %554 = vmatprep.subr.bf16.mxu0 0
  %555 = vmatpush2.bf16.msra.mxu0 0
  %556 = vmatprep.subr.bf16.mxu0 0
  %557 = vmatpush2.bf16.msra.mxu0 0
  %558 = vmatprep.subr.bf16.mxu0 0
  %559 = vmatpush2.bf16.msra.mxu0 0
  %560 = vmatprep.subr.bf16.mxu0 0
  %561 = vmatpush2.bf16.msra.mxu0 0
  %562 = vmatprep.subr.bf16.mxu0 0
  %563 = vmatpush2.bf16.msra.mxu0 0
  %564 = vmatprep.subr.bf16.mxu0 0
  %565 = vmatpush2.bf16.msra.mxu0 0
  %566 = vmatprep.subr.bf16.mxu0 0
  %567 = vmatpush2.bf16.msra.mxu0 0
  %568 = vmatprep.subr.bf16.mxu0 0
  %569 = vmatpush2.bf16.msra.mxu0 0
  %570 = vmatprep.mubr.bf16.mxu0 0
  %571 = vmatmul.mubr.bf16.gmra.mxu0 %v532
  %v572 = vpop.f32.mrf.mxu0
  %v573 = vadd.f32 0.0, %v572
  %v574 = vpop.f32.mrf.mxu0
  %v575 = vpop.f32.mrf.mxu0
  %v576 = vpop.f32.mrf.mxu0
  %577 = vdwg.mxu0
  %v579 = vsel %vm414, %v530, 0
  %v582 = vsel %vm534, %v395, 0
  %584 = vmatprep.subr.bf16.mxu0 0
  %585 = vmatpush1.bf16.msra.mxu0 0
  %586 = vmatprep.subr.bf16.mxu0 0
  %587 = vmatpush1.bf16.msra.mxu0 0
  %588 = vmatprep.subr.bf16.mxu0 0
  %589 = vmatpush1.bf16.msra.mxu0 0
  %590 = vmatprep.subr.bf16.mxu0 0
  %591 = vmatpush1.bf16.msra.mxu0 0
  %592 = vmatprep.subr.bf16.mxu0 0
  %593 = vmatpush1.bf16.msra.mxu0 0
  %594 = vmatprep.subr.bf16.mxu0 0
  %595 = vmatpush1.bf16.msra.mxu0 0
  %596 = vmatprep.subr.bf16.mxu0 0
  %597 = vmatpush1.bf16.msra.mxu0 0
  %598 = vmatprep.subr.bf16.mxu0 0
  %599 = vmatpush1.bf16.msra.mxu0 %v582
  %600 = vmatprep.subr.bf16.mxu0 0
  %601 = vmatpush2.bf16.msra.mxu0 0
  %602 = vmatprep.subr.bf16.mxu0 0
  %603 = vmatpush2.bf16.msra.mxu0 0
  %604 = vmatprep.subr.bf16.mxu0 0
  %605 = vmatpush2.bf16.msra.mxu0 0
  %606 = vmatprep.subr.bf16.mxu0 0
  %607 = vmatpush2.bf16.msra.mxu0 0
  %608 = vmatprep.subr.bf16.mxu0 0
  %609 = vmatpush2.bf16.msra.mxu0 0
  %610 = vmatprep.subr.bf16.mxu0 0
  %611 = vmatpush2.bf16.msra.mxu0 0
  %612 = vmatprep.subr.bf16.mxu0 0
  %613 = vmatpush2.bf16.msra.mxu0 0
  %614 = vmatprep.subr.bf16.mxu0 0
  %615 = vmatpush2.bf16.msra.mxu0 0
  %616 = vmatprep.mubr.bf16.mxu0 0
  %617 = vmatmul.mubr.bf16.gmra.mxu0 %v579
  %v618 = vpop.f32.mrf.mxu0
  %v619 = vadd.f32 0.0, %v618
  %v620 = vpop.f32.mrf.mxu0
  %v621 = vpop.f32.mrf.mxu0
  %v622 = vpop.f32.mrf.mxu0
  %623 = vdwg.mxu0
  %vm624 = vcmp.gt.f32.partialorder %v525, 0.0
  %vm625 = vcmp.gt.f32.partialorder %v528, 0.0
  %v626 = vrcp.pop %v525
  %v627 = vrcp.pop %v528
  %v628 = vsel %vm624, %v626, 0.0
  %v629 = vsel %vm625, %v627, 0.0
  %v630 = vmul.f32 %v573, %v628
  %v631 = vmul.f32 %v619, %v629
  %633 = vrot.lane.b32.xlu0 %v390, 120
  %v634 = vpop.permute.xlu0 %633
  %636 = vrot.lane.b32.xlu0 %v392, 120
  %v637 = vpop.permute.xlu0 %636
  %v639 = vsel %vm414, %v634, 0
  %v642 = vsel %vm414, %v637, 0
  %644 = vmatprep.subr.bf16.mxu0 0
  %645 = vmatpush1.bf16.xpose.msra.mxu0 0
  %646 = vmatprep.subr.bf16.mxu0 0
  %647 = vmatpush1.bf16.xpose.msra.mxu0 0
  %648 = vmatprep.subr.bf16.mxu0 0
  %649 = vmatpush1.bf16.xpose.msra.mxu0 0
  %650 = vmatprep.subr.bf16.mxu0 0
  %651 = vmatpush1.bf16.xpose.msra.mxu0 0
  %652 = vmatprep.subr.bf16.mxu0 0
  %653 = vmatpush1.bf16.xpose.msra.mxu0 0
  %654 = vmatprep.subr.bf16.mxu0 0
  %655 = vmatpush1.bf16.xpose.msra.mxu0 0
  %656 = vmatprep.subr.bf16.mxu0 0
  %657 = vmatpush1.bf16.xpose.msra.mxu0 0
  %658 = vmatprep.subr.bf16.mxu0 0
  %659 = vmatpush1.bf16.xpose.msra.mxu0 %v642
  %660 = vmatprep.subr.bf16.mxu0 0
  %661 = vmatpush2.bf16.xpose.msra.mxu0 0
  %662 = vmatprep.subr.bf16.mxu0 0
  %663 = vmatpush2.bf16.xpose.msra.mxu0 0
  %664 = vmatprep.subr.bf16.mxu0 0
  %665 = vmatpush2.bf16.xpose.msra.mxu0 0
  %666 = vmatprep.subr.bf16.mxu0 0
  %667 = vmatpush2.bf16.xpose.msra.mxu0 0
  %668 = vmatprep.subr.bf16.mxu0 0
  %669 = vmatpush2.bf16.xpose.msra.mxu0 0
  %670 = vmatprep.subr.bf16.mxu0 0
  %671 = vmatpush2.bf16.xpose.msra.mxu0 0
  %672 = vmatprep.subr.bf16.mxu0 0
  %673 = vmatpush2.bf16.xpose.msra.mxu0 0
  %674 = vmatprep.subr.bf16.mxu0 0
  %675 = vmatpush2.bf16.xpose.msra.mxu0 0
  %676 = vmatprep.mubr.bf16.mxu0 0
  %677 = vmatmul.mubr.bf16.gmra.mxu0 %v639
  %v678 = vpop.f32.mrf.mxu0
  %v679 = vadd.f32 %v407, %v678
  %v680 = vpop.f32.mrf.mxu0
  %v681 = vpop.f32.mrf.mxu0
  %v682 = vpop.f32.mrf.mxu0
  %683 = vdwg.mxu0
  %685 = vrot.lane.b32.xlu0 %v391, 120
  %v686 = vpop.permute.xlu0 %685
  %688 = vrot.lane.b32.xlu0 %v393, 120
  %v689 = vpop.permute.xlu0 %688
  %v691 = vsel %vm414, %v686, 0
  %v694 = vsel %vm414, %v689, 0
  %696 = vmatprep.subr.bf16.mxu0 0
  %697 = vmatpush1.bf16.xpose.msra.mxu0 0
  %698 = vmatprep.subr.bf16.mxu0 0
  %699 = vmatpush1.bf16.xpose.msra.mxu0 0
  %700 = vmatprep.subr.bf16.mxu0 0
  %701 = vmatpush1.bf16.xpose.msra.mxu0 0
  %702 = vmatprep.subr.bf16.mxu0 0
  %703 = vmatpush1.bf16.xpose.msra.mxu0 0
  %704 = vmatprep.subr.bf16.mxu0 0
  %705 = vmatpush1.bf16.xpose.msra.mxu0 0
  %706 = vmatprep.subr.bf16.mxu0 0
  %707 = vmatpush1.bf16.xpose.msra.mxu0 0
  %708 = vmatprep.subr.bf16.mxu0 0
  %709 = vmatpush1.bf16.xpose.msra.mxu0 0
  %710 = vmatprep.subr.bf16.mxu0 0
  %711 = vmatpush1.bf16.xpose.msra.mxu0 %v694
  %712 = vmatprep.subr.bf16.mxu0 0
  %713 = vmatpush2.bf16.xpose.msra.mxu0 0
  %714 = vmatprep.subr.bf16.mxu0 0
  %715 = vmatpush2.bf16.xpose.msra.mxu0 0
  %716 = vmatprep.subr.bf16.mxu0 0
  %717 = vmatpush2.bf16.xpose.msra.mxu0 0
  %718 = vmatprep.subr.bf16.mxu0 0
  %719 = vmatpush2.bf16.xpose.msra.mxu0 0
  %720 = vmatprep.subr.bf16.mxu0 0
  %721 = vmatpush2.bf16.xpose.msra.mxu0 0
  %722 = vmatprep.subr.bf16.mxu0 0
  %723 = vmatpush2.bf16.xpose.msra.mxu0 0
  %724 = vmatprep.subr.bf16.mxu0 0
  %725 = vmatpush2.bf16.xpose.msra.mxu0 0
  %726 = vmatprep.subr.bf16.mxu0 0
  %727 = vmatpush2.bf16.xpose.msra.mxu0 0
  %728 = vmatprep.mubr.bf16.mxu0 0
  %729 = vmatmul.mubr.bf16.gmra.mxu0 %v691
  %v730 = vpop.f32.mrf.mxu0
  %v731 = vadd.f32 %v411, %v730
  %v732 = vpop.f32.mrf.mxu0
  %v733 = vpop.f32.mrf.mxu0
  %v734 = vpop.f32.mrf.mxu0
  %735 = vdwg.mxu0
  %v736 = vadd.f32 %v679, %v401
  %v737 = vadd.f32 %v731, %v401
  %v738 = vsel %vm414, %v736, -inf
  %739 = vmax.xlane.f32.xlu0 %v738
  %v740 = vpop.xlane.xlu0 %739
  %v741 = vsel %vm414, %v737, -inf
  %742 = vmax.xlane.f32.xlu0 %v741
  %v743 = vpop.xlane.xlu0 %742
  %v744 = vmax.f32 %v740, -1e+30
  %v745 = vmax.f32 %v743, -1e+30
  %v746 = vsub.f32 %v736, %v744
  %v747 = vsub.f32 %v737, %v745
  %v748 = vmul.f32 %v746, 1.442695
  %v749 = vpow.pop %v748
  %v750 = vmul.f32 %v747, 1.442695
  %v751 = vpow.pop %v750
  %v752 = vsel %vm414, %v749, 0.0
  %753 = vadd.xlane.f32.xlu0 %v752
  %v754 = vpop.xlane.xlu0 %753
  %v755 = vsel %vm414, %v751, 0.0
  %756 = vadd.xlane.f32.xlu0 %v755
  %v757 = vpop.xlane.xlu0 %756
  %v758 = vpack.c.bf16 %v749, %v749
  %v759 = vpack.c.bf16 %v751, %v751
  %761 = vrot.lane.b32.xlu0 %v394, 120
  %v762 = vpop.permute.xlu0 %761
  %v764 = vsel %vm414, %v758, 0
  %v767 = vsel %vm534, %v762, 0
  %769 = vmatprep.subr.bf16.mxu0 0
  %770 = vmatpush1.bf16.msra.mxu0 0
  %771 = vmatprep.subr.bf16.mxu0 0
  %772 = vmatpush1.bf16.msra.mxu0 0
  %773 = vmatprep.subr.bf16.mxu0 0
  %774 = vmatpush1.bf16.msra.mxu0 0
  %775 = vmatprep.subr.bf16.mxu0 0
  %776 = vmatpush1.bf16.msra.mxu0 0
  %777 = vmatprep.subr.bf16.mxu0 0
  %778 = vmatpush1.bf16.msra.mxu0 0
  %779 = vmatprep.subr.bf16.mxu0 0
  %780 = vmatpush1.bf16.msra.mxu0 0
  %781 = vmatprep.subr.bf16.mxu0 0
  %782 = vmatpush1.bf16.msra.mxu0 0
  %783 = vmatprep.subr.bf16.mxu0 0
  %784 = vmatpush1.bf16.msra.mxu0 %v767
  %785 = vmatprep.subr.bf16.mxu0 0
  %786 = vmatpush2.bf16.msra.mxu0 0
  %787 = vmatprep.subr.bf16.mxu0 0
  %788 = vmatpush2.bf16.msra.mxu0 0
  %789 = vmatprep.subr.bf16.mxu0 0
  %790 = vmatpush2.bf16.msra.mxu0 0
  %791 = vmatprep.subr.bf16.mxu0 0
  %792 = vmatpush2.bf16.msra.mxu0 0
  %793 = vmatprep.subr.bf16.mxu0 0
  %794 = vmatpush2.bf16.msra.mxu0 0
  %795 = vmatprep.subr.bf16.mxu0 0
  %796 = vmatpush2.bf16.msra.mxu0 0
  %797 = vmatprep.subr.bf16.mxu0 0
  %798 = vmatpush2.bf16.msra.mxu0 0
  %799 = vmatprep.subr.bf16.mxu0 0
  %800 = vmatpush2.bf16.msra.mxu0 0
  %801 = vmatprep.mubr.bf16.mxu0 0
  %802 = vmatmul.mubr.bf16.gmra.mxu0 %v764
  %v803 = vpop.f32.mrf.mxu0
  %v804 = vadd.f32 0.0, %v803
  %v805 = vpop.f32.mrf.mxu0
  %v806 = vpop.f32.mrf.mxu0
  %v807 = vpop.f32.mrf.mxu0
  %808 = vdwg.mxu0
  %810 = vrot.lane.b32.xlu0 %v395, 120
  %v811 = vpop.permute.xlu0 %810
  %v813 = vsel %vm414, %v759, 0
  %v816 = vsel %vm534, %v811, 0
  %818 = vmatprep.subr.bf16.mxu0 0
  %819 = vmatpush1.bf16.msra.mxu0 0
  %820 = vmatprep.subr.bf16.mxu0 0
  %821 = vmatpush1.bf16.msra.mxu0 0
  %822 = vmatprep.subr.bf16.mxu0 0
  %823 = vmatpush1.bf16.msra.mxu0 0
  %824 = vmatprep.subr.bf16.mxu0 0
  %825 = vmatpush1.bf16.msra.mxu0 0
  %826 = vmatprep.subr.bf16.mxu0 0
  %827 = vmatpush1.bf16.msra.mxu0 0
  %828 = vmatprep.subr.bf16.mxu0 0
  %829 = vmatpush1.bf16.msra.mxu0 0
  %830 = vmatprep.subr.bf16.mxu0 0
  %831 = vmatpush1.bf16.msra.mxu0 0
  %832 = vmatprep.subr.bf16.mxu0 0
  %833 = vmatpush1.bf16.msra.mxu0 %v816
  %834 = vmatprep.subr.bf16.mxu0 0
  %835 = vmatpush2.bf16.msra.mxu0 0
  %836 = vmatprep.subr.bf16.mxu0 0
  %837 = vmatpush2.bf16.msra.mxu0 0
  %838 = vmatprep.subr.bf16.mxu0 0
  %839 = vmatpush2.bf16.msra.mxu0 0
  %840 = vmatprep.subr.bf16.mxu0 0
  %841 = vmatpush2.bf16.msra.mxu0 0
  %842 = vmatprep.subr.bf16.mxu0 0
  %843 = vmatpush2.bf16.msra.mxu0 0
  %844 = vmatprep.subr.bf16.mxu0 0
  %845 = vmatpush2.bf16.msra.mxu0 0
  %846 = vmatprep.subr.bf16.mxu0 0
  %847 = vmatpush2.bf16.msra.mxu0 0
  %848 = vmatprep.subr.bf16.mxu0 0
  %849 = vmatpush2.bf16.msra.mxu0 0
  %850 = vmatprep.mubr.bf16.mxu0 0
  %851 = vmatmul.mubr.bf16.gmra.mxu0 %v813
  %v852 = vpop.f32.mrf.mxu0
  %v853 = vadd.f32 0.0, %v852
  %v854 = vpop.f32.mrf.mxu0
  %v855 = vpop.f32.mrf.mxu0
  %v856 = vpop.f32.mrf.mxu0
  %857 = vdwg.mxu0
  %vm858 = vcmp.gt.f32.partialorder %v754, 0.0
  %vm859 = vcmp.gt.f32.partialorder %v757, 0.0
  %v860 = vrcp.pop %v754
  %v861 = vrcp.pop %v757
  %v862 = vsel %vm858, %v860, 0.0
  %v863 = vsel %vm859, %v861, 0.0
  %v864 = vmul.f32 %v804, %v862
  %v865 = vmul.f32 %v853, %v863
  %866 = vrot.lane.b32.xlu0 %v390, 112
  %v867 = vpop.permute.xlu0 %866
  %868 = vrot.lane.b32.xlu0 %v392, 112
  %v869 = vpop.permute.xlu0 %868
  %v871 = vsel %vm414, %v867, 0
  %v874 = vsel %vm414, %v869, 0
  %876 = vmatprep.subr.bf16.mxu0 0
  %877 = vmatpush1.bf16.xpose.msra.mxu0 0
  %878 = vmatprep.subr.bf16.mxu0 0
  %879 = vmatpush1.bf16.xpose.msra.mxu0 0
  %880 = vmatprep.subr.bf16.mxu0 0
  %881 = vmatpush1.bf16.xpose.msra.mxu0 0
  %882 = vmatprep.subr.bf16.mxu0 0
  %883 = vmatpush1.bf16.xpose.msra.mxu0 0
  %884 = vmatprep.subr.bf16.mxu0 0
  %885 = vmatpush1.bf16.xpose.msra.mxu0 0
  %886 = vmatprep.subr.bf16.mxu0 0
  %887 = vmatpush1.bf16.xpose.msra.mxu0 0
  %888 = vmatprep.subr.bf16.mxu0 0
  %889 = vmatpush1.bf16.xpose.msra.mxu0 0
  %890 = vmatprep.subr.bf16.mxu0 0
  %891 = vmatpush1.bf16.xpose.msra.mxu0 %v874
  %892 = vmatprep.subr.bf16.mxu0 0
  %893 = vmatpush2.bf16.xpose.msra.mxu0 0
  %894 = vmatprep.subr.bf16.mxu0 0
  %895 = vmatpush2.bf16.xpose.msra.mxu0 0
  %896 = vmatprep.subr.bf16.mxu0 0
  %897 = vmatpush2.bf16.xpose.msra.mxu0 0
  %898 = vmatprep.subr.bf16.mxu0 0
  %899 = vmatpush2.bf16.xpose.msra.mxu0 0
  %900 = vmatprep.subr.bf16.mxu0 0
  %901 = vmatpush2.bf16.xpose.msra.mxu0 0
  %902 = vmatprep.subr.bf16.mxu0 0
  %903 = vmatpush2.bf16.xpose.msra.mxu0 0
  %904 = vmatprep.subr.bf16.mxu0 0
  %905 = vmatpush2.bf16.xpose.msra.mxu0 0
  %906 = vmatprep.subr.bf16.mxu0 0
  %907 = vmatpush2.bf16.xpose.msra.mxu0 0
  %908 = vmatprep.mubr.bf16.mxu0 0
  %909 = vmatmul.mubr.bf16.gmra.mxu0 %v871
  %v910 = vpop.f32.mrf.mxu0
  %v911 = vadd.f32 %v407, %v910
  %v912 = vpop.f32.mrf.mxu0
  %v913 = vpop.f32.mrf.mxu0
  %v914 = vpop.f32.mrf.mxu0
  %915 = vdwg.mxu0
  %916 = vrot.lane.b32.xlu0 %v391, 112
  %v917 = vpop.permute.xlu0 %916
  %918 = vrot.lane.b32.xlu0 %v393, 112
  %v919 = vpop.permute.xlu0 %918
  %v921 = vsel %vm414, %v917, 0
  %v924 = vsel %vm414, %v919, 0
  %926 = vmatprep.subr.bf16.mxu0 0
  %927 = vmatpush1.bf16.xpose.msra.mxu0 0
  %928 = vmatprep.subr.bf16.mxu0 0
  %929 = vmatpush1.bf16.xpose.msra.mxu0 0
  %930 = vmatprep.subr.bf16.mxu0 0
  %931 = vmatpush1.bf16.xpose.msra.mxu0 0
  %932 = vmatprep.subr.bf16.mxu0 0
  %933 = vmatpush1.bf16.xpose.msra.mxu0 0
  %934 = vmatprep.subr.bf16.mxu0 0
  %935 = vmatpush1.bf16.xpose.msra.mxu0 0
  %936 = vmatprep.subr.bf16.mxu0 0
  %937 = vmatpush1.bf16.xpose.msra.mxu0 0
  %938 = vmatprep.subr.bf16.mxu0 0
  %939 = vmatpush1.bf16.xpose.msra.mxu0 0
  %940 = vmatprep.subr.bf16.mxu0 0
  %941 = vmatpush1.bf16.xpose.msra.mxu0 %v924
  %942 = vmatprep.subr.bf16.mxu0 0
  %943 = vmatpush2.bf16.xpose.msra.mxu0 0
  %944 = vmatprep.subr.bf16.mxu0 0
  %945 = vmatpush2.bf16.xpose.msra.mxu0 0
  %946 = vmatprep.subr.bf16.mxu0 0
  %947 = vmatpush2.bf16.xpose.msra.mxu0 0
  %948 = vmatprep.subr.bf16.mxu0 0
  %949 = vmatpush2.bf16.xpose.msra.mxu0 0
  %950 = vmatprep.subr.bf16.mxu0 0
  %951 = vmatpush2.bf16.xpose.msra.mxu0 0
  %952 = vmatprep.subr.bf16.mxu0 0
  %953 = vmatpush2.bf16.xpose.msra.mxu0 0
  %954 = vmatprep.subr.bf16.mxu0 0
  %955 = vmatpush2.bf16.xpose.msra.mxu0 0
  %956 = vmatprep.subr.bf16.mxu0 0
  %957 = vmatpush2.bf16.xpose.msra.mxu0 0
  %958 = vmatprep.mubr.bf16.mxu0 0
  %959 = vmatmul.mubr.bf16.gmra.mxu0 %v921
  %v960 = vpop.f32.mrf.mxu0
  %v961 = vadd.f32 %v411, %v960
  %v962 = vpop.f32.mrf.mxu0
  %v963 = vpop.f32.mrf.mxu0
  %v964 = vpop.f32.mrf.mxu0
  %965 = vdwg.mxu0
  %v966 = vadd.f32 %v911, %v401
  %v967 = vadd.f32 %v961, %v401
  %v968 = vsel %vm414, %v966, -inf
  %969 = vmax.xlane.f32.xlu0 %v968
  %v970 = vpop.xlane.xlu0 %969
  %v971 = vsel %vm414, %v967, -inf
  %972 = vmax.xlane.f32.xlu0 %v971
  %v973 = vpop.xlane.xlu0 %972
  %v974 = vmax.f32 %v970, -1e+30
  %v975 = vmax.f32 %v973, -1e+30
  %v976 = vsub.f32 %v966, %v974
  %v977 = vsub.f32 %v967, %v975
  %v978 = vmul.f32 %v976, 1.442695
  %v979 = vpow.pop %v978
  %v980 = vmul.f32 %v977, 1.442695
  %v981 = vpow.pop %v980
  %v982 = vsel %vm414, %v979, 0.0
  %983 = vadd.xlane.f32.xlu0 %v982
  %v984 = vpop.xlane.xlu0 %983
  %v985 = vsel %vm414, %v981, 0.0
  %986 = vadd.xlane.f32.xlu0 %v985
  %v987 = vpop.xlane.xlu0 %986
  %v988 = vpack.c.bf16 %v979, %v979
  %v989 = vpack.c.bf16 %v981, %v981
  %990 = vrot.lane.b32.xlu0 %v394, 112
  %v991 = vpop.permute.xlu0 %990
  %v993 = vsel %vm414, %v988, 0
  %v996 = vsel %vm534, %v991, 0
  %998 = vmatprep.subr.bf16.mxu0 0
  %999 = vmatpush1.bf16.msra.mxu0 0
  %1000 = vmatprep.subr.bf16.mxu0 0
  %1001 = vmatpush1.bf16.msra.mxu0 0
  %1002 = vmatprep.subr.bf16.mxu0 0
  %1003 = vmatpush1.bf16.msra.mxu0 0
  %1004 = vmatprep.subr.bf16.mxu0 0
  %1005 = vmatpush1.bf16.msra.mxu0 0
  %1006 = vmatprep.subr.bf16.mxu0 0
  %1007 = vmatpush1.bf16.msra.mxu0 0
  %1008 = vmatprep.subr.bf16.mxu0 0
  %1009 = vmatpush1.bf16.msra.mxu0 0
  %1010 = vmatprep.subr.bf16.mxu0 0
  %1011 = vmatpush1.bf16.msra.mxu0 0
  %1012 = vmatprep.subr.bf16.mxu0 0
  %1013 = vmatpush1.bf16.msra.mxu0 %v996
  %1014 = vmatprep.subr.bf16.mxu0 0
  %1015 = vmatpush2.bf16.msra.mxu0 0
  %1016 = vmatprep.subr.bf16.mxu0 0
  %1017 = vmatpush2.bf16.msra.mxu0 0
  %1018 = vmatprep.subr.bf16.mxu0 0
  %1019 = vmatpush2.bf16.msra.mxu0 0
  %1020 = vmatprep.subr.bf16.mxu0 0
  %1021 = vmatpush2.bf16.msra.mxu0 0
  %1022 = vmatprep.subr.bf16.mxu0 0
  %1023 = vmatpush2.bf16.msra.mxu0 0
  %1024 = vmatprep.subr.bf16.mxu0 0
  %1025 = vmatpush2.bf16.msra.mxu0 0
  %1026 = vmatprep.subr.bf16.mxu0 0
  %1027 = vmatpush2.bf16.msra.mxu0 0
  %1028 = vmatprep.subr.bf16.mxu0 0
  %1029 = vmatpush2.bf16.msra.mxu0 0
  %1030 = vmatprep.mubr.bf16.mxu0 0
  %1031 = vmatmul.mubr.bf16.gmra.mxu0 %v993
  %v1032 = vpop.f32.mrf.mxu0
  %v1033 = vadd.f32 0.0, %v1032
  %v1034 = vpop.f32.mrf.mxu0
  %v1035 = vpop.f32.mrf.mxu0
  %v1036 = vpop.f32.mrf.mxu0
  %1037 = vdwg.mxu0
  %1038 = vrot.lane.b32.xlu0 %v395, 112
  %v1039 = vpop.permute.xlu0 %1038
  %v1041 = vsel %vm414, %v989, 0
  %v1044 = vsel %vm534, %v1039, 0
  %1046 = vmatprep.subr.bf16.mxu0 0
  %1047 = vmatpush1.bf16.msra.mxu0 0
  %1048 = vmatprep.subr.bf16.mxu0 0
  %1049 = vmatpush1.bf16.msra.mxu0 0
  %1050 = vmatprep.subr.bf16.mxu0 0
  %1051 = vmatpush1.bf16.msra.mxu0 0
  %1052 = vmatprep.subr.bf16.mxu0 0
  %1053 = vmatpush1.bf16.msra.mxu0 0
  %1054 = vmatprep.subr.bf16.mxu0 0
  %1055 = vmatpush1.bf16.msra.mxu0 0
  %1056 = vmatprep.subr.bf16.mxu0 0
  %1057 = vmatpush1.bf16.msra.mxu0 0
  %1058 = vmatprep.subr.bf16.mxu0 0
  %1059 = vmatpush1.bf16.msra.mxu0 0
  %1060 = vmatprep.subr.bf16.mxu0 0
  %1061 = vmatpush1.bf16.msra.mxu0 %v1044
  %1062 = vmatprep.subr.bf16.mxu0 0
  %1063 = vmatpush2.bf16.msra.mxu0 0
  %1064 = vmatprep.subr.bf16.mxu0 0
  %1065 = vmatpush2.bf16.msra.mxu0 0
  %1066 = vmatprep.subr.bf16.mxu0 0
  %1067 = vmatpush2.bf16.msra.mxu0 0
  %1068 = vmatprep.subr.bf16.mxu0 0
  %1069 = vmatpush2.bf16.msra.mxu0 0
  %1070 = vmatprep.subr.bf16.mxu0 0
  %1071 = vmatpush2.bf16.msra.mxu0 0
  %1072 = vmatprep.subr.bf16.mxu0 0
  %1073 = vmatpush2.bf16.msra.mxu0 0
  %1074 = vmatprep.subr.bf16.mxu0 0
  %1075 = vmatpush2.bf16.msra.mxu0 0
  %1076 = vmatprep.subr.bf16.mxu0 0
  %1077 = vmatpush2.bf16.msra.mxu0 0
  %1078 = vmatprep.mubr.bf16.mxu0 0
  %1079 = vmatmul.mubr.bf16.gmra.mxu0 %v1041
  %v1080 = vpop.f32.mrf.mxu0
  %v1081 = vadd.f32 0.0, %v1080
  %v1082 = vpop.f32.mrf.mxu0
  %v1083 = vpop.f32.mrf.mxu0
  %v1084 = vpop.f32.mrf.mxu0
  %1085 = vdwg.mxu0
  %vm1086 = vcmp.gt.f32.partialorder %v984, 0.0
  %vm1087 = vcmp.gt.f32.partialorder %v987, 0.0
  %v1088 = vrcp.pop %v984
  %v1089 = vrcp.pop %v987
  %v1090 = vsel %vm1086, %v1088, 0.0
  %v1091 = vsel %vm1087, %v1089, 0.0
  %v1092 = vmul.f32 %v1033, %v1090
  %v1093 = vmul.f32 %v1081, %v1091
  %1094 = vrot.lane.b32.xlu0 %v390, 104
  %v1095 = vpop.permute.xlu0 %1094
  %1096 = vrot.lane.b32.xlu0 %v392, 104
  %v1097 = vpop.permute.xlu0 %1096
  %v1099 = vsel %vm414, %v1095, 0
  %v1102 = vsel %vm414, %v1097, 0
  %1104 = vmatprep.subr.bf16.mxu0 0
  %1105 = vmatpush1.bf16.xpose.msra.mxu0 0
  %1106 = vmatprep.subr.bf16.mxu0 0
  %1107 = vmatpush1.bf16.xpose.msra.mxu0 0
  %1108 = vmatprep.subr.bf16.mxu0 0
  %1109 = vmatpush1.bf16.xpose.msra.mxu0 0
  %1110 = vmatprep.subr.bf16.mxu0 0
  %1111 = vmatpush1.bf16.xpose.msra.mxu0 0
  %1112 = vmatprep.subr.bf16.mxu0 0
  %1113 = vmatpush1.bf16.xpose.msra.mxu0 0
  %1114 = vmatprep.subr.bf16.mxu0 0
  %1115 = vmatpush1.bf16.xpose.msra.mxu0 0
  %1116 = vmatprep.subr.bf16.mxu0 0
  %1117 = vmatpush1.bf16.xpose.msra.mxu0 0
  %1118 = vmatprep.subr.bf16.mxu0 0
  %1119 = vmatpush1.bf16.xpose.msra.mxu0 %v1102
  %1120 = vmatprep.subr.bf16.mxu0 0
  %1121 = vmatpush2.bf16.xpose.msra.mxu0 0
  %1122 = vmatprep.subr.bf16.mxu0 0
  %1123 = vmatpush2.bf16.xpose.msra.mxu0 0
  %1124 = vmatprep.subr.bf16.mxu0 0
  %1125 = vmatpush2.bf16.xpose.msra.mxu0 0
  %1126 = vmatprep.subr.bf16.mxu0 0
  %1127 = vmatpush2.bf16.xpose.msra.mxu0 0
  %1128 = vmatprep.subr.bf16.mxu0 0
  %1129 = vmatpush2.bf16.xpose.msra.mxu0 0
  %1130 = vmatprep.subr.bf16.mxu0 0
  %1131 = vmatpush2.bf16.xpose.msra.mxu0 0
  %1132 = vmatprep.subr.bf16.mxu0 0
  %1133 = vmatpush2.bf16.xpose.msra.mxu0 0
  %1134 = vmatprep.subr.bf16.mxu0 0
  %1135 = vmatpush2.bf16.xpose.msra.mxu0 0
  %1136 = vmatprep.mubr.bf16.mxu0 0
  %1137 = vmatmul.mubr.bf16.gmra.mxu0 %v1099
  %v1138 = vpop.f32.mrf.mxu0
  %v1139 = vadd.f32 %v407, %v1138
  %v1140 = vpop.f32.mrf.mxu0
  %v1141 = vpop.f32.mrf.mxu0
  %v1142 = vpop.f32.mrf.mxu0
  %1143 = vdwg.mxu0
  %1144 = vrot.lane.b32.xlu0 %v391, 104
  %v1145 = vpop.permute.xlu0 %1144
  %1146 = vrot.lane.b32.xlu0 %v393, 104
  %v1147 = vpop.permute.xlu0 %1146
  %v1149 = vsel %vm414, %v1145, 0
  %v1152 = vsel %vm414, %v1147, 0
  %1154 = vmatprep.subr.bf16.mxu0 0
  %1155 = vmatpush1.bf16.xpose.msra.mxu0 0
  %1156 = vmatprep.subr.bf16.mxu0 0
  %1157 = vmatpush1.bf16.xpose.msra.mxu0 0
  %1158 = vmatprep.subr.bf16.mxu0 0
  %1159 = vmatpush1.bf16.xpose.msra.mxu0 0
  %1160 = vmatprep.subr.bf16.mxu0 0
  %1161 = vmatpush1.bf16.xpose.msra.mxu0 0
  %1162 = vmatprep.subr.bf16.mxu0 0
  %1163 = vmatpush1.bf16.xpose.msra.mxu0 0
  %1164 = vmatprep.subr.bf16.mxu0 0
  %1165 = vmatpush1.bf16.xpose.msra.mxu0 0
  %1166 = vmatprep.subr.bf16.mxu0 0
  %1167 = vmatpush1.bf16.xpose.msra.mxu0 0
  %1168 = vmatprep.subr.bf16.mxu0 0
  %1169 = vmatpush1.bf16.xpose.msra.mxu0 %v1152
  %1170 = vmatprep.subr.bf16.mxu0 0
  %1171 = vmatpush2.bf16.xpose.msra.mxu0 0
  %1172 = vmatprep.subr.bf16.mxu0 0
  %1173 = vmatpush2.bf16.xpose.msra.mxu0 0
  %1174 = vmatprep.subr.bf16.mxu0 0
  %1175 = vmatpush2.bf16.xpose.msra.mxu0 0
  %1176 = vmatprep.subr.bf16.mxu0 0
  %1177 = vmatpush2.bf16.xpose.msra.mxu0 0
  %1178 = vmatprep.subr.bf16.mxu0 0
  %1179 = vmatpush2.bf16.xpose.msra.mxu0 0
  %1180 = vmatprep.subr.bf16.mxu0 0
  %1181 = vmatpush2.bf16.xpose.msra.mxu0 0
  %1182 = vmatprep.subr.bf16.mxu0 0
  %1183 = vmatpush2.bf16.xpose.msra.mxu0 0
  %1184 = vmatprep.subr.bf16.mxu0 0
  %1185 = vmatpush2.bf16.xpose.msra.mxu0 0
  %1186 = vmatprep.mubr.bf16.mxu0 0
  %1187 = vmatmul.mubr.bf16.gmra.mxu0 %v1149
  %v1188 = vpop.f32.mrf.mxu0
  %v1189 = vadd.f32 %v411, %v1188
  %v1190 = vpop.f32.mrf.mxu0
  %v1191 = vpop.f32.mrf.mxu0
  %v1192 = vpop.f32.mrf.mxu0
  %1193 = vdwg.mxu0
  %v1194 = vadd.f32 %v1139, %v401
  %v1195 = vadd.f32 %v1189, %v401
  %v1196 = vsel %vm414, %v1194, -inf
  %1197 = vmax.xlane.f32.xlu0 %v1196
  %v1198 = vpop.xlane.xlu0 %1197
  %v1199 = vsel %vm414, %v1195, -inf
  %1200 = vmax.xlane.f32.xlu0 %v1199
  %v1201 = vpop.xlane.xlu0 %1200
  %v1202 = vmax.f32 %v1198, -1e+30
  %v1203 = vmax.f32 %v1201, -1e+30
  %v1204 = vsub.f32 %v1194, %v1202
  %v1205 = vsub.f32 %v1195, %v1203
  %v1206 = vmul.f32 %v1204, 1.442695
  %v1207 = vpow.pop %v1206
  %v1208 = vmul.f32 %v1205, 1.442695
  %v1209 = vpow.pop %v1208
  %v1210 = vsel %vm414, %v1207, 0.0
  %1211 = vadd.xlane.f32.xlu0 %v1210
  %v1212 = vpop.xlane.xlu0 %1211
  %v1213 = vsel %vm414, %v1209, 0.0
  %1214 = vadd.xlane.f32.xlu0 %v1213
  %v1215 = vpop.xlane.xlu0 %1214
  %v1216 = vpack.c.bf16 %v1207, %v1207
  %v1217 = vpack.c.bf16 %v1209, %v1209
  %1218 = vrot.lane.b32.xlu0 %v394, 104
  %v1219 = vpop.permute.xlu0 %1218
  %v1221 = vsel %vm414, %v1216, 0
  %v1224 = vsel %vm534, %v1219, 0
  %1226 = vmatprep.subr.bf16.mxu0 0
  %1227 = vmatpush1.bf16.msra.mxu0 0
  %1228 = vmatprep.subr.bf16.mxu0 0
  %1229 = vmatpush1.bf16.msra.mxu0 0
  %1230 = vmatprep.subr.bf16.mxu0 0
  %1231 = vmatpush1.bf16.msra.mxu0 0
  %1232 = vmatprep.subr.bf16.mxu0 0
  %1233 = vmatpush1.bf16.msra.mxu0 0
  %1234 = vmatprep.subr.bf16.mxu0 0
  %1235 = vmatpush1.bf16.msra.mxu0 0
  %1236 = vmatprep.subr.bf16.mxu0 0
  %1237 = vmatpush1.bf16.msra.mxu0 0
  %1238 = vmatprep.subr.bf16.mxu0 0
  %1239 = vmatpush1.bf16.msra.mxu0 0
  %1240 = vmatprep.subr.bf16.mxu0 0
  %1241 = vmatpush1.bf16.msra.mxu0 %v1224
  %1242 = vmatprep.subr.bf16.mxu0 0
  %1243 = vmatpush2.bf16.msra.mxu0 0
  %1244 = vmatprep.subr.bf16.mxu0 0
  %1245 = vmatpush2.bf16.msra.mxu0 0
  %1246 = vmatprep.subr.bf16.mxu0 0
  %1247 = vmatpush2.bf16.msra.mxu0 0
  %1248 = vmatprep.subr.bf16.mxu0 0
  %1249 = vmatpush2.bf16.msra.mxu0 0
  %1250 = vmatprep.subr.bf16.mxu0 0
  %1251 = vmatpush2.bf16.msra.mxu0 0
  %1252 = vmatprep.subr.bf16.mxu0 0
  %1253 = vmatpush2.bf16.msra.mxu0 0
  %1254 = vmatprep.subr.bf16.mxu0 0
  %1255 = vmatpush2.bf16.msra.mxu0 0
  %1256 = vmatprep.subr.bf16.mxu0 0
  %1257 = vmatpush2.bf16.msra.mxu0 0
  %1258 = vmatprep.mubr.bf16.mxu0 0
  %1259 = vmatmul.mubr.bf16.gmra.mxu0 %v1221
  %v1260 = vpop.f32.mrf.mxu0
  %v1261 = vadd.f32 0.0, %v1260
  %v1262 = vpop.f32.mrf.mxu0
  %v1263 = vpop.f32.mrf.mxu0
  %v1264 = vpop.f32.mrf.mxu0
  %1265 = vdwg.mxu0
  %1266 = vrot.lane.b32.xlu0 %v395, 104
  %v1267 = vpop.permute.xlu0 %1266
  %v1269 = vsel %vm414, %v1217, 0
  %v1272 = vsel %vm534, %v1267, 0
  %1274 = vmatprep.subr.bf16.mxu0 0
  %1275 = vmatpush1.bf16.msra.mxu0 0
  %1276 = vmatprep.subr.bf16.mxu0 0
  %1277 = vmatpush1.bf16.msra.mxu0 0
  %1278 = vmatprep.subr.bf16.mxu0 0
  %1279 = vmatpush1.bf16.msra.mxu0 0
  %1280 = vmatprep.subr.bf16.mxu0 0
  %1281 = vmatpush1.bf16.msra.mxu0 0
  %1282 = vmatprep.subr.bf16.mxu0 0
  %1283 = vmatpush1.bf16.msra.mxu0 0
  %1284 = vmatprep.subr.bf16.mxu0 0
  %1285 = vmatpush1.bf16.msra.mxu0 0
  %1286 = vmatprep.subr.bf16.mxu0 0
  %1287 = vmatpush1.bf16.msra.mxu0 0
  %1288 = vmatprep.subr.bf16.mxu0 0
  %1289 = vmatpush1.bf16.msra.mxu0 %v1272
  %1290 = vmatprep.subr.bf16.mxu0 0
  %1291 = vmatpush2.bf16.msra.mxu0 0
  %1292 = vmatprep.subr.bf16.mxu0 0
  %1293 = vmatpush2.bf16.msra.mxu0 0
  %1294 = vmatprep.subr.bf16.mxu0 0
  %1295 = vmatpush2.bf16.msra.mxu0 0
  %1296 = vmatprep.subr.bf16.mxu0 0
  %1297 = vmatpush2.bf16.msra.mxu0 0
  %1298 = vmatprep.subr.bf16.mxu0 0
  %1299 = vmatpush2.bf16.msra.mxu0 0
  %1300 = vmatprep.subr.bf16.mxu0 0
  %1301 = vmatpush2.bf16.msra.mxu0 0
  %1302 = vmatprep.subr.bf16.mxu0 0
  %1303 = vmatpush2.bf16.msra.mxu0 0
  %1304 = vmatprep.subr.bf16.mxu0 0
  %1305 = vmatpush2.bf16.msra.mxu0 0
  %1306 = vmatprep.mubr.bf16.mxu0 0
  %1307 = vmatmul.mubr.bf16.gmra.mxu0 %v1269
  %v1308 = vpop.f32.mrf.mxu0
  %v1309 = vadd.f32 0.0, %v1308
  %v1310 = vpop.f32.mrf.mxu0
  %v1311 = vpop.f32.mrf.mxu0
  %v1312 = vpop.f32.mrf.mxu0
  %1313 = vdwg.mxu0
  %vm1314 = vcmp.gt.f32.partialorder %v1212, 0.0
  %vm1315 = vcmp.gt.f32.partialorder %v1215, 0.0
  %v1316 = vrcp.pop %v1212
  %v1317 = vrcp.pop %v1215
  %v1318 = vsel %vm1314, %v1316, 0.0
  %v1319 = vsel %vm1315, %v1317, 0.0
  %v1320 = vmul.f32 %v1261, %v1318
  %v1321 = vmul.f32 %v1309, %v1319
  %1324 = vrot.lane.b32.xlu0 %v864, 8
  %v1325 = vpop.permute.xlu0 %1324
  %1326 = vrot.lane.b32.xlu0 %v865, 8
  %v1327 = vpop.permute.xlu0 %1326
  %1332 = vrot.lane.b32.xlu0 %v1092, 16
  %v1333 = vpop.permute.xlu0 %1332
  %1334 = vrot.lane.b32.xlu0 %v1093, 16
  %v1335 = vpop.permute.xlu0 %1334
  %1340 = vrot.lane.b32.xlu0 %v1320, 24
  %v1341 = vpop.permute.xlu0 %1340
  %1342 = vrot.lane.b32.xlu0 %v1321, 24
  %v1343 = vpop.permute.xlu0 %1342
  %v1346 = vsel %vm414, %v630, %v1325
  %v1347 = vsel %vm414, %v631, %v1327
  %vm1348 = vcmask 130048
  %v1349 = vsel %vm1348, %v1346, %v1333
  %v1350 = vsel %vm1348, %v1347, %v1335
  %vm1351 = vcmask 195584
  %v1352 = vsel %vm1351, %v1349, %v1341
  %v1353 = vsel %vm1351, %v1350, %v1343
  %v1354 = vpack.c.bf16 %v1353, %v1352
  %v1355 = vld [vmem:[%s27] sm:$0xf]
  %v1356 = vld [vmem:[%s27 + $0x4] sm:$0xf]
  %v1357 = vld [vmem:[%s27 + $0x8] sm:$0xf]
  %v1358 = vld [vmem:[%s27 + $0xc] sm:$0xf]
  %v1359 = vld [vmem:[%s29] sm:$0x1]
  %v1361 = vlaneseq
  %v1362 = vshrl.u32 %v1361, 7
  %v1363 = vsub.s32 0, %v1362
  %v1364 = vrot.slane %v1359, %v1363
  %v1370 = vunpack.c.l.b16 %v1355
  %v1371 = vunpack.c.l.b16 %v1356
  %v1372 = vunpack.c.l.b16 %v1357
  %v1373 = vunpack.c.l.b16 %v1358
  %v1374 = vpack.c.b16 %v1371, %v1370
  %v1375 = vpack.c.b16 %v1373, %v1372
  %v1379 = vsel %vm217, %v1354, 0
  %1381 = vmatprep.subr.bf16.mxu0 0
  %1382 = vmatpush1.bf16.msra.mxu0 0
  %1383 = vmatprep.subr.bf16.mxu0 0
  %1384 = vmatpush1.bf16.msra.mxu0 0
  %1385 = vmatprep.subr.bf16.mxu0 0
  %1386 = vmatpush1.bf16.msra.mxu0 0
  %1387 = vmatprep.subr.bf16.mxu0 0
  %1388 = vmatpush1.bf16.msra.mxu0 0
  %1389 = vmatprep.subr.bf16.mxu0 0
  %1390 = vmatpush1.bf16.msra.mxu0 0
  %1391 = vmatprep.subr.bf16.mxu0 0
  %1392 = vmatpush1.bf16.msra.mxu0 0
  %1393 = vmatprep.subr.bf16.mxu0 0
  %1394 = vmatpush1.bf16.msra.mxu0 %v1375
  %1395 = vmatprep.subr.bf16.mxu0 0
  %1396 = vmatpush1.bf16.msra.mxu0 %v1374
  %1397 = vmatprep.subr.bf16.mxu0 0
  %1398 = vmatpush2.bf16.msra.mxu0 0
  %1399 = vmatprep.subr.bf16.mxu0 0
  %1400 = vmatpush2.bf16.msra.mxu0 0
  %1401 = vmatprep.subr.bf16.mxu0 0
  %1402 = vmatpush2.bf16.msra.mxu0 0
  %1403 = vmatprep.subr.bf16.mxu0 0
  %1404 = vmatpush2.bf16.msra.mxu0 0
  %1405 = vmatprep.subr.bf16.mxu0 0
  %1406 = vmatpush2.bf16.msra.mxu0 0
  %1407 = vmatprep.subr.bf16.mxu0 0
  %1408 = vmatpush2.bf16.msra.mxu0 0
  %1409 = vmatprep.subr.bf16.mxu0 0
  %1410 = vmatpush2.bf16.msra.mxu0 0
  %1411 = vmatprep.subr.bf16.mxu0 0
  %1412 = vmatpush2.bf16.msra.mxu0 0
  %1413 = vmatprep.mubr.bf16.mxu0 0
  %1414 = vmatmul.mubr.bf16.gmra.mxu0 %v1379
  %v1415 = vpop.f32.mrf.mxu0
  %v1416 = vadd.f32 %v1364, %v1415
  %v1417 = vpop.f32.mrf.mxu0
  %v1418 = vpop.f32.mrf.mxu0
  %v1419 = vadd.f32 %v1364, %v1418
  %v1420 = vpop.f32.mrf.mxu0
  %1421 = vdwg.mxu0
  %1423 = vset.pattern.permute.xlu0 0
  %1424 = vperm.xlu0 %1423, %v185
  %v1425 = vpop.permute.xlu0 %1424
  %1428 = vset.pattern.permute.xlu0 0
  %1429 = vperm.xlu0 %1428, %v186
  %v1430 = vpop.permute.xlu0 %1429
  %v1432 = vmul.f32 %v1416, %v1425
  %v1433 = vmul.f32 %v1419, %v1430
  %v1434 = vadd.f32 %v179, %v1432
  %v1435 = vadd.f32 %v180, %v1433
  %v1436 = vld [vmem:[%s31] sm:$0x1]
  %v1437 = vld [vmem:[%s33] sm:$0x1]
  %v1438 = vsel %vm217, %v1434, 0.0
  %1439 = vadd.xlane.f32.xlu0 %v1438
  %v1440 = vpop.xlane.xlu0 %1439
  %v1441 = vsel %vm217, %v1435, 0.0
  %1442 = vadd.xlane.f32.xlu0 %v1441
  %v1443 = vpop.xlane.xlu0 %1442
  %v1444 = vrcp.pop 32.0
  %v1445 = vmul.f32 %v1440, %v1444
  %v1446 = vmul.f32 %v1443, %v1444
  %v1447 = vsub.f32 %v1434, %v1445
  %v1448 = vsub.f32 %v1435, %v1446
  %v1449 = vmul.f32 %v1447, %v1447
  %v1450 = vmul.f32 %v1448, %v1448
  %v1451 = vsel %vm217, %v1449, 0.0
  %1452 = vadd.xlane.f32.xlu0 %v1451
  %v1453 = vpop.xlane.xlu0 %1452
  %v1454 = vsel %vm217, %v1450, 0.0
  %1455 = vadd.xlane.f32.xlu0 %v1454
  %v1456 = vpop.xlane.xlu0 %1455
  %v1457 = vmul.f32 %v1453, %v1444
  %v1458 = vmul.f32 %v1456, %v1444
  %v1459 = vadd.f32 %v1457, 1e-05
  %v1460 = vadd.f32 %v1458, 1e-05
  %v1461 = vrsqrt.pop %v1459
  %v1462 = vrsqrt.pop %v1460
  %v1463 = vmul.f32 %v1447, %v1461
  %v1464 = vmul.f32 %v1448, %v1462
  %v1466 = vlaneseq
  %v1467 = vshrl.u32 %v1466, 7
  %v1468 = vsub.s32 0, %v1467
  %v1469 = vrot.slane %v1436, %v1468
  %v1471 = vmul.f32 %v1463, %v1469
  %v1472 = vmul.f32 %v1464, %v1469
  %v1474 = vlaneseq
  %v1475 = vshrl.u32 %v1474, 7
  %v1476 = vsub.s32 0, %v1475
  %v1477 = vrot.slane %v1437, %v1476
  %v1479 = vadd.f32 %v1471, %v1477
  %v1480 = vadd.f32 %v1472, %v1477
  %v1481 = vpack.c.bf16 %v1480, %v1479
  %v1482 = vld [vmem:[%s35] sm:$0xf]
  %v1483 = vld [vmem:[%s35 + $0x4] sm:$0xf]
  %v1484 = vld [vmem:[%s35 + $0x8] sm:$0xf]
  %v1485 = vld [vmem:[%s35 + $0xc] sm:$0xf]
  %v1486 = vld [vmem:[%s37] sm:$0x1]
  %v1488 = vlaneseq
  %v1489 = vshrl.u32 %v1488, 7
  %v1490 = vsub.s32 0, %v1489
  %v1491 = vrot.slane %v1486, %v1490
  %v1497 = vunpack.c.l.b16 %v1482
  %v1498 = vunpack.c.l.b16 %v1483
  %v1499 = vunpack.c.l.b16 %v1484
  %v1500 = vunpack.c.l.b16 %v1485
  %v1501 = vpack.c.b16 %v1498, %v1497
  %v1502 = vpack.c.b16 %v1500, %v1499
  %v1506 = vsel %vm217, %v1481, 0
  %1508 = vmatprep.subr.bf16.mxu0 0
  %1509 = vmatpush1.bf16.msra.mxu0 0
  %1510 = vmatprep.subr.bf16.mxu0 0
  %1511 = vmatpush1.bf16.msra.mxu0 0
  %1512 = vmatprep.subr.bf16.mxu0 0
  %1513 = vmatpush1.bf16.msra.mxu0 0
  %1514 = vmatprep.subr.bf16.mxu0 0
  %1515 = vmatpush1.bf16.msra.mxu0 0
  %1516 = vmatprep.subr.bf16.mxu0 0
  %1517 = vmatpush1.bf16.msra.mxu0 0
  %1518 = vmatprep.subr.bf16.mxu0 0
  %1519 = vmatpush1.bf16.msra.mxu0 0
  %1520 = vmatprep.subr.bf16.mxu0 0
  %1521 = vmatpush1.bf16.msra.mxu0 %v1502
  %1522 = vmatprep.subr.bf16.mxu0 0
  %1523 = vmatpush1.bf16.msra.mxu0 %v1501
  %1524 = vmatprep.subr.bf16.mxu0 0
  %1525 = vmatpush2.bf16.msra.mxu0 0
  %1526 = vmatprep.subr.bf16.mxu0 0
  %1527 = vmatpush2.bf16.msra.mxu0 0
  %1528 = vmatprep.subr.bf16.mxu0 0
  %1529 = vmatpush2.bf16.msra.mxu0 0
  %1530 = vmatprep.subr.bf16.mxu0 0
  %1531 = vmatpush2.bf16.msra.mxu0 0
  %1532 = vmatprep.subr.bf16.mxu0 0
  %1533 = vmatpush2.bf16.msra.mxu0 0
  %1534 = vmatprep.subr.bf16.mxu0 0
  %1535 = vmatpush2.bf16.msra.mxu0 0
  %1536 = vmatprep.subr.bf16.mxu0 0
  %1537 = vmatpush2.bf16.msra.mxu0 0
  %1538 = vmatprep.subr.bf16.mxu0 0
  %1539 = vmatpush2.bf16.msra.mxu0 0
  %1540 = vmatprep.mubr.bf16.mxu0 0
  %1541 = vmatmul.mubr.bf16.gmra.mxu0 %v1506
  %v1542 = vpop.f32.mrf.mxu0
  %v1543 = vadd.f32 %v1491, %v1542
  %v1544 = vpop.f32.mrf.mxu0
  %v1545 = vpop.f32.mrf.mxu0
  %v1546 = vadd.f32 %v1491, %v1545
  %v1547 = vpop.f32.mrf.mxu0
  %1548 = vdwg.mxu0
  %v1549 = vpack.c.bf16 %v182, %v181
  %v1550 = vld [vmem:[%s39] sm:$0xf]
  %v1551 = vld [vmem:[%s39 + $0x4] sm:$0xf]
  %v1552 = vld [vmem:[%s39 + $0x8] sm:$0xf]
  %v1553 = vld [vmem:[%s39 + $0xc] sm:$0xf]
  %v1554 = vld [vmem:[%s41] sm:$0x1]
  %v1556 = vlaneseq
  %v1557 = vshrl.u32 %v1556, 7
  %v1558 = vsub.s32 0, %v1557
  %v1559 = vrot.slane %v1554, %v1558
  %v1565 = vunpack.c.l.b16 %v1550
  %v1566 = vunpack.c.l.b16 %v1551
  %v1567 = vunpack.c.l.b16 %v1552
  %v1568 = vunpack.c.l.b16 %v1553
  %v1569 = vpack.c.b16 %v1566, %v1565
  %v1570 = vpack.c.b16 %v1568, %v1567
  %v1574 = vsel %vm217, %v1549, 0
  %1576 = vmatprep.subr.bf16.mxu0 0
  %1577 = vmatpush1.bf16.msra.mxu0 0
  %1578 = vmatprep.subr.bf16.mxu0 0
  %1579 = vmatpush1.bf16.msra.mxu0 0
  %1580 = vmatprep.subr.bf16.mxu0 0
  %1581 = vmatpush1.bf16.msra.mxu0 0
  %1582 = vmatprep.subr.bf16.mxu0 0
  %1583 = vmatpush1.bf16.msra.mxu0 0
  %1584 = vmatprep.subr.bf16.mxu0 0
  %1585 = vmatpush1.bf16.msra.mxu0 0
  %1586 = vmatprep.subr.bf16.mxu0 0
  %1587 = vmatpush1.bf16.msra.mxu0 0
  %1588 = vmatprep.subr.bf16.mxu0 0
  %1589 = vmatpush1.bf16.msra.mxu0 %v1570
  %1590 = vmatprep.subr.bf16.mxu0 0
  %1591 = vmatpush1.bf16.msra.mxu0 %v1569
  %1592 = vmatprep.subr.bf16.mxu0 0
  %1593 = vmatpush2.bf16.msra.mxu0 0
  %1594 = vmatprep.subr.bf16.mxu0 0
  %1595 = vmatpush2.bf16.msra.mxu0 0
  %1596 = vmatprep.subr.bf16.mxu0 0
  %1597 = vmatpush2.bf16.msra.mxu0 0
  %1598 = vmatprep.subr.bf16.mxu0 0
  %1599 = vmatpush2.bf16.msra.mxu0 0
  %1600 = vmatprep.subr.bf16.mxu0 0
  %1601 = vmatpush2.bf16.msra.mxu0 0
  %1602 = vmatprep.subr.bf16.mxu0 0
  %1603 = vmatpush2.bf16.msra.mxu0 0
  %1604 = vmatprep.subr.bf16.mxu0 0
  %1605 = vmatpush2.bf16.msra.mxu0 0
  %1606 = vmatprep.subr.bf16.mxu0 0
  %1607 = vmatpush2.bf16.msra.mxu0 0
  %1608 = vmatprep.mubr.bf16.mxu0 0
  %1609 = vmatmul.mubr.bf16.gmra.mxu0 %v1574
  %v1610 = vpop.f32.mrf.mxu0
  %v1611 = vadd.f32 %v1559, %v1610
  %v1612 = vpop.f32.mrf.mxu0
  %v1613 = vpop.f32.mrf.mxu0
  %v1614 = vadd.f32 %v1559, %v1613
  %v1615 = vpop.f32.mrf.mxu0
  %1616 = vdwg.mxu0
  %v1617 = vld [vmem:[%s43] sm:$0xf]
  %v1618 = vld [vmem:[%s43 + $0x4] sm:$0xf]
  %v1619 = vld [vmem:[%s43 + $0x8] sm:$0xf]
  %v1620 = vld [vmem:[%s43 + $0xc] sm:$0xf]
  %v1621 = vld [vmem:[%s45] sm:$0x1]
  %v1623 = vlaneseq
  %v1624 = vshrl.u32 %v1623, 7
  %v1625 = vsub.s32 0, %v1624
  %v1626 = vrot.slane %v1621, %v1625
  %v1632 = vunpack.c.l.b16 %v1617
  %v1633 = vunpack.c.l.b16 %v1618
  %v1634 = vunpack.c.l.b16 %v1619
  %v1635 = vunpack.c.l.b16 %v1620
  %v1636 = vpack.c.b16 %v1633, %v1632
  %v1637 = vpack.c.b16 %v1635, %v1634
  %1640 = vmatprep.subr.bf16.mxu0 0
  %1641 = vmatpush1.bf16.msra.mxu0 0
  %1642 = vmatprep.subr.bf16.mxu0 0
  %1643 = vmatpush1.bf16.msra.mxu0 0
  %1644 = vmatprep.subr.bf16.mxu0 0
  %1645 = vmatpush1.bf16.msra.mxu0 0
  %1646 = vmatprep.subr.bf16.mxu0 0
  %1647 = vmatpush1.bf16.msra.mxu0 0
  %1648 = vmatprep.subr.bf16.mxu0 0
  %1649 = vmatpush1.bf16.msra.mxu0 0
  %1650 = vmatprep.subr.bf16.mxu0 0
  %1651 = vmatpush1.bf16.msra.mxu0 0
  %1652 = vmatprep.subr.bf16.mxu0 0
  %1653 = vmatpush1.bf16.msra.mxu0 %v1637
  %1654 = vmatprep.subr.bf16.mxu0 0
  %1655 = vmatpush1.bf16.msra.mxu0 %v1636
  %1656 = vmatprep.subr.bf16.mxu0 0
  %1657 = vmatpush2.bf16.msra.mxu0 0
  %1658 = vmatprep.subr.bf16.mxu0 0
  %1659 = vmatpush2.bf16.msra.mxu0 0
  %1660 = vmatprep.subr.bf16.mxu0 0
  %1661 = vmatpush2.bf16.msra.mxu0 0
  %1662 = vmatprep.subr.bf16.mxu0 0
  %1663 = vmatpush2.bf16.msra.mxu0 0
  %1664 = vmatprep.subr.bf16.mxu0 0
  %1665 = vmatpush2.bf16.msra.mxu0 0
  %1666 = vmatprep.subr.bf16.mxu0 0
  %1667 = vmatpush2.bf16.msra.mxu0 0
  %1668 = vmatprep.subr.bf16.mxu0 0
  %1669 = vmatpush2.bf16.msra.mxu0 0
  %1670 = vmatprep.subr.bf16.mxu0 0
  %1671 = vmatpush2.bf16.msra.mxu0 0
  %1672 = vmatprep.mubr.bf16.mxu0 0
  %1673 = vmatmul.mubr.bf16.gmra.mxu0 %v1574
  %v1674 = vpop.f32.mrf.mxu0
  %v1675 = vadd.f32 %v1626, %v1674
  %v1676 = vpop.f32.mrf.mxu0
  %v1677 = vpop.f32.mrf.mxu0
  %v1678 = vadd.f32 %v1626, %v1677
  %v1679 = vpop.f32.mrf.mxu0
  %1680 = vdwg.mxu0
  %v1681 = vpack.c.bf16 %v1543, %v1543
  %v1682 = vpack.c.bf16 %v1546, %v1546
  %v1683 = vpack.c.bf16 %v1611, %v1611
  %v1684 = vpack.c.bf16 %v1614, %v1614
  %v1685 = vpack.c.bf16 %v1675, %v1675
  %v1686 = vpack.c.bf16 %v1678, %v1678
  %v1689 = vlaneseq
  %v1690 = vshrl.u32 %v1689, 7
  %v1691 = vsub.s32 0, %v1690
  %v1692 = vrot.slane %v189, %v1691
  %v1693 = vlaneseq
  %v1694 = vshrl.u32 %v1693, 7
  %v1695 = vsub.s32 0, %v1694
  %v1696 = vrot.slane %v190, %v1695
  %v1700 = vsel %vm414, %v1681, 0
  %v1703 = vsel %vm414, %v1683, 0
  %1705 = vmatprep.subr.bf16.mxu0 0
  %1706 = vmatpush1.bf16.xpose.msra.mxu0 0
  %1707 = vmatprep.subr.bf16.mxu0 0
  %1708 = vmatpush1.bf16.xpose.msra.mxu0 0
  %1709 = vmatprep.subr.bf16.mxu0 0
  %1710 = vmatpush1.bf16.xpose.msra.mxu0 0
  %1711 = vmatprep.subr.bf16.mxu0 0
  %1712 = vmatpush1.bf16.xpose.msra.mxu0 0
  %1713 = vmatprep.subr.bf16.mxu0 0
  %1714 = vmatpush1.bf16.xpose.msra.mxu0 0
  %1715 = vmatprep.subr.bf16.mxu0 0
  %1716 = vmatpush1.bf16.xpose.msra.mxu0 0
  %1717 = vmatprep.subr.bf16.mxu0 0
  %1718 = vmatpush1.bf16.xpose.msra.mxu0 0
  %1719 = vmatprep.subr.bf16.mxu0 0
  %1720 = vmatpush1.bf16.xpose.msra.mxu0 %v1703
  %1721 = vmatprep.subr.bf16.mxu0 0
  %1722 = vmatpush2.bf16.xpose.msra.mxu0 0
  %1723 = vmatprep.subr.bf16.mxu0 0
  %1724 = vmatpush2.bf16.xpose.msra.mxu0 0
  %1725 = vmatprep.subr.bf16.mxu0 0
  %1726 = vmatpush2.bf16.xpose.msra.mxu0 0
  %1727 = vmatprep.subr.bf16.mxu0 0
  %1728 = vmatpush2.bf16.xpose.msra.mxu0 0
  %1729 = vmatprep.subr.bf16.mxu0 0
  %1730 = vmatpush2.bf16.xpose.msra.mxu0 0
  %1731 = vmatprep.subr.bf16.mxu0 0
  %1732 = vmatpush2.bf16.xpose.msra.mxu0 0
  %1733 = vmatprep.subr.bf16.mxu0 0
  %1734 = vmatpush2.bf16.xpose.msra.mxu0 0
  %1735 = vmatprep.subr.bf16.mxu0 0
  %1736 = vmatpush2.bf16.xpose.msra.mxu0 0
  %1737 = vmatprep.mubr.bf16.mxu0 0
  %1738 = vmatmul.mubr.bf16.gmra.mxu0 %v1700
  %v1739 = vpop.f32.mrf.mxu0
  %v1740 = vadd.f32 %v1692, %v1739
  %v1741 = vpop.f32.mrf.mxu0
  %v1742 = vpop.f32.mrf.mxu0
  %v1743 = vpop.f32.mrf.mxu0
  %1744 = vdwg.mxu0
  %v1746 = vsel %vm414, %v1682, 0
  %v1749 = vsel %vm414, %v1684, 0
  %1751 = vmatprep.subr.bf16.mxu0 0
  %1752 = vmatpush1.bf16.xpose.msra.mxu0 0
  %1753 = vmatprep.subr.bf16.mxu0 0
  %1754 = vmatpush1.bf16.xpose.msra.mxu0 0
  %1755 = vmatprep.subr.bf16.mxu0 0
  %1756 = vmatpush1.bf16.xpose.msra.mxu0 0
  %1757 = vmatprep.subr.bf16.mxu0 0
  %1758 = vmatpush1.bf16.xpose.msra.mxu0 0
  %1759 = vmatprep.subr.bf16.mxu0 0
  %1760 = vmatpush1.bf16.xpose.msra.mxu0 0
  %1761 = vmatprep.subr.bf16.mxu0 0
  %1762 = vmatpush1.bf16.xpose.msra.mxu0 0
  %1763 = vmatprep.subr.bf16.mxu0 0
  %1764 = vmatpush1.bf16.xpose.msra.mxu0 0
  %1765 = vmatprep.subr.bf16.mxu0 0
  %1766 = vmatpush1.bf16.xpose.msra.mxu0 %v1749
  %1767 = vmatprep.subr.bf16.mxu0 0
  %1768 = vmatpush2.bf16.xpose.msra.mxu0 0
  %1769 = vmatprep.subr.bf16.mxu0 0
  %1770 = vmatpush2.bf16.xpose.msra.mxu0 0
  %1771 = vmatprep.subr.bf16.mxu0 0
  %1772 = vmatpush2.bf16.xpose.msra.mxu0 0
  %1773 = vmatprep.subr.bf16.mxu0 0
  %1774 = vmatpush2.bf16.xpose.msra.mxu0 0
  %1775 = vmatprep.subr.bf16.mxu0 0
  %1776 = vmatpush2.bf16.xpose.msra.mxu0 0
  %1777 = vmatprep.subr.bf16.mxu0 0
  %1778 = vmatpush2.bf16.xpose.msra.mxu0 0
  %1779 = vmatprep.subr.bf16.mxu0 0
  %1780 = vmatpush2.bf16.xpose.msra.mxu0 0
  %1781 = vmatprep.subr.bf16.mxu0 0
  %1782 = vmatpush2.bf16.xpose.msra.mxu0 0
  %1783 = vmatprep.mubr.bf16.mxu0 0
  %1784 = vmatmul.mubr.bf16.gmra.mxu0 %v1746
  %v1785 = vpop.f32.mrf.mxu0
  %v1786 = vadd.f32 %v1696, %v1785
  %v1787 = vpop.f32.mrf.mxu0
  %v1788 = vpop.f32.mrf.mxu0
  %v1789 = vpop.f32.mrf.mxu0
  %1790 = vdwg.mxu0
  %v1791 = vsel %vm414, %v1740, -inf
  %1792 = vmax.xlane.f32.xlu0 %v1791
  %v1793 = vpop.xlane.xlu0 %1792
  %v1794 = vsel %vm414, %v1786, -inf
  %1795 = vmax.xlane.f32.xlu0 %v1794
  %v1796 = vpop.xlane.xlu0 %1795
  %v1797 = vmax.f32 %v1793, -1e+30
  %v1798 = vmax.f32 %v1796, -1e+30
  %v1799 = vsub.f32 %v1740, %v1797
  %v1800 = vsub.f32 %v1786, %v1798
  %v1801 = vmul.f32 %v1799, 1.442695
  %v1802 = vpow.pop %v1801
  %v1803 = vmul.f32 %v1800, 1.442695
  %v1804 = vpow.pop %v1803
  %v1805 = vsel %vm414, %v1802, 0.0
  %1806 = vadd.xlane.f32.xlu0 %v1805
  %v1807 = vpop.xlane.xlu0 %1806
  %v1808 = vsel %vm414, %v1804, 0.0
  %1809 = vadd.xlane.f32.xlu0 %v1808
  %v1810 = vpop.xlane.xlu0 %1809
  %v1811 = vpack.c.bf16 %v1802, %v1802
  %v1812 = vpack.c.bf16 %v1804, %v1804
  %v1814 = vsel %vm414, %v1811, 0
  %v1817 = vsel %vm534, %v1685, 0
  %1819 = vmatprep.subr.bf16.mxu0 0
  %1820 = vmatpush1.bf16.msra.mxu0 0
  %1821 = vmatprep.subr.bf16.mxu0 0
  %1822 = vmatpush1.bf16.msra.mxu0 0
  %1823 = vmatprep.subr.bf16.mxu0 0
  %1824 = vmatpush1.bf16.msra.mxu0 0
  %1825 = vmatprep.subr.bf16.mxu0 0
  %1826 = vmatpush1.bf16.msra.mxu0 0
  %1827 = vmatprep.subr.bf16.mxu0 0
  %1828 = vmatpush1.bf16.msra.mxu0 0
  %1829 = vmatprep.subr.bf16.mxu0 0
  %1830 = vmatpush1.bf16.msra.mxu0 0
  %1831 = vmatprep.subr.bf16.mxu0 0
  %1832 = vmatpush1.bf16.msra.mxu0 0
  %1833 = vmatprep.subr.bf16.mxu0 0
  %1834 = vmatpush1.bf16.msra.mxu0 %v1817
  %1835 = vmatprep.subr.bf16.mxu0 0
  %1836 = vmatpush2.bf16.msra.mxu0 0
  %1837 = vmatprep.subr.bf16.mxu0 0
  %1838 = vmatpush2.bf16.msra.mxu0 0
  %1839 = vmatprep.subr.bf16.mxu0 0
  %1840 = vmatpush2.bf16.msra.mxu0 0
  %1841 = vmatprep.subr.bf16.mxu0 0
  %1842 = vmatpush2.bf16.msra.mxu0 0
  %1843 = vmatprep.subr.bf16.mxu0 0
  %1844 = vmatpush2.bf16.msra.mxu0 0
  %1845 = vmatprep.subr.bf16.mxu0 0
  %1846 = vmatpush2.bf16.msra.mxu0 0
  %1847 = vmatprep.subr.bf16.mxu0 0
  %1848 = vmatpush2.bf16.msra.mxu0 0
  %1849 = vmatprep.subr.bf16.mxu0 0
  %1850 = vmatpush2.bf16.msra.mxu0 0
  %1851 = vmatprep.mubr.bf16.mxu0 0
  %1852 = vmatmul.mubr.bf16.gmra.mxu0 %v1814
  %v1853 = vpop.f32.mrf.mxu0
  %v1854 = vadd.f32 0.0, %v1853
  %v1855 = vpop.f32.mrf.mxu0
  %v1856 = vpop.f32.mrf.mxu0
  %v1857 = vpop.f32.mrf.mxu0
  %1858 = vdwg.mxu0
  %v1860 = vsel %vm414, %v1812, 0
  %v1863 = vsel %vm534, %v1686, 0
  %1865 = vmatprep.subr.bf16.mxu0 0
  %1866 = vmatpush1.bf16.msra.mxu0 0
  %1867 = vmatprep.subr.bf16.mxu0 0
  %1868 = vmatpush1.bf16.msra.mxu0 0
  %1869 = vmatprep.subr.bf16.mxu0 0
  %1870 = vmatpush1.bf16.msra.mxu0 0
  %1871 = vmatprep.subr.bf16.mxu0 0
  %1872 = vmatpush1.bf16.msra.mxu0 0
  %1873 = vmatprep.subr.bf16.mxu0 0
  %1874 = vmatpush1.bf16.msra.mxu0 0
  %1875 = vmatprep.subr.bf16.mxu0 0
  %1876 = vmatpush1.bf16.msra.mxu0 0
  %1877 = vmatprep.subr.bf16.mxu0 0
  %1878 = vmatpush1.bf16.msra.mxu0 0
  %1879 = vmatprep.subr.bf16.mxu0 0
  %1880 = vmatpush1.bf16.msra.mxu0 %v1863
  %1881 = vmatprep.subr.bf16.mxu0 0
  %1882 = vmatpush2.bf16.msra.mxu0 0
  %1883 = vmatprep.subr.bf16.mxu0 0
  %1884 = vmatpush2.bf16.msra.mxu0 0
  %1885 = vmatprep.subr.bf16.mxu0 0
  %1886 = vmatpush2.bf16.msra.mxu0 0
  %1887 = vmatprep.subr.bf16.mxu0 0
  %1888 = vmatpush2.bf16.msra.mxu0 0
  %1889 = vmatprep.subr.bf16.mxu0 0
  %1890 = vmatpush2.bf16.msra.mxu0 0
  %1891 = vmatprep.subr.bf16.mxu0 0
  %1892 = vmatpush2.bf16.msra.mxu0 0
  %1893 = vmatprep.subr.bf16.mxu0 0
  %1894 = vmatpush2.bf16.msra.mxu0 0
  %1895 = vmatprep.subr.bf16.mxu0 0
  %1896 = vmatpush2.bf16.msra.mxu0 0
  %1897 = vmatprep.mubr.bf16.mxu0 0
  %1898 = vmatmul.mubr.bf16.gmra.mxu0 %v1860
  %v1899 = vpop.f32.mrf.mxu0
  %v1900 = vadd.f32 0.0, %v1899
  %v1901 = vpop.f32.mrf.mxu0
  %v1902 = vpop.f32.mrf.mxu0
  %v1903 = vpop.f32.mrf.mxu0
  %1904 = vdwg.mxu0
  %vm1905 = vcmp.gt.f32.partialorder %v1807, 0.0
  %vm1906 = vcmp.gt.f32.partialorder %v1810, 0.0
  %v1907 = vrcp.pop %v1807
  %v1908 = vrcp.pop %v1810
  %v1909 = vsel %vm1905, %v1907, 0.0
  %v1910 = vsel %vm1906, %v1908, 0.0
  %v1911 = vmul.f32 %v1854, %v1909
  %v1912 = vmul.f32 %v1900, %v1910
  %1914 = vrot.lane.b32.xlu0 %v1681, 120
  %v1915 = vpop.permute.xlu0 %1914
  %1917 = vrot.lane.b32.xlu0 %v1683, 120
  %v1918 = vpop.permute.xlu0 %1917
  %v1920 = vsel %vm414, %v1915, 0
  %v1923 = vsel %vm414, %v1918, 0
  %1925 = vmatprep.subr.bf16.mxu0 0
  %1926 = vmatpush1.bf16.xpose.msra.mxu0 0
  %1927 = vmatprep.subr.bf16.mxu0 0
  %1928 = vmatpush1.bf16.xpose.msra.mxu0 0
  %1929 = vmatprep.subr.bf16.mxu0 0
  %1930 = vmatpush1.bf16.xpose.msra.mxu0 0
  %1931 = vmatprep.subr.bf16.mxu0 0
  %1932 = vmatpush1.bf16.xpose.msra.mxu0 0
  %1933 = vmatprep.subr.bf16.mxu0 0
  %1934 = vmatpush1.bf16.xpose.msra.mxu0 0
  %1935 = vmatprep.subr.bf16.mxu0 0
  %1936 = vmatpush1.bf16.xpose.msra.mxu0 0
  %1937 = vmatprep.subr.bf16.mxu0 0
  %1938 = vmatpush1.bf16.xpose.msra.mxu0 0
  %1939 = vmatprep.subr.bf16.mxu0 0
  %1940 = vmatpush1.bf16.xpose.msra.mxu0 %v1923
  %1941 = vmatprep.subr.bf16.mxu0 0
  %1942 = vmatpush2.bf16.xpose.msra.mxu0 0
  %1943 = vmatprep.subr.bf16.mxu0 0
  %1944 = vmatpush2.bf16.xpose.msra.mxu0 0
  %1945 = vmatprep.subr.bf16.mxu0 0
  %1946 = vmatpush2.bf16.xpose.msra.mxu0 0
  %1947 = vmatprep.subr.bf16.mxu0 0
  %1948 = vmatpush2.bf16.xpose.msra.mxu0 0
  %1949 = vmatprep.subr.bf16.mxu0 0
  %1950 = vmatpush2.bf16.xpose.msra.mxu0 0
  %1951 = vmatprep.subr.bf16.mxu0 0
  %1952 = vmatpush2.bf16.xpose.msra.mxu0 0
  %1953 = vmatprep.subr.bf16.mxu0 0
  %1954 = vmatpush2.bf16.xpose.msra.mxu0 0
  %1955 = vmatprep.subr.bf16.mxu0 0
  %1956 = vmatpush2.bf16.xpose.msra.mxu0 0
  %1957 = vmatprep.mubr.bf16.mxu0 0
  %1958 = vmatmul.mubr.bf16.gmra.mxu0 %v1920
  %v1959 = vpop.f32.mrf.mxu0
  %v1960 = vadd.f32 %v1692, %v1959
  %v1961 = vpop.f32.mrf.mxu0
  %v1962 = vpop.f32.mrf.mxu0
  %v1963 = vpop.f32.mrf.mxu0
  %1964 = vdwg.mxu0
  %1966 = vrot.lane.b32.xlu0 %v1682, 120
  %v1967 = vpop.permute.xlu0 %1966
  %1969 = vrot.lane.b32.xlu0 %v1684, 120
  %v1970 = vpop.permute.xlu0 %1969
  %v1972 = vsel %vm414, %v1967, 0
  %v1975 = vsel %vm414, %v1970, 0
  %1977 = vmatprep.subr.bf16.mxu0 0
  %1978 = vmatpush1.bf16.xpose.msra.mxu0 0
  %1979 = vmatprep.subr.bf16.mxu0 0
  %1980 = vmatpush1.bf16.xpose.msra.mxu0 0
  %1981 = vmatprep.subr.bf16.mxu0 0
  %1982 = vmatpush1.bf16.xpose.msra.mxu0 0
  %1983 = vmatprep.subr.bf16.mxu0 0
  %1984 = vmatpush1.bf16.xpose.msra.mxu0 0
  %1985 = vmatprep.subr.bf16.mxu0 0
  %1986 = vmatpush1.bf16.xpose.msra.mxu0 0
  %1987 = vmatprep.subr.bf16.mxu0 0
  %1988 = vmatpush1.bf16.xpose.msra.mxu0 0
  %1989 = vmatprep.subr.bf16.mxu0 0
  %1990 = vmatpush1.bf16.xpose.msra.mxu0 0
  %1991 = vmatprep.subr.bf16.mxu0 0
  %1992 = vmatpush1.bf16.xpose.msra.mxu0 %v1975
  %1993 = vmatprep.subr.bf16.mxu0 0
  %1994 = vmatpush2.bf16.xpose.msra.mxu0 0
  %1995 = vmatprep.subr.bf16.mxu0 0
  %1996 = vmatpush2.bf16.xpose.msra.mxu0 0
  %1997 = vmatprep.subr.bf16.mxu0 0
  %1998 = vmatpush2.bf16.xpose.msra.mxu0 0
  %1999 = vmatprep.subr.bf16.mxu0 0
  %2000 = vmatpush2.bf16.xpose.msra.mxu0 0
  %2001 = vmatprep.subr.bf16.mxu0 0
  %2002 = vmatpush2.bf16.xpose.msra.mxu0 0
  %2003 = vmatprep.subr.bf16.mxu0 0
  %2004 = vmatpush2.bf16.xpose.msra.mxu0 0
  %2005 = vmatprep.subr.bf16.mxu0 0
  %2006 = vmatpush2.bf16.xpose.msra.mxu0 0
  %2007 = vmatprep.subr.bf16.mxu0 0
  %2008 = vmatpush2.bf16.xpose.msra.mxu0 0
  %2009 = vmatprep.mubr.bf16.mxu0 0
  %2010 = vmatmul.mubr.bf16.gmra.mxu0 %v1972
  %v2011 = vpop.f32.mrf.mxu0
  %v2012 = vadd.f32 %v1696, %v2011
  %v2013 = vpop.f32.mrf.mxu0
  %v2014 = vpop.f32.mrf.mxu0
  %v2015 = vpop.f32.mrf.mxu0
  %2016 = vdwg.mxu0
  %v2017 = vsel %vm414, %v1960, -inf
  %2018 = vmax.xlane.f32.xlu0 %v2017
  %v2019 = vpop.xlane.xlu0 %2018
  %v2020 = vsel %vm414, %v2012, -inf
  %2021 = vmax.xlane.f32.xlu0 %v2020
  %v2022 = vpop.xlane.xlu0 %2021
  %v2023 = vmax.f32 %v2019, -1e+30
  %v2024 = vmax.f32 %v2022, -1e+30
  %v2025 = vsub.f32 %v1960, %v2023
  %v2026 = vsub.f32 %v2012, %v2024
  %v2027 = vmul.f32 %v2025, 1.442695
  %v2028 = vpow.pop %v2027
  %v2029 = vmul.f32 %v2026, 1.442695
  %v2030 = vpow.pop %v2029
  %v2031 = vsel %vm414, %v2028, 0.0
  %2032 = vadd.xlane.f32.xlu0 %v2031
  %v2033 = vpop.xlane.xlu0 %2032
  %v2034 = vsel %vm414, %v2030, 0.0
  %2035 = vadd.xlane.f32.xlu0 %v2034
  %v2036 = vpop.xlane.xlu0 %2035
  %v2037 = vpack.c.bf16 %v2028, %v2028
  %v2038 = vpack.c.bf16 %v2030, %v2030
  %2040 = vrot.lane.b32.xlu0 %v1685, 120
  %v2041 = vpop.permute.xlu0 %2040
  %v2043 = vsel %vm414, %v2037, 0
  %v2046 = vsel %vm534, %v2041, 0
  %2048 = vmatprep.subr.bf16.mxu0 0
  %2049 = vmatpush1.bf16.msra.mxu0 0
  %2050 = vmatprep.subr.bf16.mxu0 0
  %2051 = vmatpush1.bf16.msra.mxu0 0
  %2052 = vmatprep.subr.bf16.mxu0 0
  %2053 = vmatpush1.bf16.msra.mxu0 0
  %2054 = vmatprep.subr.bf16.mxu0 0
  %2055 = vmatpush1.bf16.msra.mxu0 0
  %2056 = vmatprep.subr.bf16.mxu0 0
  %2057 = vmatpush1.bf16.msra.mxu0 0
  %2058 = vmatprep.subr.bf16.mxu0 0
  %2059 = vmatpush1.bf16.msra.mxu0 0
  %2060 = vmatprep.subr.bf16.mxu0 0
  %2061 = vmatpush1.bf16.msra.mxu0 0
  %2062 = vmatprep.subr.bf16.mxu0 0
  %2063 = vmatpush1.bf16.msra.mxu0 %v2046
  %2064 = vmatprep.subr.bf16.mxu0 0
  %2065 = vmatpush2.bf16.msra.mxu0 0
  %2066 = vmatprep.subr.bf16.mxu0 0
  %2067 = vmatpush2.bf16.msra.mxu0 0
  %2068 = vmatprep.subr.bf16.mxu0 0
  %2069 = vmatpush2.bf16.msra.mxu0 0
  %2070 = vmatprep.subr.bf16.mxu0 0
  %2071 = vmatpush2.bf16.msra.mxu0 0
  %2072 = vmatprep.subr.bf16.mxu0 0
  %2073 = vmatpush2.bf16.msra.mxu0 0
  %2074 = vmatprep.subr.bf16.mxu0 0
  %2075 = vmatpush2.bf16.msra.mxu0 0
  %2076 = vmatprep.subr.bf16.mxu0 0
  %2077 = vmatpush2.bf16.msra.mxu0 0
  %2078 = vmatprep.subr.bf16.mxu0 0
  %2079 = vmatpush2.bf16.msra.mxu0 0
  %2080 = vmatprep.mubr.bf16.mxu0 0
  %2081 = vmatmul.mubr.bf16.gmra.mxu0 %v2043
  %v2082 = vpop.f32.mrf.mxu0
  %v2083 = vadd.f32 0.0, %v2082
  %v2084 = vpop.f32.mrf.mxu0
  %v2085 = vpop.f32.mrf.mxu0
  %v2086 = vpop.f32.mrf.mxu0
  %2087 = vdwg.mxu0
  %2089 = vrot.lane.b32.xlu0 %v1686, 120
  %v2090 = vpop.permute.xlu0 %2089
  %v2092 = vsel %vm414, %v2038, 0
  %v2095 = vsel %vm534, %v2090, 0
  %2097 = vmatprep.subr.bf16.mxu0 0
  %2098 = vmatpush1.bf16.msra.mxu0 0
  %2099 = vmatprep.subr.bf16.mxu0 0
  %2100 = vmatpush1.bf16.msra.mxu0 0
  %2101 = vmatprep.subr.bf16.mxu0 0
  %2102 = vmatpush1.bf16.msra.mxu0 0
  %2103 = vmatprep.subr.bf16.mxu0 0
  %2104 = vmatpush1.bf16.msra.mxu0 0
  %2105 = vmatprep.subr.bf16.mxu0 0
  %2106 = vmatpush1.bf16.msra.mxu0 0
  %2107 = vmatprep.subr.bf16.mxu0 0
  %2108 = vmatpush1.bf16.msra.mxu0 0
  %2109 = vmatprep.subr.bf16.mxu0 0
  %2110 = vmatpush1.bf16.msra.mxu0 0
  %2111 = vmatprep.subr.bf16.mxu0 0
  %2112 = vmatpush1.bf16.msra.mxu0 %v2095
  %2113 = vmatprep.subr.bf16.mxu0 0
  %2114 = vmatpush2.bf16.msra.mxu0 0
  %2115 = vmatprep.subr.bf16.mxu0 0
  %2116 = vmatpush2.bf16.msra.mxu0 0
  %2117 = vmatprep.subr.bf16.mxu0 0
  %2118 = vmatpush2.bf16.msra.mxu0 0
  %2119 = vmatprep.subr.bf16.mxu0 0
  %2120 = vmatpush2.bf16.msra.mxu0 0
  %2121 = vmatprep.subr.bf16.mxu0 0
  %2122 = vmatpush2.bf16.msra.mxu0 0
  %2123 = vmatprep.subr.bf16.mxu0 0
  %2124 = vmatpush2.bf16.msra.mxu0 0
  %2125 = vmatprep.subr.bf16.mxu0 0
  %2126 = vmatpush2.bf16.msra.mxu0 0
  %2127 = vmatprep.subr.bf16.mxu0 0
  %2128 = vmatpush2.bf16.msra.mxu0 0
  %2129 = vmatprep.mubr.bf16.mxu0 0
  %2130 = vmatmul.mubr.bf16.gmra.mxu0 %v2092
  %v2131 = vpop.f32.mrf.mxu0
  %v2132 = vadd.f32 0.0, %v2131
  %v2133 = vpop.f32.mrf.mxu0
  %v2134 = vpop.f32.mrf.mxu0
  %v2135 = vpop.f32.mrf.mxu0
  %2136 = vdwg.mxu0
  %vm2137 = vcmp.gt.f32.partialorder %v2033, 0.0
  %vm2138 = vcmp.gt.f32.partialorder %v2036, 0.0
  %v2139 = vrcp.pop %v2033
  %v2140 = vrcp.pop %v2036
  %v2141 = vsel %vm2137, %v2139, 0.0
  %v2142 = vsel %vm2138, %v2140, 0.0
  %v2143 = vmul.f32 %v2083, %v2141
  %v2144 = vmul.f32 %v2132, %v2142
  %2145 = vrot.lane.b32.xlu0 %v1681, 112
  %v2146 = vpop.permute.xlu0 %2145
  %2147 = vrot.lane.b32.xlu0 %v1683, 112
  %v2148 = vpop.permute.xlu0 %2147
  %v2150 = vsel %vm414, %v2146, 0
  %v2153 = vsel %vm414, %v2148, 0
  %2155 = vmatprep.subr.bf16.mxu0 0
  %2156 = vmatpush1.bf16.xpose.msra.mxu0 0
  %2157 = vmatprep.subr.bf16.mxu0 0
  %2158 = vmatpush1.bf16.xpose.msra.mxu0 0
  %2159 = vmatprep.subr.bf16.mxu0 0
  %2160 = vmatpush1.bf16.xpose.msra.mxu0 0
  %2161 = vmatprep.subr.bf16.mxu0 0
  %2162 = vmatpush1.bf16.xpose.msra.mxu0 0
  %2163 = vmatprep.subr.bf16.mxu0 0
  %2164 = vmatpush1.bf16.xpose.msra.mxu0 0
  %2165 = vmatprep.subr.bf16.mxu0 0
  %2166 = vmatpush1.bf16.xpose.msra.mxu0 0
  %2167 = vmatprep.subr.bf16.mxu0 0
  %2168 = vmatpush1.bf16.xpose.msra.mxu0 0
  %2169 = vmatprep.subr.bf16.mxu0 0
  %2170 = vmatpush1.bf16.xpose.msra.mxu0 %v2153
  %2171 = vmatprep.subr.bf16.mxu0 0
  %2172 = vmatpush2.bf16.xpose.msra.mxu0 0
  %2173 = vmatprep.subr.bf16.mxu0 0
  %2174 = vmatpush2.bf16.xpose.msra.mxu0 0
  %2175 = vmatprep.subr.bf16.mxu0 0
  %2176 = vmatpush2.bf16.xpose.msra.mxu0 0
  %2177 = vmatprep.subr.bf16.mxu0 0
  %2178 = vmatpush2.bf16.xpose.msra.mxu0 0
  %2179 = vmatprep.subr.bf16.mxu0 0
  %2180 = vmatpush2.bf16.xpose.msra.mxu0 0
  %2181 = vmatprep.subr.bf16.mxu0 0
  %2182 = vmatpush2.bf16.xpose.msra.mxu0 0
  %2183 = vmatprep.subr.bf16.mxu0 0
  %2184 = vmatpush2.bf16.xpose.msra.mxu0 0
  %2185 = vmatprep.subr.bf16.mxu0 0
  %2186 = vmatpush2.bf16.xpose.msra.mxu0 0
  %2187 = vmatprep.mubr.bf16.mxu0 0
  %2188 = vmatmul.mubr.bf16.gmra.mxu0 %v2150
  %v2189 = vpop.f32.mrf.mxu0
  %v2190 = vadd.f32 %v1692, %v2189
  %v2191 = vpop.f32.mrf.mxu0
  %v2192 = vpop.f32.mrf.mxu0
  %v2193 = vpop.f32.mrf.mxu0
  %2194 = vdwg.mxu0
  %2195 = vrot.lane.b32.xlu0 %v1682, 112
  %v2196 = vpop.permute.xlu0 %2195
  %2197 = vrot.lane.b32.xlu0 %v1684, 112
  %v2198 = vpop.permute.xlu0 %2197
  %v2200 = vsel %vm414, %v2196, 0
  %v2203 = vsel %vm414, %v2198, 0
  %2205 = vmatprep.subr.bf16.mxu0 0
  %2206 = vmatpush1.bf16.xpose.msra.mxu0 0
  %2207 = vmatprep.subr.bf16.mxu0 0
  %2208 = vmatpush1.bf16.xpose.msra.mxu0 0
  %2209 = vmatprep.subr.bf16.mxu0 0
  %2210 = vmatpush1.bf16.xpose.msra.mxu0 0
  %2211 = vmatprep.subr.bf16.mxu0 0
  %2212 = vmatpush1.bf16.xpose.msra.mxu0 0
  %2213 = vmatprep.subr.bf16.mxu0 0
  %2214 = vmatpush1.bf16.xpose.msra.mxu0 0
  %2215 = vmatprep.subr.bf16.mxu0 0
  %2216 = vmatpush1.bf16.xpose.msra.mxu0 0
  %2217 = vmatprep.subr.bf16.mxu0 0
  %2218 = vmatpush1.bf16.xpose.msra.mxu0 0
  %2219 = vmatprep.subr.bf16.mxu0 0
  %2220 = vmatpush1.bf16.xpose.msra.mxu0 %v2203
  %2221 = vmatprep.subr.bf16.mxu0 0
  %2222 = vmatpush2.bf16.xpose.msra.mxu0 0
  %2223 = vmatprep.subr.bf16.mxu0 0
  %2224 = vmatpush2.bf16.xpose.msra.mxu0 0
  %2225 = vmatprep.subr.bf16.mxu0 0
  %2226 = vmatpush2.bf16.xpose.msra.mxu0 0
  %2227 = vmatprep.subr.bf16.mxu0 0
  %2228 = vmatpush2.bf16.xpose.msra.mxu0 0
  %2229 = vmatprep.subr.bf16.mxu0 0
  %2230 = vmatpush2.bf16.xpose.msra.mxu0 0
  %2231 = vmatprep.subr.bf16.mxu0 0
  %2232 = vmatpush2.bf16.xpose.msra.mxu0 0
  %2233 = vmatprep.subr.bf16.mxu0 0
  %2234 = vmatpush2.bf16.xpose.msra.mxu0 0
  %2235 = vmatprep.subr.bf16.mxu0 0
  %2236 = vmatpush2.bf16.xpose.msra.mxu0 0
  %2237 = vmatprep.mubr.bf16.mxu0 0
  %2238 = vmatmul.mubr.bf16.gmra.mxu0 %v2200
  %v2239 = vpop.f32.mrf.mxu0
  %v2240 = vadd.f32 %v1696, %v2239
  %v2241 = vpop.f32.mrf.mxu0
  %v2242 = vpop.f32.mrf.mxu0
  %v2243 = vpop.f32.mrf.mxu0
  %2244 = vdwg.mxu0
  %v2245 = vsel %vm414, %v2190, -inf
  %2246 = vmax.xlane.f32.xlu0 %v2245
  %v2247 = vpop.xlane.xlu0 %2246
  %v2248 = vsel %vm414, %v2240, -inf
  %2249 = vmax.xlane.f32.xlu0 %v2248
  %v2250 = vpop.xlane.xlu0 %2249
  %v2251 = vmax.f32 %v2247, -1e+30
  %v2252 = vmax.f32 %v2250, -1e+30
  %v2253 = vsub.f32 %v2190, %v2251
  %v2254 = vsub.f32 %v2240, %v2252
  %v2255 = vmul.f32 %v2253, 1.442695
  %v2256 = vpow.pop %v2255
  %v2257 = vmul.f32 %v2254, 1.442695
  %v2258 = vpow.pop %v2257
  %v2259 = vsel %vm414, %v2256, 0.0
  %2260 = vadd.xlane.f32.xlu0 %v2259
  %v2261 = vpop.xlane.xlu0 %2260
  %v2262 = vsel %vm414, %v2258, 0.0
  %2263 = vadd.xlane.f32.xlu0 %v2262
  %v2264 = vpop.xlane.xlu0 %2263
  %v2265 = vpack.c.bf16 %v2256, %v2256
  %v2266 = vpack.c.bf16 %v2258, %v2258
  %2267 = vrot.lane.b32.xlu0 %v1685, 112
  %v2268 = vpop.permute.xlu0 %2267
  %v2270 = vsel %vm414, %v2265, 0
  %v2273 = vsel %vm534, %v2268, 0
  %2275 = vmatprep.subr.bf16.mxu0 0
  %2276 = vmatpush1.bf16.msra.mxu0 0
  %2277 = vmatprep.subr.bf16.mxu0 0
  %2278 = vmatpush1.bf16.msra.mxu0 0
  %2279 = vmatprep.subr.bf16.mxu0 0
  %2280 = vmatpush1.bf16.msra.mxu0 0
  %2281 = vmatprep.subr.bf16.mxu0 0
  %2282 = vmatpush1.bf16.msra.mxu0 0
  %2283 = vmatprep.subr.bf16.mxu0 0
  %2284 = vmatpush1.bf16.msra.mxu0 0
  %2285 = vmatprep.subr.bf16.mxu0 0
  %2286 = vmatpush1.bf16.msra.mxu0 0
  %2287 = vmatprep.subr.bf16.mxu0 0
  %2288 = vmatpush1.bf16.msra.mxu0 0
  %2289 = vmatprep.subr.bf16.mxu0 0
  %2290 = vmatpush1.bf16.msra.mxu0 %v2273
  %2291 = vmatprep.subr.bf16.mxu0 0
  %2292 = vmatpush2.bf16.msra.mxu0 0
  %2293 = vmatprep.subr.bf16.mxu0 0
  %2294 = vmatpush2.bf16.msra.mxu0 0
  %2295 = vmatprep.subr.bf16.mxu0 0
  %2296 = vmatpush2.bf16.msra.mxu0 0
  %2297 = vmatprep.subr.bf16.mxu0 0
  %2298 = vmatpush2.bf16.msra.mxu0 0
  %2299 = vmatprep.subr.bf16.mxu0 0
  %2300 = vmatpush2.bf16.msra.mxu0 0
  %2301 = vmatprep.subr.bf16.mxu0 0
  %2302 = vmatpush2.bf16.msra.mxu0 0
  %2303 = vmatprep.subr.bf16.mxu0 0
  %2304 = vmatpush2.bf16.msra.mxu0 0
  %2305 = vmatprep.subr.bf16.mxu0 0
  %2306 = vmatpush2.bf16.msra.mxu0 0
  %2307 = vmatprep.mubr.bf16.mxu0 0
  %2308 = vmatmul.mubr.bf16.gmra.mxu0 %v2270
  %v2309 = vpop.f32.mrf.mxu0
  %v2310 = vadd.f32 0.0, %v2309
  %v2311 = vpop.f32.mrf.mxu0
  %v2312 = vpop.f32.mrf.mxu0
  %v2313 = vpop.f32.mrf.mxu0
  %2314 = vdwg.mxu0
  %2315 = vrot.lane.b32.xlu0 %v1686, 112
  %v2316 = vpop.permute.xlu0 %2315
  %v2318 = vsel %vm414, %v2266, 0
  %v2321 = vsel %vm534, %v2316, 0
  %2323 = vmatprep.subr.bf16.mxu0 0
  %2324 = vmatpush1.bf16.msra.mxu0 0
  %2325 = vmatprep.subr.bf16.mxu0 0
  %2326 = vmatpush1.bf16.msra.mxu0 0
  %2327 = vmatprep.subr.bf16.mxu0 0
  %2328 = vmatpush1.bf16.msra.mxu0 0
  %2329 = vmatprep.subr.bf16.mxu0 0
  %2330 = vmatpush1.bf16.msra.mxu0 0
  %2331 = vmatprep.subr.bf16.mxu0 0
  %2332 = vmatpush1.bf16.msra.mxu0 0
  %2333 = vmatprep.subr.bf16.mxu0 0
  %2334 = vmatpush1.bf16.msra.mxu0 0
  %2335 = vmatprep.subr.bf16.mxu0 0
  %2336 = vmatpush1.bf16.msra.mxu0 0
  %2337 = vmatprep.subr.bf16.mxu0 0
  %2338 = vmatpush1.bf16.msra.mxu0 %v2321
  %2339 = vmatprep.subr.bf16.mxu0 0
  %2340 = vmatpush2.bf16.msra.mxu0 0
  %2341 = vmatprep.subr.bf16.mxu0 0
  %2342 = vmatpush2.bf16.msra.mxu0 0
  %2343 = vmatprep.subr.bf16.mxu0 0
  %2344 = vmatpush2.bf16.msra.mxu0 0
  %2345 = vmatprep.subr.bf16.mxu0 0
  %2346 = vmatpush2.bf16.msra.mxu0 0
  %2347 = vmatprep.subr.bf16.mxu0 0
  %2348 = vmatpush2.bf16.msra.mxu0 0
  %2349 = vmatprep.subr.bf16.mxu0 0
  %2350 = vmatpush2.bf16.msra.mxu0 0
  %2351 = vmatprep.subr.bf16.mxu0 0
  %2352 = vmatpush2.bf16.msra.mxu0 0
  %2353 = vmatprep.subr.bf16.mxu0 0
  %2354 = vmatpush2.bf16.msra.mxu0 0
  %2355 = vmatprep.mubr.bf16.mxu0 0
  %2356 = vmatmul.mubr.bf16.gmra.mxu0 %v2318
  %v2357 = vpop.f32.mrf.mxu0
  %v2358 = vadd.f32 0.0, %v2357
  %v2359 = vpop.f32.mrf.mxu0
  %v2360 = vpop.f32.mrf.mxu0
  %v2361 = vpop.f32.mrf.mxu0
  %2362 = vdwg.mxu0
  %vm2363 = vcmp.gt.f32.partialorder %v2261, 0.0
  %vm2364 = vcmp.gt.f32.partialorder %v2264, 0.0
  %v2365 = vrcp.pop %v2261
  %v2366 = vrcp.pop %v2264
  %v2367 = vsel %vm2363, %v2365, 0.0
  %v2368 = vsel %vm2364, %v2366, 0.0
  %v2369 = vmul.f32 %v2310, %v2367
  %v2370 = vmul.f32 %v2358, %v2368
  %2371 = vrot.lane.b32.xlu0 %v1681, 104
  %v2372 = vpop.permute.xlu0 %2371
  %2373 = vrot.lane.b32.xlu0 %v1683, 104
  %v2374 = vpop.permute.xlu0 %2373
  %v2376 = vsel %vm414, %v2372, 0
  %v2379 = vsel %vm414, %v2374, 0
  %2381 = vmatprep.subr.bf16.mxu0 0
  %2382 = vmatpush1.bf16.xpose.msra.mxu0 0
  %2383 = vmatprep.subr.bf16.mxu0 0
  %2384 = vmatpush1.bf16.xpose.msra.mxu0 0
  %2385 = vmatprep.subr.bf16.mxu0 0
  %2386 = vmatpush1.bf16.xpose.msra.mxu0 0
  %2387 = vmatprep.subr.bf16.mxu0 0
  %2388 = vmatpush1.bf16.xpose.msra.mxu0 0
  %2389 = vmatprep.subr.bf16.mxu0 0
  %2390 = vmatpush1.bf16.xpose.msra.mxu0 0
  %2391 = vmatprep.subr.bf16.mxu0 0
  %2392 = vmatpush1.bf16.xpose.msra.mxu0 0
  %2393 = vmatprep.subr.bf16.mxu0 0
  %2394 = vmatpush1.bf16.xpose.msra.mxu0 0
  %2395 = vmatprep.subr.bf16.mxu0 0
  %2396 = vmatpush1.bf16.xpose.msra.mxu0 %v2379
  %2397 = vmatprep.subr.bf16.mxu0 0
  %2398 = vmatpush2.bf16.xpose.msra.mxu0 0
  %2399 = vmatprep.subr.bf16.mxu0 0
  %2400 = vmatpush2.bf16.xpose.msra.mxu0 0
  %2401 = vmatprep.subr.bf16.mxu0 0
  %2402 = vmatpush2.bf16.xpose.msra.mxu0 0
  %2403 = vmatprep.subr.bf16.mxu0 0
  %2404 = vmatpush2.bf16.xpose.msra.mxu0 0
  %2405 = vmatprep.subr.bf16.mxu0 0
  %2406 = vmatpush2.bf16.xpose.msra.mxu0 0
  %2407 = vmatprep.subr.bf16.mxu0 0
  %2408 = vmatpush2.bf16.xpose.msra.mxu0 0
  %2409 = vmatprep.subr.bf16.mxu0 0
  %2410 = vmatpush2.bf16.xpose.msra.mxu0 0
  %2411 = vmatprep.subr.bf16.mxu0 0
  %2412 = vmatpush2.bf16.xpose.msra.mxu0 0
  %2413 = vmatprep.mubr.bf16.mxu0 0
  %2414 = vmatmul.mubr.bf16.gmra.mxu0 %v2376
  %v2415 = vpop.f32.mrf.mxu0
  %v2416 = vadd.f32 %v1692, %v2415
  %v2417 = vpop.f32.mrf.mxu0
  %v2418 = vpop.f32.mrf.mxu0
  %v2419 = vpop.f32.mrf.mxu0
  %2420 = vdwg.mxu0
  %2421 = vrot.lane.b32.xlu0 %v1682, 104
  %v2422 = vpop.permute.xlu0 %2421
  %2423 = vrot.lane.b32.xlu0 %v1684, 104
  %v2424 = vpop.permute.xlu0 %2423
  %v2426 = vsel %vm414, %v2422, 0
  %v2429 = vsel %vm414, %v2424, 0
  %2431 = vmatprep.subr.bf16.mxu0 0
  %2432 = vmatpush1.bf16.xpose.msra.mxu0 0
  %2433 = vmatprep.subr.bf16.mxu0 0
  %2434 = vmatpush1.bf16.xpose.msra.mxu0 0
  %2435 = vmatprep.subr.bf16.mxu0 0
  %2436 = vmatpush1.bf16.xpose.msra.mxu0 0
  %2437 = vmatprep.subr.bf16.mxu0 0
  %2438 = vmatpush1.bf16.xpose.msra.mxu0 0
  %2439 = vmatprep.subr.bf16.mxu0 0
  %2440 = vmatpush1.bf16.xpose.msra.mxu0 0
  %2441 = vmatprep.subr.bf16.mxu0 0
  %2442 = vmatpush1.bf16.xpose.msra.mxu0 0
  %2443 = vmatprep.subr.bf16.mxu0 0
  %2444 = vmatpush1.bf16.xpose.msra.mxu0 0
  %2445 = vmatprep.subr.bf16.mxu0 0
  %2446 = vmatpush1.bf16.xpose.msra.mxu0 %v2429
  %2447 = vmatprep.subr.bf16.mxu0 0
  %2448 = vmatpush2.bf16.xpose.msra.mxu0 0
  %2449 = vmatprep.subr.bf16.mxu0 0
  %2450 = vmatpush2.bf16.xpose.msra.mxu0 0
  %2451 = vmatprep.subr.bf16.mxu0 0
  %2452 = vmatpush2.bf16.xpose.msra.mxu0 0
  %2453 = vmatprep.subr.bf16.mxu0 0
  %2454 = vmatpush2.bf16.xpose.msra.mxu0 0
  %2455 = vmatprep.subr.bf16.mxu0 0
  %2456 = vmatpush2.bf16.xpose.msra.mxu0 0
  %2457 = vmatprep.subr.bf16.mxu0 0
  %2458 = vmatpush2.bf16.xpose.msra.mxu0 0
  %2459 = vmatprep.subr.bf16.mxu0 0
  %2460 = vmatpush2.bf16.xpose.msra.mxu0 0
  %2461 = vmatprep.subr.bf16.mxu0 0
  %2462 = vmatpush2.bf16.xpose.msra.mxu0 0
  %2463 = vmatprep.mubr.bf16.mxu0 0
  %2464 = vmatmul.mubr.bf16.gmra.mxu0 %v2426
  %v2465 = vpop.f32.mrf.mxu0
  %v2466 = vadd.f32 %v1696, %v2465
  %v2467 = vpop.f32.mrf.mxu0
  %v2468 = vpop.f32.mrf.mxu0
  %v2469 = vpop.f32.mrf.mxu0
  %2470 = vdwg.mxu0
  %v2471 = vsel %vm414, %v2416, -inf
  %2472 = vmax.xlane.f32.xlu0 %v2471
  %v2473 = vpop.xlane.xlu0 %2472
  %v2474 = vsel %vm414, %v2466, -inf
  %2475 = vmax.xlane.f32.xlu0 %v2474
  %v2476 = vpop.xlane.xlu0 %2475
  %v2477 = vmax.f32 %v2473, -1e+30
  %v2478 = vmax.f32 %v2476, -1e+30
  %v2479 = vsub.f32 %v2416, %v2477
  %v2480 = vsub.f32 %v2466, %v2478
  %v2481 = vmul.f32 %v2479, 1.442695
  %v2482 = vpow.pop %v2481
  %v2483 = vmul.f32 %v2480, 1.442695
  %v2484 = vpow.pop %v2483
  %v2485 = vsel %vm414, %v2482, 0.0
  %2486 = vadd.xlane.f32.xlu0 %v2485
  %v2487 = vpop.xlane.xlu0 %2486
  %v2488 = vsel %vm414, %v2484, 0.0
  %2489 = vadd.xlane.f32.xlu0 %v2488
  %v2490 = vpop.xlane.xlu0 %2489
  %v2491 = vpack.c.bf16 %v2482, %v2482
  %v2492 = vpack.c.bf16 %v2484, %v2484
  %2493 = vrot.lane.b32.xlu0 %v1685, 104
  %v2494 = vpop.permute.xlu0 %2493
  %v2496 = vsel %vm414, %v2491, 0
  %v2499 = vsel %vm534, %v2494, 0
  %2501 = vmatprep.subr.bf16.mxu0 0
  %2502 = vmatpush1.bf16.msra.mxu0 0
  %2503 = vmatprep.subr.bf16.mxu0 0
  %2504 = vmatpush1.bf16.msra.mxu0 0
  %2505 = vmatprep.subr.bf16.mxu0 0
  %2506 = vmatpush1.bf16.msra.mxu0 0
  %2507 = vmatprep.subr.bf16.mxu0 0
  %2508 = vmatpush1.bf16.msra.mxu0 0
  %2509 = vmatprep.subr.bf16.mxu0 0
  %2510 = vmatpush1.bf16.msra.mxu0 0
  %2511 = vmatprep.subr.bf16.mxu0 0
  %2512 = vmatpush1.bf16.msra.mxu0 0
  %2513 = vmatprep.subr.bf16.mxu0 0
  %2514 = vmatpush1.bf16.msra.mxu0 0
  %2515 = vmatprep.subr.bf16.mxu0 0
  %2516 = vmatpush1.bf16.msra.mxu0 %v2499
  %2517 = vmatprep.subr.bf16.mxu0 0
  %2518 = vmatpush2.bf16.msra.mxu0 0
  %2519 = vmatprep.subr.bf16.mxu0 0
  %2520 = vmatpush2.bf16.msra.mxu0 0
  %2521 = vmatprep.subr.bf16.mxu0 0
  %2522 = vmatpush2.bf16.msra.mxu0 0
  %2523 = vmatprep.subr.bf16.mxu0 0
  %2524 = vmatpush2.bf16.msra.mxu0 0
  %2525 = vmatprep.subr.bf16.mxu0 0
  %2526 = vmatpush2.bf16.msra.mxu0 0
  %2527 = vmatprep.subr.bf16.mxu0 0
  %2528 = vmatpush2.bf16.msra.mxu0 0
  %2529 = vmatprep.subr.bf16.mxu0 0
  %2530 = vmatpush2.bf16.msra.mxu0 0
  %2531 = vmatprep.subr.bf16.mxu0 0
  %2532 = vmatpush2.bf16.msra.mxu0 0
  %2533 = vmatprep.mubr.bf16.mxu0 0
  %2534 = vmatmul.mubr.bf16.gmra.mxu0 %v2496
  %v2535 = vpop.f32.mrf.mxu0
  %v2536 = vadd.f32 0.0, %v2535
  %v2537 = vpop.f32.mrf.mxu0
  %v2538 = vpop.f32.mrf.mxu0
  %v2539 = vpop.f32.mrf.mxu0
  %2540 = vdwg.mxu0
  %2541 = vrot.lane.b32.xlu0 %v1686, 104
  %v2542 = vpop.permute.xlu0 %2541
  %v2544 = vsel %vm414, %v2492, 0
  %v2547 = vsel %vm534, %v2542, 0
  %2549 = vmatprep.subr.bf16.mxu0 0
  %2550 = vmatpush1.bf16.msra.mxu0 0
  %2551 = vmatprep.subr.bf16.mxu0 0
  %2552 = vmatpush1.bf16.msra.mxu0 0
  %2553 = vmatprep.subr.bf16.mxu0 0
  %2554 = vmatpush1.bf16.msra.mxu0 0
  %2555 = vmatprep.subr.bf16.mxu0 0
  %2556 = vmatpush1.bf16.msra.mxu0 0
  %2557 = vmatprep.subr.bf16.mxu0 0
  %2558 = vmatpush1.bf16.msra.mxu0 0
  %2559 = vmatprep.subr.bf16.mxu0 0
  %2560 = vmatpush1.bf16.msra.mxu0 0
  %2561 = vmatprep.subr.bf16.mxu0 0
  %2562 = vmatpush1.bf16.msra.mxu0 0
  %2563 = vmatprep.subr.bf16.mxu0 0
  %2564 = vmatpush1.bf16.msra.mxu0 %v2547
  %2565 = vmatprep.subr.bf16.mxu0 0
  %2566 = vmatpush2.bf16.msra.mxu0 0
  %2567 = vmatprep.subr.bf16.mxu0 0
  %2568 = vmatpush2.bf16.msra.mxu0 0
  %2569 = vmatprep.subr.bf16.mxu0 0
  %2570 = vmatpush2.bf16.msra.mxu0 0
  %2571 = vmatprep.subr.bf16.mxu0 0
  %2572 = vmatpush2.bf16.msra.mxu0 0
  %2573 = vmatprep.subr.bf16.mxu0 0
  %2574 = vmatpush2.bf16.msra.mxu0 0
  %2575 = vmatprep.subr.bf16.mxu0 0
  %2576 = vmatpush2.bf16.msra.mxu0 0
  %2577 = vmatprep.subr.bf16.mxu0 0
  %2578 = vmatpush2.bf16.msra.mxu0 0
  %2579 = vmatprep.subr.bf16.mxu0 0
  %2580 = vmatpush2.bf16.msra.mxu0 0
  %2581 = vmatprep.mubr.bf16.mxu0 0
  %2582 = vmatmul.mubr.bf16.gmra.mxu0 %v2544
  %v2583 = vpop.f32.mrf.mxu0
  %v2584 = vadd.f32 0.0, %v2583
  %v2585 = vpop.f32.mrf.mxu0
  %v2586 = vpop.f32.mrf.mxu0
  %v2587 = vpop.f32.mrf.mxu0
  %2588 = vdwg.mxu0
  %vm2589 = vcmp.gt.f32.partialorder %v2487, 0.0
  %vm2590 = vcmp.gt.f32.partialorder %v2490, 0.0
  %v2591 = vrcp.pop %v2487
  %v2592 = vrcp.pop %v2490
  %v2593 = vsel %vm2589, %v2591, 0.0
  %v2594 = vsel %vm2590, %v2592, 0.0
  %v2595 = vmul.f32 %v2536, %v2593
  %v2596 = vmul.f32 %v2584, %v2594
  %2599 = vrot.lane.b32.xlu0 %v2143, 8
  %v2600 = vpop.permute.xlu0 %2599
  %2601 = vrot.lane.b32.xlu0 %v2144, 8
  %v2602 = vpop.permute.xlu0 %2601
  %2607 = vrot.lane.b32.xlu0 %v2369, 16
  %v2608 = vpop.permute.xlu0 %2607
  %2609 = vrot.lane.b32.xlu0 %v2370, 16
  %v2610 = vpop.permute.xlu0 %2609
  %2615 = vrot.lane.b32.xlu0 %v2595, 24
  %v2616 = vpop.permute.xlu0 %2615
  %2617 = vrot.lane.b32.xlu0 %v2596, 24
  %v2618 = vpop.permute.xlu0 %2617
  %v2621 = vsel %vm414, %v1911, %v2600
  %v2622 = vsel %vm414, %v1912, %v2602
  %v2623 = vsel %vm1348, %v2621, %v2608
  %v2624 = vsel %vm1348, %v2622, %v2610
  %v2625 = vsel %vm1351, %v2623, %v2616
  %v2626 = vsel %vm1351, %v2624, %v2618
  %v2627 = vpack.c.bf16 %v2626, %v2625
  %v2628 = vld [vmem:[%s47] sm:$0xf]
  %v2629 = vld [vmem:[%s47 + $0x4] sm:$0xf]
  %v2630 = vld [vmem:[%s47 + $0x8] sm:$0xf]
  %v2631 = vld [vmem:[%s47 + $0xc] sm:$0xf]
  %v2632 = vld [vmem:[%s49] sm:$0x1]
  %v2634 = vlaneseq
  %v2635 = vshrl.u32 %v2634, 7
  %v2636 = vsub.s32 0, %v2635
  %v2637 = vrot.slane %v2632, %v2636
  %v2643 = vunpack.c.l.b16 %v2628
  %v2644 = vunpack.c.l.b16 %v2629
  %v2645 = vunpack.c.l.b16 %v2630
  %v2646 = vunpack.c.l.b16 %v2631
  %v2647 = vpack.c.b16 %v2644, %v2643
  %v2648 = vpack.c.b16 %v2646, %v2645
  %v2652 = vsel %vm217, %v2627, 0
  %2654 = vmatprep.subr.bf16.mxu0 0
  %2655 = vmatpush1.bf16.msra.mxu0 0
  %2656 = vmatprep.subr.bf16.mxu0 0
  %2657 = vmatpush1.bf16.msra.mxu0 0
  %2658 = vmatprep.subr.bf16.mxu0 0
  %2659 = vmatpush1.bf16.msra.mxu0 0
  %2660 = vmatprep.subr.bf16.mxu0 0
  %2661 = vmatpush1.bf16.msra.mxu0 0
  %2662 = vmatprep.subr.bf16.mxu0 0
  %2663 = vmatpush1.bf16.msra.mxu0 0
  %2664 = vmatprep.subr.bf16.mxu0 0
  %2665 = vmatpush1.bf16.msra.mxu0 0
  %2666 = vmatprep.subr.bf16.mxu0 0
  %2667 = vmatpush1.bf16.msra.mxu0 %v2648
  %2668 = vmatprep.subr.bf16.mxu0 0
  %2669 = vmatpush1.bf16.msra.mxu0 %v2647
  %2670 = vmatprep.subr.bf16.mxu0 0
  %2671 = vmatpush2.bf16.msra.mxu0 0
  %2672 = vmatprep.subr.bf16.mxu0 0
  %2673 = vmatpush2.bf16.msra.mxu0 0
  %2674 = vmatprep.subr.bf16.mxu0 0
  %2675 = vmatpush2.bf16.msra.mxu0 0
  %2676 = vmatprep.subr.bf16.mxu0 0
  %2677 = vmatpush2.bf16.msra.mxu0 0
  %2678 = vmatprep.subr.bf16.mxu0 0
  %2679 = vmatpush2.bf16.msra.mxu0 0
  %2680 = vmatprep.subr.bf16.mxu0 0
  %2681 = vmatpush2.bf16.msra.mxu0 0
  %2682 = vmatprep.subr.bf16.mxu0 0
  %2683 = vmatpush2.bf16.msra.mxu0 0
  %2684 = vmatprep.subr.bf16.mxu0 0
  %2685 = vmatpush2.bf16.msra.mxu0 0
  %2686 = vmatprep.mubr.bf16.mxu0 0
  %2687 = vmatmul.mubr.bf16.gmra.mxu0 %v2652
  %v2688 = vpop.f32.mrf.mxu0
  %v2689 = vadd.f32 %v2637, %v2688
  %v2690 = vpop.f32.mrf.mxu0
  %v2691 = vpop.f32.mrf.mxu0
  %v2692 = vadd.f32 %v2637, %v2691
  %v2693 = vpop.f32.mrf.mxu0
  %2694 = vdwg.mxu0
  %v2695 = vmul.f32 %v2689, %v1425
  %v2696 = vmul.f32 %v2692, %v1430
  %v2697 = vadd.f32 %v1479, %v2695
  %v2698 = vadd.f32 %v1480, %v2696
  %v2699 = vld [vmem:[%s51] sm:$0x1]
  %v2700 = vld [vmem:[%s53] sm:$0x1]
  %v2701 = vsel %vm217, %v2697, 0.0
  %2702 = vadd.xlane.f32.xlu0 %v2701
  %v2703 = vpop.xlane.xlu0 %2702
  %v2704 = vsel %vm217, %v2698, 0.0
  %2705 = vadd.xlane.f32.xlu0 %v2704
  %v2706 = vpop.xlane.xlu0 %2705
  %v2707 = vmul.f32 %v2703, %v1444
  %v2708 = vmul.f32 %v2706, %v1444
  %v2709 = vsub.f32 %v2697, %v2707
  %v2710 = vsub.f32 %v2698, %v2708
  %v2711 = vmul.f32 %v2709, %v2709
  %v2712 = vmul.f32 %v2710, %v2710
  %v2713 = vsel %vm217, %v2711, 0.0
  %2714 = vadd.xlane.f32.xlu0 %v2713
  %v2715 = vpop.xlane.xlu0 %2714
  %v2716 = vsel %vm217, %v2712, 0.0
  %2717 = vadd.xlane.f32.xlu0 %v2716
  %v2718 = vpop.xlane.xlu0 %2717
  %v2719 = vmul.f32 %v2715, %v1444
  %v2720 = vmul.f32 %v2718, %v1444
  %v2721 = vadd.f32 %v2719, 1e-05
  %v2722 = vadd.f32 %v2720, 1e-05
  %v2723 = vrsqrt.pop %v2721
  %v2724 = vrsqrt.pop %v2722
  %v2725 = vmul.f32 %v2709, %v2723
  %v2726 = vmul.f32 %v2710, %v2724
  %v2728 = vlaneseq
  %v2729 = vshrl.u32 %v2728, 7
  %v2730 = vsub.s32 0, %v2729
  %v2731 = vrot.slane %v2699, %v2730
  %v2733 = vmul.f32 %v2725, %v2731
  %v2734 = vmul.f32 %v2726, %v2731
  %v2736 = vlaneseq
  %v2737 = vshrl.u32 %v2736, 7
  %v2738 = vsub.s32 0, %v2737
  %v2739 = vrot.slane %v2700, %v2738
  %v2741 = vadd.f32 %v2733, %v2739
  %v2742 = vadd.f32 %v2734, %v2739
  %v2743 = vpack.c.bf16 %v2742, %v2741
  %v2744 = vld [vmem:[%s55] sm:$0xf]
  %v2745 = vld [vmem:[%s55 + $0x4] sm:$0xf]
  %v2746 = vld [vmem:[%s55 + $0x8] sm:$0xf]
  %v2747 = vld [vmem:[%s55 + $0xc] sm:$0xf]
  %v2748 = vld [vmem:[%s57] sm:$0x1]
  %v2750 = vlaneseq
  %v2751 = vshrl.u32 %v2750, 7
  %v2752 = vsub.s32 0, %v2751
  %v2753 = vrot.slane %v2748, %v2752
  %v2759 = vunpack.c.l.b16 %v2744
  %v2760 = vunpack.c.l.b16 %v2745
  %v2761 = vunpack.c.l.b16 %v2746
  %v2762 = vunpack.c.l.b16 %v2747
  %v2763 = vpack.c.b16 %v2760, %v2759
  %v2764 = vpack.c.b16 %v2762, %v2761
  %v2768 = vsel %vm217, %v2743, 0
  %2770 = vmatprep.subr.bf16.mxu0 0
  %2771 = vmatpush1.bf16.msra.mxu0 0
  %2772 = vmatprep.subr.bf16.mxu0 0
  %2773 = vmatpush1.bf16.msra.mxu0 0
  %2774 = vmatprep.subr.bf16.mxu0 0
  %2775 = vmatpush1.bf16.msra.mxu0 0
  %2776 = vmatprep.subr.bf16.mxu0 0
  %2777 = vmatpush1.bf16.msra.mxu0 0
  %2778 = vmatprep.subr.bf16.mxu0 0
  %2779 = vmatpush1.bf16.msra.mxu0 0
  %2780 = vmatprep.subr.bf16.mxu0 0
  %2781 = vmatpush1.bf16.msra.mxu0 0
  %2782 = vmatprep.subr.bf16.mxu0 0
  %2783 = vmatpush1.bf16.msra.mxu0 %v2764
  %2784 = vmatprep.subr.bf16.mxu0 0
  %2785 = vmatpush1.bf16.msra.mxu0 %v2763
  %2786 = vmatprep.subr.bf16.mxu0 0
  %2787 = vmatpush2.bf16.msra.mxu0 0
  %2788 = vmatprep.subr.bf16.mxu0 0
  %2789 = vmatpush2.bf16.msra.mxu0 0
  %2790 = vmatprep.subr.bf16.mxu0 0
  %2791 = vmatpush2.bf16.msra.mxu0 0
  %2792 = vmatprep.subr.bf16.mxu0 0
  %2793 = vmatpush2.bf16.msra.mxu0 0
  %2794 = vmatprep.subr.bf16.mxu0 0
  %2795 = vmatpush2.bf16.msra.mxu0 0
  %2796 = vmatprep.subr.bf16.mxu0 0
  %2797 = vmatpush2.bf16.msra.mxu0 0
  %2798 = vmatprep.subr.bf16.mxu0 0
  %2799 = vmatpush2.bf16.msra.mxu0 0
  %2800 = vmatprep.subr.bf16.mxu0 0
  %2801 = vmatpush2.bf16.msra.mxu0 0
  %2802 = vmatprep.mubr.bf16.mxu0 0
  %2803 = vmatmul.mubr.bf16.gmra.mxu0 %v2768
  %v2804 = vpop.f32.mrf.mxu0
  %v2805 = vadd.f32 %v2753, %v2804
  %v2806 = vpop.f32.mrf.mxu0
  %v2807 = vpop.f32.mrf.mxu0
  %v2808 = vadd.f32 %v2753, %v2807
  %v2809 = vpop.f32.mrf.mxu0
  %2810 = vdwg.mxu0
  %v2811 = vpack.c.bf16 %v184, %v183
  %v2812 = vld [vmem:[%s59] sm:$0xf]
  %v2813 = vld [vmem:[%s59 + $0x4] sm:$0xf]
  %v2814 = vld [vmem:[%s59 + $0x8] sm:$0xf]
  %v2815 = vld [vmem:[%s59 + $0xc] sm:$0xf]
  %v2816 = vld [vmem:[%s61] sm:$0x1]
  %v2818 = vlaneseq
  %v2819 = vshrl.u32 %v2818, 7
  %v2820 = vsub.s32 0, %v2819
  %v2821 = vrot.slane %v2816, %v2820
  %v2827 = vunpack.c.l.b16 %v2812
  %v2828 = vunpack.c.l.b16 %v2813
  %v2829 = vunpack.c.l.b16 %v2814
  %v2830 = vunpack.c.l.b16 %v2815
  %v2831 = vpack.c.b16 %v2828, %v2827
  %v2832 = vpack.c.b16 %v2830, %v2829
  %v2836 = vsel %vm217, %v2811, 0
  %2838 = vmatprep.subr.bf16.mxu0 0
  %2839 = vmatpush1.bf16.msra.mxu0 0
  %2840 = vmatprep.subr.bf16.mxu0 0
  %2841 = vmatpush1.bf16.msra.mxu0 0
  %2842 = vmatprep.subr.bf16.mxu0 0
  %2843 = vmatpush1.bf16.msra.mxu0 0
  %2844 = vmatprep.subr.bf16.mxu0 0
  %2845 = vmatpush1.bf16.msra.mxu0 0
  %2846 = vmatprep.subr.bf16.mxu0 0
  %2847 = vmatpush1.bf16.msra.mxu0 0
  %2848 = vmatprep.subr.bf16.mxu0 0
  %2849 = vmatpush1.bf16.msra.mxu0 0
  %2850 = vmatprep.subr.bf16.mxu0 0
  %2851 = vmatpush1.bf16.msra.mxu0 %v2832
  %2852 = vmatprep.subr.bf16.mxu0 0
  %2853 = vmatpush1.bf16.msra.mxu0 %v2831
  %2854 = vmatprep.subr.bf16.mxu0 0
  %2855 = vmatpush2.bf16.msra.mxu0 0
  %2856 = vmatprep.subr.bf16.mxu0 0
  %2857 = vmatpush2.bf16.msra.mxu0 0
  %2858 = vmatprep.subr.bf16.mxu0 0
  %2859 = vmatpush2.bf16.msra.mxu0 0
  %2860 = vmatprep.subr.bf16.mxu0 0
  %2861 = vmatpush2.bf16.msra.mxu0 0
  %2862 = vmatprep.subr.bf16.mxu0 0
  %2863 = vmatpush2.bf16.msra.mxu0 0
  %2864 = vmatprep.subr.bf16.mxu0 0
  %2865 = vmatpush2.bf16.msra.mxu0 0
  %2866 = vmatprep.subr.bf16.mxu0 0
  %2867 = vmatpush2.bf16.msra.mxu0 0
  %2868 = vmatprep.subr.bf16.mxu0 0
  %2869 = vmatpush2.bf16.msra.mxu0 0
  %2870 = vmatprep.mubr.bf16.mxu0 0
  %2871 = vmatmul.mubr.bf16.gmra.mxu0 %v2836
  %v2872 = vpop.f32.mrf.mxu0
  %v2873 = vadd.f32 %v2821, %v2872
  %v2874 = vpop.f32.mrf.mxu0
  %v2875 = vpop.f32.mrf.mxu0
  %v2876 = vadd.f32 %v2821, %v2875
  %v2877 = vpop.f32.mrf.mxu0
  %2878 = vdwg.mxu0
  %v2879 = vld [vmem:[%s63] sm:$0xf]
  %v2880 = vld [vmem:[%s63 + $0x4] sm:$0xf]
  %v2881 = vld [vmem:[%s63 + $0x8] sm:$0xf]
  %v2882 = vld [vmem:[%s63 + $0xc] sm:$0xf]
  %v2883 = vld [vmem:[%s65] sm:$0x1]
  %v2885 = vlaneseq
  %v2886 = vshrl.u32 %v2885, 7
  %v2887 = vsub.s32 0, %v2886
  %v2888 = vrot.slane %v2883, %v2887
  %v2894 = vunpack.c.l.b16 %v2879
  %v2895 = vunpack.c.l.b16 %v2880
  %v2896 = vunpack.c.l.b16 %v2881
  %v2897 = vunpack.c.l.b16 %v2882
  %v2898 = vpack.c.b16 %v2895, %v2894
  %v2899 = vpack.c.b16 %v2897, %v2896
  %2902 = vmatprep.subr.bf16.mxu0 0
  %2903 = vmatpush1.bf16.msra.mxu0 0
  %2904 = vmatprep.subr.bf16.mxu0 0
  %2905 = vmatpush1.bf16.msra.mxu0 0
  %2906 = vmatprep.subr.bf16.mxu0 0
  %2907 = vmatpush1.bf16.msra.mxu0 0
  %2908 = vmatprep.subr.bf16.mxu0 0
  %2909 = vmatpush1.bf16.msra.mxu0 0
  %2910 = vmatprep.subr.bf16.mxu0 0
  %2911 = vmatpush1.bf16.msra.mxu0 0
  %2912 = vmatprep.subr.bf16.mxu0 0
  %2913 = vmatpush1.bf16.msra.mxu0 0
  %2914 = vmatprep.subr.bf16.mxu0 0
  %2915 = vmatpush1.bf16.msra.mxu0 %v2899
  %2916 = vmatprep.subr.bf16.mxu0 0
  %2917 = vmatpush1.bf16.msra.mxu0 %v2898
  %2918 = vmatprep.subr.bf16.mxu0 0
  %2919 = vmatpush2.bf16.msra.mxu0 0
  %2920 = vmatprep.subr.bf16.mxu0 0
  %2921 = vmatpush2.bf16.msra.mxu0 0
  %2922 = vmatprep.subr.bf16.mxu0 0
  %2923 = vmatpush2.bf16.msra.mxu0 0
  %2924 = vmatprep.subr.bf16.mxu0 0
  %2925 = vmatpush2.bf16.msra.mxu0 0
  %2926 = vmatprep.subr.bf16.mxu0 0
  %2927 = vmatpush2.bf16.msra.mxu0 0
  %2928 = vmatprep.subr.bf16.mxu0 0
  %2929 = vmatpush2.bf16.msra.mxu0 0
  %2930 = vmatprep.subr.bf16.mxu0 0
  %2931 = vmatpush2.bf16.msra.mxu0 0
  %2932 = vmatprep.subr.bf16.mxu0 0
  %2933 = vmatpush2.bf16.msra.mxu0 0
  %2934 = vmatprep.mubr.bf16.mxu0 0
  %2935 = vmatmul.mubr.bf16.gmra.mxu0 %v2836
  %v2936 = vpop.f32.mrf.mxu0
  %v2937 = vadd.f32 %v2888, %v2936
  %v2938 = vpop.f32.mrf.mxu0
  %v2939 = vpop.f32.mrf.mxu0
  %v2940 = vadd.f32 %v2888, %v2939
  %v2941 = vpop.f32.mrf.mxu0
  %2942 = vdwg.mxu0
  %v2943 = vpack.c.bf16 %v2805, %v2805
  %v2944 = vpack.c.bf16 %v2808, %v2808
  %v2945 = vpack.c.bf16 %v2873, %v2873
  %v2946 = vpack.c.bf16 %v2876, %v2876
  %v2947 = vpack.c.bf16 %v2937, %v2937
  %v2948 = vpack.c.bf16 %v2940, %v2940
  %v2951 = vlaneseq
  %v2952 = vshrl.u32 %v2951, 7
  %v2953 = vsub.s32 0, %v2952
  %v2954 = vrot.slane %v191, %v2953
  %v2955 = vlaneseq
  %v2956 = vshrl.u32 %v2955, 7
  %v2957 = vsub.s32 0, %v2956
  %v2958 = vrot.slane %v192, %v2957
  %v2962 = vsel %vm414, %v2943, 0
  %v2965 = vsel %vm414, %v2945, 0
  %2967 = vmatprep.subr.bf16.mxu0 0
  %2968 = vmatpush1.bf16.xpose.msra.mxu0 0
  %2969 = vmatprep.subr.bf16.mxu0 0
  %2970 = vmatpush1.bf16.xpose.msra.mxu0 0
  %2971 = vmatprep.subr.bf16.mxu0 0
  %2972 = vmatpush1.bf16.xpose.msra.mxu0 0
  %2973 = vmatprep.subr.bf16.mxu0 0
  %2974 = vmatpush1.bf16.xpose.msra.mxu0 0
  %2975 = vmatprep.subr.bf16.mxu0 0
  %2976 = vmatpush1.bf16.xpose.msra.mxu0 0
  %2977 = vmatprep.subr.bf16.mxu0 0
  %2978 = vmatpush1.bf16.xpose.msra.mxu0 0
  %2979 = vmatprep.subr.bf16.mxu0 0
  %2980 = vmatpush1.bf16.xpose.msra.mxu0 0
  %2981 = vmatprep.subr.bf16.mxu0 0
  %2982 = vmatpush1.bf16.xpose.msra.mxu0 %v2965
  %2983 = vmatprep.subr.bf16.mxu0 0
  %2984 = vmatpush2.bf16.xpose.msra.mxu0 0
  %2985 = vmatprep.subr.bf16.mxu0 0
  %2986 = vmatpush2.bf16.xpose.msra.mxu0 0
  %2987 = vmatprep.subr.bf16.mxu0 0
  %2988 = vmatpush2.bf16.xpose.msra.mxu0 0
  %2989 = vmatprep.subr.bf16.mxu0 0
  %2990 = vmatpush2.bf16.xpose.msra.mxu0 0
  %2991 = vmatprep.subr.bf16.mxu0 0
  %2992 = vmatpush2.bf16.xpose.msra.mxu0 0
  %2993 = vmatprep.subr.bf16.mxu0 0
  %2994 = vmatpush2.bf16.xpose.msra.mxu0 0
  %2995 = vmatprep.subr.bf16.mxu0 0
  %2996 = vmatpush2.bf16.xpose.msra.mxu0 0
  %2997 = vmatprep.subr.bf16.mxu0 0
  %2998 = vmatpush2.bf16.xpose.msra.mxu0 0
  %2999 = vmatprep.mubr.bf16.mxu0 0
  %3000 = vmatmul.mubr.bf16.gmra.mxu0 %v2962
  %v3001 = vpop.f32.mrf.mxu0
  %v3002 = vadd.f32 %v2954, %v3001
  %v3003 = vpop.f32.mrf.mxu0
  %v3004 = vpop.f32.mrf.mxu0
  %v3005 = vpop.f32.mrf.mxu0
  %3006 = vdwg.mxu0
  %v3008 = vsel %vm414, %v2944, 0
  %v3011 = vsel %vm414, %v2946, 0
  %3013 = vmatprep.subr.bf16.mxu0 0
  %3014 = vmatpush1.bf16.xpose.msra.mxu0 0
  %3015 = vmatprep.subr.bf16.mxu0 0
  %3016 = vmatpush1.bf16.xpose.msra.mxu0 0
  %3017 = vmatprep.subr.bf16.mxu0 0
  %3018 = vmatpush1.bf16.xpose.msra.mxu0 0
  %3019 = vmatprep.subr.bf16.mxu0 0
  %3020 = vmatpush1.bf16.xpose.msra.mxu0 0
  %3021 = vmatprep.subr.bf16.mxu0 0
  %3022 = vmatpush1.bf16.xpose.msra.mxu0 0
  %3023 = vmatprep.subr.bf16.mxu0 0
  %3024 = vmatpush1.bf16.xpose.msra.mxu0 0
  %3025 = vmatprep.subr.bf16.mxu0 0
  %3026 = vmatpush1.bf16.xpose.msra.mxu0 0
  %3027 = vmatprep.subr.bf16.mxu0 0
  %3028 = vmatpush1.bf16.xpose.msra.mxu0 %v3011
  %3029 = vmatprep.subr.bf16.mxu0 0
  %3030 = vmatpush2.bf16.xpose.msra.mxu0 0
  %3031 = vmatprep.subr.bf16.mxu0 0
  %3032 = vmatpush2.bf16.xpose.msra.mxu0 0
  %3033 = vmatprep.subr.bf16.mxu0 0
  %3034 = vmatpush2.bf16.xpose.msra.mxu0 0
  %3035 = vmatprep.subr.bf16.mxu0 0
  %3036 = vmatpush2.bf16.xpose.msra.mxu0 0
  %3037 = vmatprep.subr.bf16.mxu0 0
  %3038 = vmatpush2.bf16.xpose.msra.mxu0 0
  %3039 = vmatprep.subr.bf16.mxu0 0
  %3040 = vmatpush2.bf16.xpose.msra.mxu0 0
  %3041 = vmatprep.subr.bf16.mxu0 0
  %3042 = vmatpush2.bf16.xpose.msra.mxu0 0
  %3043 = vmatprep.subr.bf16.mxu0 0
  %3044 = vmatpush2.bf16.xpose.msra.mxu0 0
  %3045 = vmatprep.mubr.bf16.mxu0 0
  %3046 = vmatmul.mubr.bf16.gmra.mxu0 %v3008
  %v3047 = vpop.f32.mrf.mxu0
  %v3048 = vadd.f32 %v2958, %v3047
  %v3049 = vpop.f32.mrf.mxu0
  %v3050 = vpop.f32.mrf.mxu0
  %v3051 = vpop.f32.mrf.mxu0
  %3052 = vdwg.mxu0
  %v3053 = vsel %vm414, %v3002, -inf
  %3054 = vmax.xlane.f32.xlu0 %v3053
  %v3055 = vpop.xlane.xlu0 %3054
  %v3056 = vsel %vm414, %v3048, -inf
  %3057 = vmax.xlane.f32.xlu0 %v3056
  %v3058 = vpop.xlane.xlu0 %3057
  %v3059 = vmax.f32 %v3055, -1e+30
  %v3060 = vmax.f32 %v3058, -1e+30
  %v3061 = vsub.f32 %v3002, %v3059
  %v3062 = vsub.f32 %v3048, %v3060
  %v3063 = vmul.f32 %v3061, 1.442695
  %v3064 = vpow.pop %v3063
  %v3065 = vmul.f32 %v3062, 1.442695
  %v3066 = vpow.pop %v3065
  %v3067 = vsel %vm414, %v3064, 0.0
  %3068 = vadd.xlane.f32.xlu0 %v3067
  %v3069 = vpop.xlane.xlu0 %3068
  %v3070 = vsel %vm414, %v3066, 0.0
  %3071 = vadd.xlane.f32.xlu0 %v3070
  %v3072 = vpop.xlane.xlu0 %3071
  %v3073 = vpack.c.bf16 %v3064, %v3064
  %v3074 = vpack.c.bf16 %v3066, %v3066
  %v3076 = vsel %vm414, %v3073, 0
  %v3079 = vsel %vm534, %v2947, 0
  %3081 = vmatprep.subr.bf16.mxu0 0
  %3082 = vmatpush1.bf16.msra.mxu0 0
  %3083 = vmatprep.subr.bf16.mxu0 0
  %3084 = vmatpush1.bf16.msra.mxu0 0
  %3085 = vmatprep.subr.bf16.mxu0 0
  %3086 = vmatpush1.bf16.msra.mxu0 0
  %3087 = vmatprep.subr.bf16.mxu0 0
  %3088 = vmatpush1.bf16.msra.mxu0 0
  %3089 = vmatprep.subr.bf16.mxu0 0
  %3090 = vmatpush1.bf16.msra.mxu0 0
  %3091 = vmatprep.subr.bf16.mxu0 0
  %3092 = vmatpush1.bf16.msra.mxu0 0
  %3093 = vmatprep.subr.bf16.mxu0 0
  %3094 = vmatpush1.bf16.msra.mxu0 0
  %3095 = vmatprep.subr.bf16.mxu0 0
  %3096 = vmatpush1.bf16.msra.mxu0 %v3079
  %3097 = vmatprep.subr.bf16.mxu0 0
  %3098 = vmatpush2.bf16.msra.mxu0 0
  %3099 = vmatprep.subr.bf16.mxu0 0
  %3100 = vmatpush2.bf16.msra.mxu0 0
  %3101 = vmatprep.subr.bf16.mxu0 0
  %3102 = vmatpush2.bf16.msra.mxu0 0
  %3103 = vmatprep.subr.bf16.mxu0 0
  %3104 = vmatpush2.bf16.msra.mxu0 0
  %3105 = vmatprep.subr.bf16.mxu0 0
  %3106 = vmatpush2.bf16.msra.mxu0 0
  %3107 = vmatprep.subr.bf16.mxu0 0
  %3108 = vmatpush2.bf16.msra.mxu0 0
  %3109 = vmatprep.subr.bf16.mxu0 0
  %3110 = vmatpush2.bf16.msra.mxu0 0
  %3111 = vmatprep.subr.bf16.mxu0 0
  %3112 = vmatpush2.bf16.msra.mxu0 0
  %3113 = vmatprep.mubr.bf16.mxu0 0
  %3114 = vmatmul.mubr.bf16.gmra.mxu0 %v3076
  %v3115 = vpop.f32.mrf.mxu0
  %v3116 = vadd.f32 0.0, %v3115
  %v3117 = vpop.f32.mrf.mxu0
  %v3118 = vpop.f32.mrf.mxu0
  %v3119 = vpop.f32.mrf.mxu0
  %3120 = vdwg.mxu0
  %v3122 = vsel %vm414, %v3074, 0
  %v3125 = vsel %vm534, %v2948, 0
  %3127 = vmatprep.subr.bf16.mxu0 0
  %3128 = vmatpush1.bf16.msra.mxu0 0
  %3129 = vmatprep.subr.bf16.mxu0 0
  %3130 = vmatpush1.bf16.msra.mxu0 0
  %3131 = vmatprep.subr.bf16.mxu0 0
  %3132 = vmatpush1.bf16.msra.mxu0 0
  %3133 = vmatprep.subr.bf16.mxu0 0
  %3134 = vmatpush1.bf16.msra.mxu0 0
  %3135 = vmatprep.subr.bf16.mxu0 0
  %3136 = vmatpush1.bf16.msra.mxu0 0
  %3137 = vmatprep.subr.bf16.mxu0 0
  %3138 = vmatpush1.bf16.msra.mxu0 0
  %3139 = vmatprep.subr.bf16.mxu0 0
  %3140 = vmatpush1.bf16.msra.mxu0 0
  %3141 = vmatprep.subr.bf16.mxu0 0
  %3142 = vmatpush1.bf16.msra.mxu0 %v3125
  %3143 = vmatprep.subr.bf16.mxu0 0
  %3144 = vmatpush2.bf16.msra.mxu0 0
  %3145 = vmatprep.subr.bf16.mxu0 0
  %3146 = vmatpush2.bf16.msra.mxu0 0
  %3147 = vmatprep.subr.bf16.mxu0 0
  %3148 = vmatpush2.bf16.msra.mxu0 0
  %3149 = vmatprep.subr.bf16.mxu0 0
  %3150 = vmatpush2.bf16.msra.mxu0 0
  %3151 = vmatprep.subr.bf16.mxu0 0
  %3152 = vmatpush2.bf16.msra.mxu0 0
  %3153 = vmatprep.subr.bf16.mxu0 0
  %3154 = vmatpush2.bf16.msra.mxu0 0
  %3155 = vmatprep.subr.bf16.mxu0 0
  %3156 = vmatpush2.bf16.msra.mxu0 0
  %3157 = vmatprep.subr.bf16.mxu0 0
  %3158 = vmatpush2.bf16.msra.mxu0 0
  %3159 = vmatprep.mubr.bf16.mxu0 0
  %3160 = vmatmul.mubr.bf16.gmra.mxu0 %v3122
  %v3161 = vpop.f32.mrf.mxu0
  %v3162 = vadd.f32 0.0, %v3161
  %v3163 = vpop.f32.mrf.mxu0
  %v3164 = vpop.f32.mrf.mxu0
  %v3165 = vpop.f32.mrf.mxu0
  %3166 = vdwg.mxu0
  %vm3167 = vcmp.gt.f32.partialorder %v3069, 0.0
  %vm3168 = vcmp.gt.f32.partialorder %v3072, 0.0
  %v3169 = vrcp.pop %v3069
  %v3170 = vrcp.pop %v3072
  %v3171 = vsel %vm3167, %v3169, 0.0
  %v3172 = vsel %vm3168, %v3170, 0.0
  %v3173 = vmul.f32 %v3116, %v3171
  %v3174 = vmul.f32 %v3162, %v3172
  %3176 = vrot.lane.b32.xlu0 %v2943, 120
  %v3177 = vpop.permute.xlu0 %3176
  %3179 = vrot.lane.b32.xlu0 %v2945, 120
  %v3180 = vpop.permute.xlu0 %3179
  %v3182 = vsel %vm414, %v3177, 0
  %v3185 = vsel %vm414, %v3180, 0
  %3187 = vmatprep.subr.bf16.mxu0 0
  %3188 = vmatpush1.bf16.xpose.msra.mxu0 0
  %3189 = vmatprep.subr.bf16.mxu0 0
  %3190 = vmatpush1.bf16.xpose.msra.mxu0 0
  %3191 = vmatprep.subr.bf16.mxu0 0
  %3192 = vmatpush1.bf16.xpose.msra.mxu0 0
  %3193 = vmatprep.subr.bf16.mxu0 0
  %3194 = vmatpush1.bf16.xpose.msra.mxu0 0
  %3195 = vmatprep.subr.bf16.mxu0 0
  %3196 = vmatpush1.bf16.xpose.msra.mxu0 0
  %3197 = vmatprep.subr.bf16.mxu0 0
  %3198 = vmatpush1.bf16.xpose.msra.mxu0 0
  %3199 = vmatprep.subr.bf16.mxu0 0
  %3200 = vmatpush1.bf16.xpose.msra.mxu0 0
  %3201 = vmatprep.subr.bf16.mxu0 0
  %3202 = vmatpush1.bf16.xpose.msra.mxu0 %v3185
  %3203 = vmatprep.subr.bf16.mxu0 0
  %3204 = vmatpush2.bf16.xpose.msra.mxu0 0
  %3205 = vmatprep.subr.bf16.mxu0 0
  %3206 = vmatpush2.bf16.xpose.msra.mxu0 0
  %3207 = vmatprep.subr.bf16.mxu0 0
  %3208 = vmatpush2.bf16.xpose.msra.mxu0 0
  %3209 = vmatprep.subr.bf16.mxu0 0
  %3210 = vmatpush2.bf16.xpose.msra.mxu0 0
  %3211 = vmatprep.subr.bf16.mxu0 0
  %3212 = vmatpush2.bf16.xpose.msra.mxu0 0
  %3213 = vmatprep.subr.bf16.mxu0 0
  %3214 = vmatpush2.bf16.xpose.msra.mxu0 0
  %3215 = vmatprep.subr.bf16.mxu0 0
  %3216 = vmatpush2.bf16.xpose.msra.mxu0 0
  %3217 = vmatprep.subr.bf16.mxu0 0
  %3218 = vmatpush2.bf16.xpose.msra.mxu0 0
  %3219 = vmatprep.mubr.bf16.mxu0 0
  %3220 = vmatmul.mubr.bf16.gmra.mxu0 %v3182
  %v3221 = vpop.f32.mrf.mxu0
  %v3222 = vadd.f32 %v2954, %v3221
  %v3223 = vpop.f32.mrf.mxu0
  %v3224 = vpop.f32.mrf.mxu0
  %v3225 = vpop.f32.mrf.mxu0
  %3226 = vdwg.mxu0
  %3228 = vrot.lane.b32.xlu0 %v2944, 120
  %v3229 = vpop.permute.xlu0 %3228
  %3231 = vrot.lane.b32.xlu0 %v2946, 120
  %v3232 = vpop.permute.xlu0 %3231
  %v3234 = vsel %vm414, %v3229, 0
  %v3237 = vsel %vm414, %v3232, 0
  %3239 = vmatprep.subr.bf16.mxu0 0
  %3240 = vmatpush1.bf16.xpose.msra.mxu0 0
  %3241 = vmatprep.subr.bf16.mxu0 0
  %3242 = vmatpush1.bf16.xpose.msra.mxu0 0
  %3243 = vmatprep.subr.bf16.mxu0 0
  %3244 = vmatpush1.bf16.xpose.msra.mxu0 0
  %3245 = vmatprep.subr.bf16.mxu0 0
  %3246 = vmatpush1.bf16.xpose.msra.mxu0 0
  %3247 = vmatprep.subr.bf16.mxu0 0
  %3248 = vmatpush1.bf16.xpose.msra.mxu0 0
  %3249 = vmatprep.subr.bf16.mxu0 0
  %3250 = vmatpush1.bf16.xpose.msra.mxu0 0
  %3251 = vmatprep.subr.bf16.mxu0 0
  %3252 = vmatpush1.bf16.xpose.msra.mxu0 0
  %3253 = vmatprep.subr.bf16.mxu0 0
  %3254 = vmatpush1.bf16.xpose.msra.mxu0 %v3237
  %3255 = vmatprep.subr.bf16.mxu0 0
  %3256 = vmatpush2.bf16.xpose.msra.mxu0 0
  %3257 = vmatprep.subr.bf16.mxu0 0
  %3258 = vmatpush2.bf16.xpose.msra.mxu0 0
  %3259 = vmatprep.subr.bf16.mxu0 0
  %3260 = vmatpush2.bf16.xpose.msra.mxu0 0
  %3261 = vmatprep.subr.bf16.mxu0 0
  %3262 = vmatpush2.bf16.xpose.msra.mxu0 0
  %3263 = vmatprep.subr.bf16.mxu0 0
  %3264 = vmatpush2.bf16.xpose.msra.mxu0 0
  %3265 = vmatprep.subr.bf16.mxu0 0
  %3266 = vmatpush2.bf16.xpose.msra.mxu0 0
  %3267 = vmatprep.subr.bf16.mxu0 0
  %3268 = vmatpush2.bf16.xpose.msra.mxu0 0
  %3269 = vmatprep.subr.bf16.mxu0 0
  %3270 = vmatpush2.bf16.xpose.msra.mxu0 0
  %3271 = vmatprep.mubr.bf16.mxu0 0
  %3272 = vmatmul.mubr.bf16.gmra.mxu0 %v3234
  %v3273 = vpop.f32.mrf.mxu0
  %v3274 = vadd.f32 %v2958, %v3273
  %v3275 = vpop.f32.mrf.mxu0
  %v3276 = vpop.f32.mrf.mxu0
  %v3277 = vpop.f32.mrf.mxu0
  %3278 = vdwg.mxu0
  %v3279 = vsel %vm414, %v3222, -inf
  %3280 = vmax.xlane.f32.xlu0 %v3279
  %v3281 = vpop.xlane.xlu0 %3280
  %v3282 = vsel %vm414, %v3274, -inf
  %3283 = vmax.xlane.f32.xlu0 %v3282
  %v3284 = vpop.xlane.xlu0 %3283
  %v3285 = vmax.f32 %v3281, -1e+30
  %v3286 = vmax.f32 %v3284, -1e+30
  %v3287 = vsub.f32 %v3222, %v3285
  %v3288 = vsub.f32 %v3274, %v3286
  %v3289 = vmul.f32 %v3287, 1.442695
  %v3290 = vpow.pop %v3289
  %v3291 = vmul.f32 %v3288, 1.442695
  %v3292 = vpow.pop %v3291
  %v3293 = vsel %vm414, %v3290, 0.0
  %3294 = vadd.xlane.f32.xlu0 %v3293
  %v3295 = vpop.xlane.xlu0 %3294
  %v3296 = vsel %vm414, %v3292, 0.0
  %3297 = vadd.xlane.f32.xlu0 %v3296
  %v3298 = vpop.xlane.xlu0 %3297
  %v3299 = vpack.c.bf16 %v3290, %v3290
  %v3300 = vpack.c.bf16 %v3292, %v3292
  %3302 = vrot.lane.b32.xlu0 %v2947, 120
  %v3303 = vpop.permute.xlu0 %3302
  %v3305 = vsel %vm414, %v3299, 0
  %v3308 = vsel %vm534, %v3303, 0
  %3310 = vmatprep.subr.bf16.mxu0 0
  %3311 = vmatpush1.bf16.msra.mxu0 0
  %3312 = vmatprep.subr.bf16.mxu0 0
  %3313 = vmatpush1.bf16.msra.mxu0 0
  %3314 = vmatprep.subr.bf16.mxu0 0
  %3315 = vmatpush1.bf16.msra.mxu0 0
  %3316 = vmatprep.subr.bf16.mxu0 0
  %3317 = vmatpush1.bf16.msra.mxu0 0
  %3318 = vmatprep.subr.bf16.mxu0 0
  %3319 = vmatpush1.bf16.msra.mxu0 0
  %3320 = vmatprep.subr.bf16.mxu0 0
  %3321 = vmatpush1.bf16.msra.mxu0 0
  %3322 = vmatprep.subr.bf16.mxu0 0
  %3323 = vmatpush1.bf16.msra.mxu0 0
  %3324 = vmatprep.subr.bf16.mxu0 0
  %3325 = vmatpush1.bf16.msra.mxu0 %v3308
  %3326 = vmatprep.subr.bf16.mxu0 0
  %3327 = vmatpush2.bf16.msra.mxu0 0
  %3328 = vmatprep.subr.bf16.mxu0 0
  %3329 = vmatpush2.bf16.msra.mxu0 0
  %3330 = vmatprep.subr.bf16.mxu0 0
  %3331 = vmatpush2.bf16.msra.mxu0 0
  %3332 = vmatprep.subr.bf16.mxu0 0
  %3333 = vmatpush2.bf16.msra.mxu0 0
  %3334 = vmatprep.subr.bf16.mxu0 0
  %3335 = vmatpush2.bf16.msra.mxu0 0
  %3336 = vmatprep.subr.bf16.mxu0 0
  %3337 = vmatpush2.bf16.msra.mxu0 0
  %3338 = vmatprep.subr.bf16.mxu0 0
  %3339 = vmatpush2.bf16.msra.mxu0 0
  %3340 = vmatprep.subr.bf16.mxu0 0
  %3341 = vmatpush2.bf16.msra.mxu0 0
  %3342 = vmatprep.mubr.bf16.mxu0 0
  %3343 = vmatmul.mubr.bf16.gmra.mxu0 %v3305
  %v3344 = vpop.f32.mrf.mxu0
  %v3345 = vadd.f32 0.0, %v3344
  %v3346 = vpop.f32.mrf.mxu0
  %v3347 = vpop.f32.mrf.mxu0
  %v3348 = vpop.f32.mrf.mxu0
  %3349 = vdwg.mxu0
  %3351 = vrot.lane.b32.xlu0 %v2948, 120
  %v3352 = vpop.permute.xlu0 %3351
  %v3354 = vsel %vm414, %v3300, 0
  %v3357 = vsel %vm534, %v3352, 0
  %3359 = vmatprep.subr.bf16.mxu0 0
  %3360 = vmatpush1.bf16.msra.mxu0 0
  %3361 = vmatprep.subr.bf16.mxu0 0
  %3362 = vmatpush1.bf16.msra.mxu0 0
  %3363 = vmatprep.subr.bf16.mxu0 0
  %3364 = vmatpush1.bf16.msra.mxu0 0
  %3365 = vmatprep.subr.bf16.mxu0 0
  %3366 = vmatpush1.bf16.msra.mxu0 0
  %3367 = vmatprep.subr.bf16.mxu0 0
  %3368 = vmatpush1.bf16.msra.mxu0 0
  %3369 = vmatprep.subr.bf16.mxu0 0
  %3370 = vmatpush1.bf16.msra.mxu0 0
  %3371 = vmatprep.subr.bf16.mxu0 0
  %3372 = vmatpush1.bf16.msra.mxu0 0
  %3373 = vmatprep.subr.bf16.mxu0 0
  %3374 = vmatpush1.bf16.msra.mxu0 %v3357
  %3375 = vmatprep.subr.bf16.mxu0 0
  %3376 = vmatpush2.bf16.msra.mxu0 0
  %3377 = vmatprep.subr.bf16.mxu0 0
  %3378 = vmatpush2.bf16.msra.mxu0 0
  %3379 = vmatprep.subr.bf16.mxu0 0
  %3380 = vmatpush2.bf16.msra.mxu0 0
  %3381 = vmatprep.subr.bf16.mxu0 0
  %3382 = vmatpush2.bf16.msra.mxu0 0
  %3383 = vmatprep.subr.bf16.mxu0 0
  %3384 = vmatpush2.bf16.msra.mxu0 0
  %3385 = vmatprep.subr.bf16.mxu0 0
  %3386 = vmatpush2.bf16.msra.mxu0 0
  %3387 = vmatprep.subr.bf16.mxu0 0
  %3388 = vmatpush2.bf16.msra.mxu0 0
  %3389 = vmatprep.subr.bf16.mxu0 0
  %3390 = vmatpush2.bf16.msra.mxu0 0
  %3391 = vmatprep.mubr.bf16.mxu0 0
  %3392 = vmatmul.mubr.bf16.gmra.mxu0 %v3354
  %v3393 = vpop.f32.mrf.mxu0
  %v3394 = vadd.f32 0.0, %v3393
  %v3395 = vpop.f32.mrf.mxu0
  %v3396 = vpop.f32.mrf.mxu0
  %v3397 = vpop.f32.mrf.mxu0
  %3398 = vdwg.mxu0
  %vm3399 = vcmp.gt.f32.partialorder %v3295, 0.0
  %vm3400 = vcmp.gt.f32.partialorder %v3298, 0.0
  %v3401 = vrcp.pop %v3295
  %v3402 = vrcp.pop %v3298
  %v3403 = vsel %vm3399, %v3401, 0.0
  %v3404 = vsel %vm3400, %v3402, 0.0
  %v3405 = vmul.f32 %v3345, %v3403
  %v3406 = vmul.f32 %v3394, %v3404
  %3407 = vrot.lane.b32.xlu0 %v2943, 112
  %v3408 = vpop.permute.xlu0 %3407
  %3409 = vrot.lane.b32.xlu0 %v2945, 112
  %v3410 = vpop.permute.xlu0 %3409
  %v3412 = vsel %vm414, %v3408, 0
  %v3415 = vsel %vm414, %v3410, 0
  %3417 = vmatprep.subr.bf16.mxu0 0
  %3418 = vmatpush1.bf16.xpose.msra.mxu0 0
  %3419 = vmatprep.subr.bf16.mxu0 0
  %3420 = vmatpush1.bf16.xpose.msra.mxu0 0
  %3421 = vmatprep.subr.bf16.mxu0 0
  %3422 = vmatpush1.bf16.xpose.msra.mxu0 0
  %3423 = vmatprep.subr.bf16.mxu0 0
  %3424 = vmatpush1.bf16.xpose.msra.mxu0 0
  %3425 = vmatprep.subr.bf16.mxu0 0
  %3426 = vmatpush1.bf16.xpose.msra.mxu0 0
  %3427 = vmatprep.subr.bf16.mxu0 0
  %3428 = vmatpush1.bf16.xpose.msra.mxu0 0
  %3429 = vmatprep.subr.bf16.mxu0 0
  %3430 = vmatpush1.bf16.xpose.msra.mxu0 0
  %3431 = vmatprep.subr.bf16.mxu0 0
  %3432 = vmatpush1.bf16.xpose.msra.mxu0 %v3415
  %3433 = vmatprep.subr.bf16.mxu0 0
  %3434 = vmatpush2.bf16.xpose.msra.mxu0 0
  %3435 = vmatprep.subr.bf16.mxu0 0
  %3436 = vmatpush2.bf16.xpose.msra.mxu0 0
  %3437 = vmatprep.subr.bf16.mxu0 0
  %3438 = vmatpush2.bf16.xpose.msra.mxu0 0
  %3439 = vmatprep.subr.bf16.mxu0 0
  %3440 = vmatpush2.bf16.xpose.msra.mxu0 0
  %3441 = vmatprep.subr.bf16.mxu0 0
  %3442 = vmatpush2.bf16.xpose.msra.mxu0 0
  %3443 = vmatprep.subr.bf16.mxu0 0
  %3444 = vmatpush2.bf16.xpose.msra.mxu0 0
  %3445 = vmatprep.subr.bf16.mxu0 0
  %3446 = vmatpush2.bf16.xpose.msra.mxu0 0
  %3447 = vmatprep.subr.bf16.mxu0 0
  %3448 = vmatpush2.bf16.xpose.msra.mxu0 0
  %3449 = vmatprep.mubr.bf16.mxu0 0
  %3450 = vmatmul.mubr.bf16.gmra.mxu0 %v3412
  %v3451 = vpop.f32.mrf.mxu0
  %v3452 = vadd.f32 %v2954, %v3451
  %v3453 = vpop.f32.mrf.mxu0
  %v3454 = vpop.f32.mrf.mxu0
  %v3455 = vpop.f32.mrf.mxu0
  %3456 = vdwg.mxu0
  %3457 = vrot.lane.b32.xlu0 %v2944, 112
  %v3458 = vpop.permute.xlu0 %3457
  %3459 = vrot.lane.b32.xlu0 %v2946, 112
  %v3460 = vpop.permute.xlu0 %3459
  %v3462 = vsel %vm414, %v3458, 0
  %v3465 = vsel %vm414, %v3460, 0
  %3467 = vmatprep.subr.bf16.mxu0 0
  %3468 = vmatpush1.bf16.xpose.msra.mxu0 0
  %3469 = vmatprep.subr.bf16.mxu0 0
  %3470 = vmatpush1.bf16.xpose.msra.mxu0 0
  %3471 = vmatprep.subr.bf16.mxu0 0
  %3472 = vmatpush1.bf16.xpose.msra.mxu0 0
  %3473 = vmatprep.subr.bf16.mxu0 0
  %3474 = vmatpush1.bf16.xpose.msra.mxu0 0
  %3475 = vmatprep.subr.bf16.mxu0 0
  %3476 = vmatpush1.bf16.xpose.msra.mxu0 0
  %3477 = vmatprep.subr.bf16.mxu0 0
  %3478 = vmatpush1.bf16.xpose.msra.mxu0 0
  %3479 = vmatprep.subr.bf16.mxu0 0
  %3480 = vmatpush1.bf16.xpose.msra.mxu0 0
  %3481 = vmatprep.subr.bf16.mxu0 0
  %3482 = vmatpush1.bf16.xpose.msra.mxu0 %v3465
  %3483 = vmatprep.subr.bf16.mxu0 0
  %3484 = vmatpush2.bf16.xpose.msra.mxu0 0
  %3485 = vmatprep.subr.bf16.mxu0 0
  %3486 = vmatpush2.bf16.xpose.msra.mxu0 0
  %3487 = vmatprep.subr.bf16.mxu0 0
  %3488 = vmatpush2.bf16.xpose.msra.mxu0 0
  %3489 = vmatprep.subr.bf16.mxu0 0
  %3490 = vmatpush2.bf16.xpose.msra.mxu0 0
  %3491 = vmatprep.subr.bf16.mxu0 0
  %3492 = vmatpush2.bf16.xpose.msra.mxu0 0
  %3493 = vmatprep.subr.bf16.mxu0 0
  %3494 = vmatpush2.bf16.xpose.msra.mxu0 0
  %3495 = vmatprep.subr.bf16.mxu0 0
  %3496 = vmatpush2.bf16.xpose.msra.mxu0 0
  %3497 = vmatprep.subr.bf16.mxu0 0
  %3498 = vmatpush2.bf16.xpose.msra.mxu0 0
  %3499 = vmatprep.mubr.bf16.mxu0 0
  %3500 = vmatmul.mubr.bf16.gmra.mxu0 %v3462
  %v3501 = vpop.f32.mrf.mxu0
  %v3502 = vadd.f32 %v2958, %v3501
  %v3503 = vpop.f32.mrf.mxu0
  %v3504 = vpop.f32.mrf.mxu0
  %v3505 = vpop.f32.mrf.mxu0
  %3506 = vdwg.mxu0
  %v3507 = vsel %vm414, %v3452, -inf
  %3508 = vmax.xlane.f32.xlu0 %v3507
  %v3509 = vpop.xlane.xlu0 %3508
  %v3510 = vsel %vm414, %v3502, -inf
  %3511 = vmax.xlane.f32.xlu0 %v3510
  %v3512 = vpop.xlane.xlu0 %3511
  %v3513 = vmax.f32 %v3509, -1e+30
  %v3514 = vmax.f32 %v3512, -1e+30
  %v3515 = vsub.f32 %v3452, %v3513
  %v3516 = vsub.f32 %v3502, %v3514
  %v3517 = vmul.f32 %v3515, 1.442695
  %v3518 = vpow.pop %v3517
  %v3519 = vmul.f32 %v3516, 1.442695
  %v3520 = vpow.pop %v3519
  %v3521 = vsel %vm414, %v3518, 0.0
  %3522 = vadd.xlane.f32.xlu0 %v3521
  %v3523 = vpop.xlane.xlu0 %3522
  %v3524 = vsel %vm414, %v3520, 0.0
  %3525 = vadd.xlane.f32.xlu0 %v3524
  %v3526 = vpop.xlane.xlu0 %3525
  %v3527 = vpack.c.bf16 %v3518, %v3518
  %v3528 = vpack.c.bf16 %v3520, %v3520
  %3529 = vrot.lane.b32.xlu0 %v2947, 112
  %v3530 = vpop.permute.xlu0 %3529
  %v3532 = vsel %vm414, %v3527, 0
  %v3535 = vsel %vm534, %v3530, 0
  %3537 = vmatprep.subr.bf16.mxu0 0
  %3538 = vmatpush1.bf16.msra.mxu0 0
  %3539 = vmatprep.subr.bf16.mxu0 0
  %3540 = vmatpush1.bf16.msra.mxu0 0
  %3541 = vmatprep.subr.bf16.mxu0 0
  %3542 = vmatpush1.bf16.msra.mxu0 0
  %3543 = vmatprep.subr.bf16.mxu0 0
  %3544 = vmatpush1.bf16.msra.mxu0 0
  %3545 = vmatprep.subr.bf16.mxu0 0
  %3546 = vmatpush1.bf16.msra.mxu0 0
  %3547 = vmatprep.subr.bf16.mxu0 0
  %3548 = vmatpush1.bf16.msra.mxu0 0
  %3549 = vmatprep.subr.bf16.mxu0 0
  %3550 = vmatpush1.bf16.msra.mxu0 0
  %3551 = vmatprep.subr.bf16.mxu0 0
  %3552 = vmatpush1.bf16.msra.mxu0 %v3535
  %3553 = vmatprep.subr.bf16.mxu0 0
  %3554 = vmatpush2.bf16.msra.mxu0 0
  %3555 = vmatprep.subr.bf16.mxu0 0
  %3556 = vmatpush2.bf16.msra.mxu0 0
  %3557 = vmatprep.subr.bf16.mxu0 0
  %3558 = vmatpush2.bf16.msra.mxu0 0
  %3559 = vmatprep.subr.bf16.mxu0 0
  %3560 = vmatpush2.bf16.msra.mxu0 0
  %3561 = vmatprep.subr.bf16.mxu0 0
  %3562 = vmatpush2.bf16.msra.mxu0 0
  %3563 = vmatprep.subr.bf16.mxu0 0
  %3564 = vmatpush2.bf16.msra.mxu0 0
  %3565 = vmatprep.subr.bf16.mxu0 0
  %3566 = vmatpush2.bf16.msra.mxu0 0
  %3567 = vmatprep.subr.bf16.mxu0 0
  %3568 = vmatpush2.bf16.msra.mxu0 0
  %3569 = vmatprep.mubr.bf16.mxu0 0
  %3570 = vmatmul.mubr.bf16.gmra.mxu0 %v3532
  %v3571 = vpop.f32.mrf.mxu0
  %v3572 = vadd.f32 0.0, %v3571
  %v3573 = vpop.f32.mrf.mxu0
  %v3574 = vpop.f32.mrf.mxu0
  %v3575 = vpop.f32.mrf.mxu0
  %3576 = vdwg.mxu0
  %3577 = vrot.lane.b32.xlu0 %v2948, 112
  %v3578 = vpop.permute.xlu0 %3577
  %v3580 = vsel %vm414, %v3528, 0
  %v3583 = vsel %vm534, %v3578, 0
  %3585 = vmatprep.subr.bf16.mxu0 0
  %3586 = vmatpush1.bf16.msra.mxu0 0
  %3587 = vmatprep.subr.bf16.mxu0 0
  %3588 = vmatpush1.bf16.msra.mxu0 0
  %3589 = vmatprep.subr.bf16.mxu0 0
  %3590 = vmatpush1.bf16.msra.mxu0 0
  %3591 = vmatprep.subr.bf16.mxu0 0
  %3592 = vmatpush1.bf16.msra.mxu0 0
  %3593 = vmatprep.subr.bf16.mxu0 0
  %3594 = vmatpush1.bf16.msra.mxu0 0
  %3595 = vmatprep.subr.bf16.mxu0 0
  %3596 = vmatpush1.bf16.msra.mxu0 0
  %3597 = vmatprep.subr.bf16.mxu0 0
  %3598 = vmatpush1.bf16.msra.mxu0 0
  %3599 = vmatprep.subr.bf16.mxu0 0
  %3600 = vmatpush1.bf16.msra.mxu0 %v3583
  %3601 = vmatprep.subr.bf16.mxu0 0
  %3602 = vmatpush2.bf16.msra.mxu0 0
  %3603 = vmatprep.subr.bf16.mxu0 0
  %3604 = vmatpush2.bf16.msra.mxu0 0
  %3605 = vmatprep.subr.bf16.mxu0 0
  %3606 = vmatpush2.bf16.msra.mxu0 0
  %3607 = vmatprep.subr.bf16.mxu0 0
  %3608 = vmatpush2.bf16.msra.mxu0 0
  %3609 = vmatprep.subr.bf16.mxu0 0
  %3610 = vmatpush2.bf16.msra.mxu0 0
  %3611 = vmatprep.subr.bf16.mxu0 0
  %3612 = vmatpush2.bf16.msra.mxu0 0
  %3613 = vmatprep.subr.bf16.mxu0 0
  %3614 = vmatpush2.bf16.msra.mxu0 0
  %3615 = vmatprep.subr.bf16.mxu0 0
  %3616 = vmatpush2.bf16.msra.mxu0 0
  %3617 = vmatprep.mubr.bf16.mxu0 0
  %3618 = vmatmul.mubr.bf16.gmra.mxu0 %v3580
  %v3619 = vpop.f32.mrf.mxu0
  %v3620 = vadd.f32 0.0, %v3619
  %v3621 = vpop.f32.mrf.mxu0
  %v3622 = vpop.f32.mrf.mxu0
  %v3623 = vpop.f32.mrf.mxu0
  %3624 = vdwg.mxu0
  %vm3625 = vcmp.gt.f32.partialorder %v3523, 0.0
  %vm3626 = vcmp.gt.f32.partialorder %v3526, 0.0
  %v3627 = vrcp.pop %v3523
  %v3628 = vrcp.pop %v3526
  %v3629 = vsel %vm3625, %v3627, 0.0
  %v3630 = vsel %vm3626, %v3628, 0.0
  %v3631 = vmul.f32 %v3572, %v3629
  %v3632 = vmul.f32 %v3620, %v3630
  %3633 = vrot.lane.b32.xlu0 %v2943, 104
  %v3634 = vpop.permute.xlu0 %3633
  %3635 = vrot.lane.b32.xlu0 %v2945, 104
  %v3636 = vpop.permute.xlu0 %3635
  %v3638 = vsel %vm414, %v3634, 0
  %v3641 = vsel %vm414, %v3636, 0
  %3643 = vmatprep.subr.bf16.mxu0 0
  %3644 = vmatpush1.bf16.xpose.msra.mxu0 0
  %3645 = vmatprep.subr.bf16.mxu0 0
  %3646 = vmatpush1.bf16.xpose.msra.mxu0 0
  %3647 = vmatprep.subr.bf16.mxu0 0
  %3648 = vmatpush1.bf16.xpose.msra.mxu0 0
  %3649 = vmatprep.subr.bf16.mxu0 0
  %3650 = vmatpush1.bf16.xpose.msra.mxu0 0
  %3651 = vmatprep.subr.bf16.mxu0 0
  %3652 = vmatpush1.bf16.xpose.msra.mxu0 0
  %3653 = vmatprep.subr.bf16.mxu0 0
  %3654 = vmatpush1.bf16.xpose.msra.mxu0 0
  %3655 = vmatprep.subr.bf16.mxu0 0
  %3656 = vmatpush1.bf16.xpose.msra.mxu0 0
  %3657 = vmatprep.subr.bf16.mxu0 0
  %3658 = vmatpush1.bf16.xpose.msra.mxu0 %v3641
  %3659 = vmatprep.subr.bf16.mxu0 0
  %3660 = vmatpush2.bf16.xpose.msra.mxu0 0
  %3661 = vmatprep.subr.bf16.mxu0 0
  %3662 = vmatpush2.bf16.xpose.msra.mxu0 0
  %3663 = vmatprep.subr.bf16.mxu0 0
  %3664 = vmatpush2.bf16.xpose.msra.mxu0 0
  %3665 = vmatprep.subr.bf16.mxu0 0
  %3666 = vmatpush2.bf16.xpose.msra.mxu0 0
  %3667 = vmatprep.subr.bf16.mxu0 0
  %3668 = vmatpush2.bf16.xpose.msra.mxu0 0
  %3669 = vmatprep.subr.bf16.mxu0 0
  %3670 = vmatpush2.bf16.xpose.msra.mxu0 0
  %3671 = vmatprep.subr.bf16.mxu0 0
  %3672 = vmatpush2.bf16.xpose.msra.mxu0 0
  %3673 = vmatprep.subr.bf16.mxu0 0
  %3674 = vmatpush2.bf16.xpose.msra.mxu0 0
  %3675 = vmatprep.mubr.bf16.mxu0 0
  %3676 = vmatmul.mubr.bf16.gmra.mxu0 %v3638
  %v3677 = vpop.f32.mrf.mxu0
  %v3678 = vadd.f32 %v2954, %v3677
  %v3679 = vpop.f32.mrf.mxu0
  %v3680 = vpop.f32.mrf.mxu0
  %v3681 = vpop.f32.mrf.mxu0
  %3682 = vdwg.mxu0
  %3683 = vrot.lane.b32.xlu0 %v2944, 104
  %v3684 = vpop.permute.xlu0 %3683
  %3685 = vrot.lane.b32.xlu0 %v2946, 104
  %v3686 = vpop.permute.xlu0 %3685
  %v3688 = vsel %vm414, %v3684, 0
  %v3691 = vsel %vm414, %v3686, 0
  %3693 = vmatprep.subr.bf16.mxu0 0
  %3694 = vmatpush1.bf16.xpose.msra.mxu0 0
  %3695 = vmatprep.subr.bf16.mxu0 0
  %3696 = vmatpush1.bf16.xpose.msra.mxu0 0
  %3697 = vmatprep.subr.bf16.mxu0 0
  %3698 = vmatpush1.bf16.xpose.msra.mxu0 0
  %3699 = vmatprep.subr.bf16.mxu0 0
  %3700 = vmatpush1.bf16.xpose.msra.mxu0 0
  %3701 = vmatprep.subr.bf16.mxu0 0
  %3702 = vmatpush1.bf16.xpose.msra.mxu0 0
  %3703 = vmatprep.subr.bf16.mxu0 0
  %3704 = vmatpush1.bf16.xpose.msra.mxu0 0
  %3705 = vmatprep.subr.bf16.mxu0 0
  %3706 = vmatpush1.bf16.xpose.msra.mxu0 0
  %3707 = vmatprep.subr.bf16.mxu0 0
  %3708 = vmatpush1.bf16.xpose.msra.mxu0 %v3691
  %3709 = vmatprep.subr.bf16.mxu0 0
  %3710 = vmatpush2.bf16.xpose.msra.mxu0 0
  %3711 = vmatprep.subr.bf16.mxu0 0
  %3712 = vmatpush2.bf16.xpose.msra.mxu0 0
  %3713 = vmatprep.subr.bf16.mxu0 0
  %3714 = vmatpush2.bf16.xpose.msra.mxu0 0
  %3715 = vmatprep.subr.bf16.mxu0 0
  %3716 = vmatpush2.bf16.xpose.msra.mxu0 0
  %3717 = vmatprep.subr.bf16.mxu0 0
  %3718 = vmatpush2.bf16.xpose.msra.mxu0 0
  %3719 = vmatprep.subr.bf16.mxu0 0
  %3720 = vmatpush2.bf16.xpose.msra.mxu0 0
  %3721 = vmatprep.subr.bf16.mxu0 0
  %3722 = vmatpush2.bf16.xpose.msra.mxu0 0
  %3723 = vmatprep.subr.bf16.mxu0 0
  %3724 = vmatpush2.bf16.xpose.msra.mxu0 0
  %3725 = vmatprep.mubr.bf16.mxu0 0
  %3726 = vmatmul.mubr.bf16.gmra.mxu0 %v3688
  %v3727 = vpop.f32.mrf.mxu0
  %v3728 = vadd.f32 %v2958, %v3727
  %v3729 = vpop.f32.mrf.mxu0
  %v3730 = vpop.f32.mrf.mxu0
  %v3731 = vpop.f32.mrf.mxu0
  %3732 = vdwg.mxu0
  %v3733 = vsel %vm414, %v3678, -inf
  %3734 = vmax.xlane.f32.xlu0 %v3733
  %v3735 = vpop.xlane.xlu0 %3734
  %v3736 = vsel %vm414, %v3728, -inf
  %3737 = vmax.xlane.f32.xlu0 %v3736
  %v3738 = vpop.xlane.xlu0 %3737
  %v3739 = vmax.f32 %v3735, -1e+30
  %v3740 = vmax.f32 %v3738, -1e+30
  %v3741 = vsub.f32 %v3678, %v3739
  %v3742 = vsub.f32 %v3728, %v3740
  %v3743 = vmul.f32 %v3741, 1.442695
  %v3744 = vpow.pop %v3743
  %v3745 = vmul.f32 %v3742, 1.442695
  %v3746 = vpow.pop %v3745
  %v3747 = vsel %vm414, %v3744, 0.0
  %3748 = vadd.xlane.f32.xlu0 %v3747
  %v3749 = vpop.xlane.xlu0 %3748
  %v3750 = vsel %vm414, %v3746, 0.0
  %3751 = vadd.xlane.f32.xlu0 %v3750
  %v3752 = vpop.xlane.xlu0 %3751
  %v3753 = vpack.c.bf16 %v3744, %v3744
  %v3754 = vpack.c.bf16 %v3746, %v3746
  %3755 = vrot.lane.b32.xlu0 %v2947, 104
  %v3756 = vpop.permute.xlu0 %3755
  %v3758 = vsel %vm414, %v3753, 0
  %v3761 = vsel %vm534, %v3756, 0
  %3763 = vmatprep.subr.bf16.mxu0 0
  %3764 = vmatpush1.bf16.msra.mxu0 0
  %3765 = vmatprep.subr.bf16.mxu0 0
  %3766 = vmatpush1.bf16.msra.mxu0 0
  %3767 = vmatprep.subr.bf16.mxu0 0
  %3768 = vmatpush1.bf16.msra.mxu0 0
  %3769 = vmatprep.subr.bf16.mxu0 0
  %3770 = vmatpush1.bf16.msra.mxu0 0
  %3771 = vmatprep.subr.bf16.mxu0 0
  %3772 = vmatpush1.bf16.msra.mxu0 0
  %3773 = vmatprep.subr.bf16.mxu0 0
  %3774 = vmatpush1.bf16.msra.mxu0 0
  %3775 = vmatprep.subr.bf16.mxu0 0
  %3776 = vmatpush1.bf16.msra.mxu0 0
  %3777 = vmatprep.subr.bf16.mxu0 0
  %3778 = vmatpush1.bf16.msra.mxu0 %v3761
  %3779 = vmatprep.subr.bf16.mxu0 0
  %3780 = vmatpush2.bf16.msra.mxu0 0
  %3781 = vmatprep.subr.bf16.mxu0 0
  %3782 = vmatpush2.bf16.msra.mxu0 0
  %3783 = vmatprep.subr.bf16.mxu0 0
  %3784 = vmatpush2.bf16.msra.mxu0 0
  %3785 = vmatprep.subr.bf16.mxu0 0
  %3786 = vmatpush2.bf16.msra.mxu0 0
  %3787 = vmatprep.subr.bf16.mxu0 0
  %3788 = vmatpush2.bf16.msra.mxu0 0
  %3789 = vmatprep.subr.bf16.mxu0 0
  %3790 = vmatpush2.bf16.msra.mxu0 0
  %3791 = vmatprep.subr.bf16.mxu0 0
  %3792 = vmatpush2.bf16.msra.mxu0 0
  %3793 = vmatprep.subr.bf16.mxu0 0
  %3794 = vmatpush2.bf16.msra.mxu0 0
  %3795 = vmatprep.mubr.bf16.mxu0 0
  %3796 = vmatmul.mubr.bf16.gmra.mxu0 %v3758
  %v3797 = vpop.f32.mrf.mxu0
  %v3798 = vadd.f32 0.0, %v3797
  %v3799 = vpop.f32.mrf.mxu0
  %v3800 = vpop.f32.mrf.mxu0
  %v3801 = vpop.f32.mrf.mxu0
  %3802 = vdwg.mxu0
  %3803 = vrot.lane.b32.xlu0 %v2948, 104
  %v3804 = vpop.permute.xlu0 %3803
  %v3806 = vsel %vm414, %v3754, 0
  %v3809 = vsel %vm534, %v3804, 0
  %3811 = vmatprep.subr.bf16.mxu0 0
  %3812 = vmatpush1.bf16.msra.mxu0 0
  %3813 = vmatprep.subr.bf16.mxu0 0
  %3814 = vmatpush1.bf16.msra.mxu0 0
  %3815 = vmatprep.subr.bf16.mxu0 0
  %3816 = vmatpush1.bf16.msra.mxu0 0
  %3817 = vmatprep.subr.bf16.mxu0 0
  %3818 = vmatpush1.bf16.msra.mxu0 0
  %3819 = vmatprep.subr.bf16.mxu0 0
  %3820 = vmatpush1.bf16.msra.mxu0 0
  %3821 = vmatprep.subr.bf16.mxu0 0
  %3822 = vmatpush1.bf16.msra.mxu0 0
  %3823 = vmatprep.subr.bf16.mxu0 0
  %3824 = vmatpush1.bf16.msra.mxu0 0
  %3825 = vmatprep.subr.bf16.mxu0 0
  %3826 = vmatpush1.bf16.msra.mxu0 %v3809
  %3827 = vmatprep.subr.bf16.mxu0 0
  %3828 = vmatpush2.bf16.msra.mxu0 0
  %3829 = vmatprep.subr.bf16.mxu0 0
  %3830 = vmatpush2.bf16.msra.mxu0 0
  %3831 = vmatprep.subr.bf16.mxu0 0
  %3832 = vmatpush2.bf16.msra.mxu0 0
  %3833 = vmatprep.subr.bf16.mxu0 0
  %3834 = vmatpush2.bf16.msra.mxu0 0
  %3835 = vmatprep.subr.bf16.mxu0 0
  %3836 = vmatpush2.bf16.msra.mxu0 0
  %3837 = vmatprep.subr.bf16.mxu0 0
  %3838 = vmatpush2.bf16.msra.mxu0 0
  %3839 = vmatprep.subr.bf16.mxu0 0
  %3840 = vmatpush2.bf16.msra.mxu0 0
  %3841 = vmatprep.subr.bf16.mxu0 0
  %3842 = vmatpush2.bf16.msra.mxu0 0
  %3843 = vmatprep.mubr.bf16.mxu0 0
  %3844 = vmatmul.mubr.bf16.gmra.mxu0 %v3806
  %v3845 = vpop.f32.mrf.mxu0
  %v3846 = vadd.f32 0.0, %v3845
  %v3847 = vpop.f32.mrf.mxu0
  %v3848 = vpop.f32.mrf.mxu0
  %v3849 = vpop.f32.mrf.mxu0
  %3850 = vdwg.mxu0
  %vm3851 = vcmp.gt.f32.partialorder %v3749, 0.0
  %vm3852 = vcmp.gt.f32.partialorder %v3752, 0.0
  %v3853 = vrcp.pop %v3749
  %v3854 = vrcp.pop %v3752
  %v3855 = vsel %vm3851, %v3853, 0.0
  %v3856 = vsel %vm3852, %v3854, 0.0
  %v3857 = vmul.f32 %v3798, %v3855
  %v3858 = vmul.f32 %v3846, %v3856
  %3861 = vrot.lane.b32.xlu0 %v3405, 8
  %v3862 = vpop.permute.xlu0 %3861
  %3863 = vrot.lane.b32.xlu0 %v3406, 8
  %v3864 = vpop.permute.xlu0 %3863
  %3869 = vrot.lane.b32.xlu0 %v3631, 16
  %v3870 = vpop.permute.xlu0 %3869
  %3871 = vrot.lane.b32.xlu0 %v3632, 16
  %v3872 = vpop.permute.xlu0 %3871
  %3877 = vrot.lane.b32.xlu0 %v3857, 24
  %v3878 = vpop.permute.xlu0 %3877
  %3879 = vrot.lane.b32.xlu0 %v3858, 24
  %v3880 = vpop.permute.xlu0 %3879
  %v3883 = vsel %vm414, %v3173, %v3862
  %v3884 = vsel %vm414, %v3174, %v3864
  %v3885 = vsel %vm1348, %v3883, %v3870
  %v3886 = vsel %vm1348, %v3884, %v3872
  %v3887 = vsel %vm1351, %v3885, %v3878
  %v3888 = vsel %vm1351, %v3886, %v3880
  %v3889 = vpack.c.bf16 %v3888, %v3887
  %v3890 = vld [vmem:[%s67] sm:$0xf]
  %v3891 = vld [vmem:[%s67 + $0x4] sm:$0xf]
  %v3892 = vld [vmem:[%s67 + $0x8] sm:$0xf]
  %v3893 = vld [vmem:[%s67 + $0xc] sm:$0xf]
  %v3894 = vld [vmem:[%s69] sm:$0x1]
  %v3896 = vlaneseq
  %v3897 = vshrl.u32 %v3896, 7
  %v3898 = vsub.s32 0, %v3897
  %v3899 = vrot.slane %v3894, %v3898
  %v3905 = vunpack.c.l.b16 %v3890
  %v3906 = vunpack.c.l.b16 %v3891
  %v3907 = vunpack.c.l.b16 %v3892
  %v3908 = vunpack.c.l.b16 %v3893
  %v3909 = vpack.c.b16 %v3906, %v3905
  %v3910 = vpack.c.b16 %v3908, %v3907
  %v3914 = vsel %vm217, %v3889, 0
  %3916 = vmatprep.subr.bf16.mxu0 0
  %3917 = vmatpush1.bf16.msra.mxu0 0
  %3918 = vmatprep.subr.bf16.mxu0 0
  %3919 = vmatpush1.bf16.msra.mxu0 0
  %3920 = vmatprep.subr.bf16.mxu0 0
  %3921 = vmatpush1.bf16.msra.mxu0 0
  %3922 = vmatprep.subr.bf16.mxu0 0
  %3923 = vmatpush1.bf16.msra.mxu0 0
  %3924 = vmatprep.subr.bf16.mxu0 0
  %3925 = vmatpush1.bf16.msra.mxu0 0
  %3926 = vmatprep.subr.bf16.mxu0 0
  %3927 = vmatpush1.bf16.msra.mxu0 0
  %3928 = vmatprep.subr.bf16.mxu0 0
  %3929 = vmatpush1.bf16.msra.mxu0 %v3910
  %3930 = vmatprep.subr.bf16.mxu0 0
  %3931 = vmatpush1.bf16.msra.mxu0 %v3909
  %3932 = vmatprep.subr.bf16.mxu0 0
  %3933 = vmatpush2.bf16.msra.mxu0 0
  %3934 = vmatprep.subr.bf16.mxu0 0
  %3935 = vmatpush2.bf16.msra.mxu0 0
  %3936 = vmatprep.subr.bf16.mxu0 0
  %3937 = vmatpush2.bf16.msra.mxu0 0
  %3938 = vmatprep.subr.bf16.mxu0 0
  %3939 = vmatpush2.bf16.msra.mxu0 0
  %3940 = vmatprep.subr.bf16.mxu0 0
  %3941 = vmatpush2.bf16.msra.mxu0 0
  %3942 = vmatprep.subr.bf16.mxu0 0
  %3943 = vmatpush2.bf16.msra.mxu0 0
  %3944 = vmatprep.subr.bf16.mxu0 0
  %3945 = vmatpush2.bf16.msra.mxu0 0
  %3946 = vmatprep.subr.bf16.mxu0 0
  %3947 = vmatpush2.bf16.msra.mxu0 0
  %3948 = vmatprep.mubr.bf16.mxu0 0
  %3949 = vmatmul.mubr.bf16.gmra.mxu0 %v3914
  %v3950 = vpop.f32.mrf.mxu0
  %v3951 = vadd.f32 %v3899, %v3950
  %v3952 = vpop.f32.mrf.mxu0
  %v3953 = vpop.f32.mrf.mxu0
  %v3954 = vadd.f32 %v3899, %v3953
  %v3955 = vpop.f32.mrf.mxu0
  %3956 = vdwg.mxu0
  %v3957 = vmul.f32 %v3951, %v1425
  %v3958 = vmul.f32 %v3954, %v1430
  %v3959 = vadd.f32 %v2741, %v3957
  %v3960 = vadd.f32 %v2742, %v3958
  %v3961 = vld [vmem:[%s71] sm:$0x1]
  %v3962 = vld [vmem:[%s73] sm:$0x1]
  %v3963 = vsel %vm217, %v3959, 0.0
  %3964 = vadd.xlane.f32.xlu0 %v3963
  %v3965 = vpop.xlane.xlu0 %3964
  %v3966 = vsel %vm217, %v3960, 0.0
  %3967 = vadd.xlane.f32.xlu0 %v3966
  %v3968 = vpop.xlane.xlu0 %3967
  %v3969 = vmul.f32 %v3965, %v1444
  %v3970 = vmul.f32 %v3968, %v1444
  %v3971 = vsub.f32 %v3959, %v3969
  %v3972 = vsub.f32 %v3960, %v3970
  %v3973 = vmul.f32 %v3971, %v3971
  %v3974 = vmul.f32 %v3972, %v3972
  %v3975 = vsel %vm217, %v3973, 0.0
  %3976 = vadd.xlane.f32.xlu0 %v3975
  %v3977 = vpop.xlane.xlu0 %3976
  %v3978 = vsel %vm217, %v3974, 0.0
  %3979 = vadd.xlane.f32.xlu0 %v3978
  %v3980 = vpop.xlane.xlu0 %3979
  %v3981 = vmul.f32 %v3977, %v1444
  %v3982 = vmul.f32 %v3980, %v1444
  %v3983 = vadd.f32 %v3981, 1e-05
  %v3984 = vadd.f32 %v3982, 1e-05
  %v3985 = vrsqrt.pop %v3983
  %v3986 = vrsqrt.pop %v3984
  %v3987 = vmul.f32 %v3971, %v3985
  %v3988 = vmul.f32 %v3972, %v3986
  %v3990 = vlaneseq
  %v3991 = vshrl.u32 %v3990, 7
  %v3992 = vsub.s32 0, %v3991
  %v3993 = vrot.slane %v3961, %v3992
  %v3995 = vmul.f32 %v3987, %v3993
  %v3996 = vmul.f32 %v3988, %v3993
  %v3998 = vlaneseq
  %v3999 = vshrl.u32 %v3998, 7
  %v4000 = vsub.s32 0, %v3999
  %v4001 = vrot.slane %v3962, %v4000
  %v4003 = vadd.f32 %v3995, %v4001
  %v4004 = vadd.f32 %v3996, %v4001
  %v4005 = vpack.c.bf16 %v4004, %v4003
  %v4006 = vld [vmem:[%s75] sm:$0xf]
  %v4007 = vld [vmem:[%s75 + $0x4] sm:$0xf]
  %v4008 = vld [vmem:[%s75 + $0x8] sm:$0xf]
  %v4009 = vld [vmem:[%s75 + $0xc] sm:$0xf]
  %v4010 = vld [vmem:[%s77] sm:$0x1]
  %v4012 = vlaneseq
  %v4013 = vshrl.u32 %v4012, 7
  %v4014 = vsub.s32 0, %v4013
  %v4015 = vrot.slane %v4010, %v4014
  %v4021 = vunpack.c.l.b16 %v4006
  %v4022 = vunpack.c.l.b16 %v4007
  %v4023 = vunpack.c.l.b16 %v4008
  %v4024 = vunpack.c.l.b16 %v4009
  %v4025 = vpack.c.b16 %v4022, %v4021
  %v4026 = vpack.c.b16 %v4024, %v4023
  %v4030 = vsel %vm217, %v4005, 0
  %4032 = vmatprep.subr.bf16.mxu0 0
  %4033 = vmatpush1.bf16.msra.mxu0 0
  %4034 = vmatprep.subr.bf16.mxu0 0
  %4035 = vmatpush1.bf16.msra.mxu0 0
  %4036 = vmatprep.subr.bf16.mxu0 0
  %4037 = vmatpush1.bf16.msra.mxu0 0
  %4038 = vmatprep.subr.bf16.mxu0 0
  %4039 = vmatpush1.bf16.msra.mxu0 0
  %4040 = vmatprep.subr.bf16.mxu0 0
  %4041 = vmatpush1.bf16.msra.mxu0 0
  %4042 = vmatprep.subr.bf16.mxu0 0
  %4043 = vmatpush1.bf16.msra.mxu0 0
  %4044 = vmatprep.subr.bf16.mxu0 0
  %4045 = vmatpush1.bf16.msra.mxu0 %v4026
  %4046 = vmatprep.subr.bf16.mxu0 0
  %4047 = vmatpush1.bf16.msra.mxu0 %v4025
  %4048 = vmatprep.subr.bf16.mxu0 0
  %4049 = vmatpush2.bf16.msra.mxu0 0
  %4050 = vmatprep.subr.bf16.mxu0 0
  %4051 = vmatpush2.bf16.msra.mxu0 0
  %4052 = vmatprep.subr.bf16.mxu0 0
  %4053 = vmatpush2.bf16.msra.mxu0 0
  %4054 = vmatprep.subr.bf16.mxu0 0
  %4055 = vmatpush2.bf16.msra.mxu0 0
  %4056 = vmatprep.subr.bf16.mxu0 0
  %4057 = vmatpush2.bf16.msra.mxu0 0
  %4058 = vmatprep.subr.bf16.mxu0 0
  %4059 = vmatpush2.bf16.msra.mxu0 0
  %4060 = vmatprep.subr.bf16.mxu0 0
  %4061 = vmatpush2.bf16.msra.mxu0 0
  %4062 = vmatprep.subr.bf16.mxu0 0
  %4063 = vmatpush2.bf16.msra.mxu0 0
  %4064 = vmatprep.mubr.bf16.mxu0 0
  %4065 = vmatmul.mubr.bf16.gmra.mxu0 %v4030
  %v4066 = vpop.f32.mrf.mxu0
  %v4067 = vadd.f32 %v4015, %v4066
  %v4068 = vpop.f32.mrf.mxu0
  %v4069 = vpop.f32.mrf.mxu0
  %v4070 = vadd.f32 %v4015, %v4069
  %v4071 = vpop.f32.mrf.mxu0
  %4072 = vdwg.mxu0
  %vm4073 = vcmp.ge.f32.partialorder %v4067, 0.0
  %vm4074 = vcmp.ge.f32.partialorder %v4070, 0.0
  %v4075 = vmul.f32 %v4067, 0.01
  %v4076 = vmul.f32 %v4070, 0.01
  %v4077 = vsel %vm4073, %v4067, %v4075
  %v4078 = vsel %vm4074, %v4070, %v4076
  %v4079 = vpack.c.bf16 %v4078, %v4077
  %v4080 = vld [vmem:[%s79] sm:$0xf]
  %v4081 = vld [vmem:[%s79 + $0x4] sm:$0xf]
  %v4082 = vld [vmem:[%s79 + $0x8] sm:$0xf]
  %v4083 = vld [vmem:[%s79 + $0xc] sm:$0xf]
  %v4084 = vld [vmem:[%s79 + $0x10] sm:$0xf]
  %v4085 = vld [vmem:[%s79 + $0x14] sm:$0xf]
  %v4086 = vld [vmem:[%s79 + $0x18] sm:$0xf]
  %v4087 = vld [vmem:[%s79 + $0x1c] sm:$0xf]
  %v4088 = vld [vmem:[%s81] sm:$0x1]
  %v4090 = vlaneseq
  %v4091 = vshrl.u32 %v4090, 7
  %v4092 = vsub.s32 0, %v4091
  %v4093 = vrot.slane %v4088, %v4092
  %v4103 = vunpack.c.l.b16 %v4080
  %v4104 = vunpack.c.l.b16 %v4081
  %v4105 = vunpack.c.l.b16 %v4082
  %v4106 = vunpack.c.l.b16 %v4083
  %v4107 = vunpack.c.l.b16 %v4084
  %v4108 = vunpack.c.l.b16 %v4085
  %v4109 = vunpack.c.l.b16 %v4086
  %v4110 = vunpack.c.l.b16 %v4087
  %v4111 = vpack.c.b16 %v4104, %v4103
  %v4112 = vpack.c.b16 %v4106, %v4105
  %v4113 = vpack.c.b16 %v4108, %v4107
  %v4114 = vpack.c.b16 %v4110, %v4109
  %vm4119 = vcmask 523264
  %v4121 = vsel %vm4119, %v4079, 0
  %4123 = vmatprep.subr.bf16.mxu0 0
  %4124 = vmatpush1.bf16.msra.mxu0 0
  %4125 = vmatprep.subr.bf16.mxu0 0
  %4126 = vmatpush1.bf16.msra.mxu0 0
  %4127 = vmatprep.subr.bf16.mxu0 0
  %4128 = vmatpush1.bf16.msra.mxu0 0
  %4129 = vmatprep.subr.bf16.mxu0 0
  %4130 = vmatpush1.bf16.msra.mxu0 0
  %4131 = vmatprep.subr.bf16.mxu0 0
  %4132 = vmatpush1.bf16.msra.mxu0 %v4114
  %4133 = vmatprep.subr.bf16.mxu0 0
  %4134 = vmatpush1.bf16.msra.mxu0 %v4113
  %4135 = vmatprep.subr.bf16.mxu0 0
  %4136 = vmatpush1.bf16.msra.mxu0 %v4112
  %4137 = vmatprep.subr.bf16.mxu0 0
  %4138 = vmatpush1.bf16.msra.mxu0 %v4111
  %4139 = vmatprep.subr.bf16.mxu0 0
  %4140 = vmatpush2.bf16.msra.mxu0 0
  %4141 = vmatprep.subr.bf16.mxu0 0
  %4142 = vmatpush2.bf16.msra.mxu0 0
  %4143 = vmatprep.subr.bf16.mxu0 0
  %4144 = vmatpush2.bf16.msra.mxu0 0
  %4145 = vmatprep.subr.bf16.mxu0 0
  %4146 = vmatpush2.bf16.msra.mxu0 0
  %4147 = vmatprep.subr.bf16.mxu0 0
  %4148 = vmatpush2.bf16.msra.mxu0 0
  %4149 = vmatprep.subr.bf16.mxu0 0
  %4150 = vmatpush2.bf16.msra.mxu0 0
  %4151 = vmatprep.subr.bf16.mxu0 0
  %4152 = vmatpush2.bf16.msra.mxu0 0
  %4153 = vmatprep.subr.bf16.mxu0 0
  %4154 = vmatpush2.bf16.msra.mxu0 0
  %4155 = vmatprep.mubr.bf16.mxu0 0
  %4156 = vmatmul.mubr.bf16.gmra.mxu0 %v4121
  %v4157 = vpop.f32.mrf.mxu0
  %v4158 = vadd.f32 %v4093, %v4157
  %v4159 = vpop.f32.mrf.mxu0
  %v4160 = vpop.f32.mrf.mxu0
  %v4161 = vadd.f32 %v4093, %v4160
  %v4162 = vpop.f32.mrf.mxu0
  %4163 = vdwg.mxu0
  %v4164 = vmul.f32 %v4158, %v1425
  %v4165 = vmul.f32 %v4161, %v1430
  %v4166 = vadd.f32 %v4003, %v4164
  %v4167 = vadd.f32 %v4004, %v4165
  %v4168 = vld [vmem:[%s83] sm:$0x1]
  %v4169 = vld [vmem:[%s85] sm:$0x1]
  %v4170 = vsel %vm217, %v4166, 0.0
  %4171 = vadd.xlane.f32.xlu0 %v4170
  %v4172 = vpop.xlane.xlu0 %4171
  %v4173 = vsel %vm217, %v4167, 0.0
  %4174 = vadd.xlane.f32.xlu0 %v4173
  %v4175 = vpop.xlane.xlu0 %4174
  %v4176 = vmul.f32 %v4172, %v1444
  %v4177 = vmul.f32 %v4175, %v1444
  %v4178 = vsub.f32 %v4166, %v4176
  %v4179 = vsub.f32 %v4167, %v4177
  %v4180 = vmul.f32 %v4178, %v4178
  %v4181 = vmul.f32 %v4179, %v4179
  %v4182 = vsel %vm217, %v4180, 0.0
  %4183 = vadd.xlane.f32.xlu0 %v4182
  %v4184 = vpop.xlane.xlu0 %4183
  %v4185 = vsel %vm217, %v4181, 0.0
  %4186 = vadd.xlane.f32.xlu0 %v4185
  %v4187 = vpop.xlane.xlu0 %4186
  %v4188 = vmul.f32 %v4184, %v1444
  %v4189 = vmul.f32 %v4187, %v1444
  %v4190 = vadd.f32 %v4188, 1e-05
  %v4191 = vadd.f32 %v4189, 1e-05
  %v4192 = vrsqrt.pop %v4190
  %v4193 = vrsqrt.pop %v4191
  %v4194 = vmul.f32 %v4178, %v4192
  %v4195 = vmul.f32 %v4179, %v4193
  %v4197 = vlaneseq
  %v4198 = vshrl.u32 %v4197, 7
  %v4199 = vsub.s32 0, %v4198
  %v4200 = vrot.slane %v4168, %v4199
  %v4202 = vmul.f32 %v4194, %v4200
  %v4203 = vmul.f32 %v4195, %v4200
  %v4205 = vlaneseq
  %v4206 = vshrl.u32 %v4205, 7
  %v4207 = vsub.s32 0, %v4206
  %v4208 = vrot.slane %v4169, %v4207
  %v4210 = vadd.f32 %v4202, %v4208
  %v4211 = vadd.f32 %v4203, %v4208
  %4212 = vst.msk [vmem:[%s87] sm:$0xff] %vm217, %v4210
  %4213 = vst.msk [vmem:[%s87 + $0x8] sm:$0xff] %vm217, %v4211
  // Predicated region
  $region174: #{dual_tran_dec.2} parent=0 // pred_check
    _
  $region175: #{dual_tran_dec.2} parent=0 // pred_check_branch
    %4215 = sbr.rel (0) target = $region177
  $region176: #{dual_tran_dec.2} parent=0 // pred_region
    _
  $region177: #{dual_tran_dec.2} parent=0 // pred_fallthru
    _
  // Predicated region
  $region178: #{dual_tran_dec.2} parent=0 // pred_check
    _
  $region179: #{dual_tran_dec.2} parent=0 // pred_check_branch
    %4217 = sbr.rel (0) target = $region181
  $region180: #{dual_tran_dec.2} parent=0 // pred_region
    _
  $region181: #{dual_tran_dec.2} parent=0 // pred_fallthru
    _

</llo_original>
